<compile_context>
chip_gen: v6e
topology: v6e:2x2x1
jax: 0.10.0
libtpu: 0.0.40
codegen_flags: <defaults>
</compile_context>

<pallas_src>
from functools import partial

import jax
import jax.numpy as jnp
from jax import lax
from jax.experimental import pallas as pl
from jax.experimental.pallas import tpu as pltpu


def _round_up(x, m):
    return (x + m - 1) // m * m


def _spdc_kernel(x_ref, col_ref, w1_ref, dw_ref, scale_ref, bias_ref, w2_ref,
                 out_ref, pad_ref, *, W, HW, dilations, off, approx_recip):
    """Fused SPDC forward for one batch element, flat (C, H*W) layout.

    x_ref     : (1, c1, HW)        VMEM  input block (one image, flat spatial)
    col_ref   : (1, HW)   int32    VMEM  column index of each flat pixel (p mod W)
    w1_ref    : (c_, c1)           VMEM  cv1 1x1 weight
    dw_ref    : (n_di, 9, c_, 1)   VMEM  depthwise 3x3 weights, tap index ky*3+kx
    scale_ref : (n_di, c_, 1)      VMEM  folded BN scale
    bias_ref  : (n_di, c_, 1)      VMEM  folded BN bias
    w2_ref    : (n_di+1, c2, c_)   VMEM  cv2 1x1 weight split per concat group
    out_ref   : (1, c2, HW)        VMEM  output block (flat spatial, lane-dense)
    pad_ref   : (c_, Ltot)         VMEM  zero-bordered flat staging scratch; the
                working activation sits at [off, off+HW), off is 128-aligned.
    """
    f32 = jnp.float32

    # Zero only the halo border strips.  The interior [off, off+HW) is fully
    # overwritten before every dilated stage, so only the border must be (and
    # stay) zero.  Re-zeroed every grid step (not just step 0) because with a
    # "parallel" batch axis each TensorCore owns its own scratch instance and
    # may never execute program_id == 0; the strips are tiny.
    c_pad, Ltot = pad_ref.shape
    pad_ref[:, :off] = jnp.zeros((c_pad, off), f32)
    pad_ref[:, off + HW:] = jnp.zeros((c_pad, Ltot - off - HW), f32)

    colw = col_ref[...]                                   # (1, HW) int32

    # ---- cv1: 1x1 conv (c1 -> c_) as an MXU matmul over the flat spatial axis
    cur = jnp.dot(w1_ref[...], x_ref[0],
                  preferred_element_type=f32)             # (c_, HW) f32

    # ---- cv2 streamed: out += W2[g] @ group_g, groups = (x_, y1, y2, y3, y4)
    out_acc = jnp.dot(w2_ref[0], cur,
                      preferred_element_type=f32)         # (c2, HW) f32

    # ---- chain of depthwise dilated 3x3 convs, each + folded BN + SiLU ----
    for i, d in enumerate(dilations):
        # Stage the activation into the zero-bordered scratch: one 128-aligned
        # store; the 9 taps below are cheap static slice reads.
        pad_ref[:, off:off + HW] = cur

        def tap(ky, kx, _i=i, _d=d):
            a = off + (ky - 1) * _d * W + (kx - 1) * _d
            return pad_ref[:, a:a + HW] * dw_ref[_i, ky * 3 + kx]  # (c_, HW)

        centre = tap(0, 1) + tap(1, 1) + tap(2, 1)        # dx = 0
        left = tap(0, 0) + tap(1, 0) + tap(2, 0)          # dx = -d
        right = tap(0, 2) + tap(1, 2) + tap(2, 2)         # dx = +d
        # Column masks give the 'same' zero padding in flat layout (a +-d
        # column shift would otherwise wrap into the adjacent image row);
        # row over/under-runs land in the zero border of the scratch.
        acc = (centre
               + jnp.where(colw >= d, left, 0.0)
               + jnp.where(colw < W - d, right, 0.0))

        z = acc * scale_ref[i] + bias_ref[i]              # folded eval-mode BN
        sig = pl.reciprocal(1.0 + jnp.exp(-z), approx=approx_recip)
        cur = z * sig                                     # SiLU

        out_acc = out_acc + jnp.dot(w2_ref[i + 1], cur,
                                    preferred_element_type=f32)

    out_ref[0] = out_acc.astype(out_ref.dtype)


def spdc_forward(x_nchw, params, dilations=(2, 4, 6, 8), *, approx_silu=True):
    """Fused Pallas forward of SPDC (eval-mode BN folded into scale/bias).

    params = (w_cv1, dw_w, bn_scale, bn_bias, w_cv2):
      w_cv1    : (c_, c1)          cv1 1x1 weight (PyTorch (c_, c1, 1, 1) squeezed)
      dw_w     : (n_di, c_, 3, 3)  depthwise 3x3 weights of di1..di4
      bn_scale : (n_di, c_)        folded BN scale (gamma / sqrt(var + eps))
      bn_bias  : (n_di, c_)        folded BN bias  (beta - mean * scale)
      w_cv2    : (c2, 5*c_)        cv2 1x1 weight (PyTorch (c2, 5*c_, 1, 1) squeezed)
    """
    w_cv1, dw_w, bn_scale, bn_bias, w_cv2 = params
    N, c1, H, W = x_nchw.shape
    c_ = w_cv1.shape[0]
    c2 = w_cv2.shape[0]
    n_di = dw_w.shape[0]
    assert w_cv1.shape == (c_, c1)
    assert dw_w.shape == (n_di, c_, 3, 3)
    assert bn_scale.shape == (n_di, c_) and bn_bias.shape == (n_di, c_)
    assert w_cv2.shape == (c2, (n_di + 1) * c_)
    assert n_di == len(dilations)

    f32 = jnp.float32
    HW = H * W
    dmax = max(dilations)
    halo = dmax * (W + 1)                 # farthest a +-dmax row/col tap reaches
    off = _round_up(halo, 128)            # 128-aligned interior => aligned stores
    Ltot = _round_up(off + HW + halo, 128)

    # Flat spatial layout: lane-dense input/output when H*W % 128 == 0.
    x_flat = x_nchw.reshape(N, c1, HW)
    col_ids = (jnp.arange(HW, dtype=jnp.int32) % W).reshape(1, HW)

    # Conv / BN parameters as small VMEM arrays shaped for broadcast / matmul.
    w1 = w_cv1.astype(f32)                                                 # (c_, c1)
    dw = jnp.transpose(dw_w, (0, 2, 3, 1)).reshape(n_di, 9, c_, 1).astype(f32)
    sc = bn_scale.reshape(n_di, c_, 1).astype(f32)
    bi = bn_bias.reshape(n_di, c_, 1).astype(f32)
    w2 = jnp.transpose(w_cv2.reshape(c2, n_di + 1, c_), (1, 0, 2)).astype(f32)

    kernel = partial(_spdc_kernel, W=W, HW=HW, dilations=tuple(dilations),
                     off=off, approx_recip=approx_silu)

    def full(a):   # whole (small) array resident in VMEM, constant block index
        return pl.BlockSpec(a.shape, lambda n, _nd=a.ndim: (0,) * _nd)

    # Per-step VMEM estimate: double-buffered in/out blocks + halo scratch +
    # live f32 intermediates + weights; clamp inside the 128 MiB physical VMEM
    # of v5e/v6e (v7x would additionally want the H-tiling TODO).
    itemsize = jnp.dtype(x_nchw.dtype).itemsize
    est = (2 * (c1 + c2) * HW * itemsize
           + c_ * Ltot * 4
           + (8 * c_ + 2 * c2) * HW * 4
           + 4 * (w1.size + dw.size + sc.size + bi.size + w2.size + col_ids.size))
    vmem_limit = int(min(100 * 2 ** 20, max(32 * 2 ** 20, 2 * est)))

    out_flat = pl.pallas_call(
        kernel,
        out_shape=jax.ShapeDtypeStruct((N, c2, HW), x_nchw.dtype),
        grid=(N,),
        in_specs=[
            pl.BlockSpec((1, c1, HW), lambda n: (n, 0, 0)),
            full(col_ids), full(w1), full(dw), full(sc), full(bi), full(w2),
        ],
        out_specs=pl.BlockSpec((1, c2, HW), lambda n: (n, 0, 0)),
        scratch_shapes=[pltpu.VMEM((c_, Ltot), f32)],
        compiler_params=pltpu.CompilerParams(
            dimension_semantics=("parallel",),
            vmem_limit_bytes=vmem_limit,
        ),
    )(x_flat, col_ids, w1, dw, sc, bi, w2)

    return out_flat.reshape(N, c2, H, W)


# ----------------------------- pure-JAX reference -----------------------------

def _ref_spdc(x, params, dilations=(2, 4, 6, 8)):
    w_cv1, dw_w, bn_scale, bn_bias, w_cv2 = params
    c_ = w_cv1.shape[0]
    dn = ("NCHW", "OIHW", "NCHW")
    prec = lax.Precision.HIGHEST
    xc = lax.conv_general_dilated(x, w_cv1[:, :, None, None], (1, 1),
                                  padding=((0, 0), (0, 0)), dimension_numbers=dn,
                                  precision=prec)
    feats = [xc]
    cur = xc
    for i, d in enumerate(dilations):
        y = lax.conv_general_dilated(cur, dw_w[i][:, None, :, :], (1, 1),
                                     padding=((d, d), (d, d)), rhs_dilation=(d, d),
                                     dimension_numbers=dn, feature_group_count=c_,
                                     precision=prec)
        y = y * bn_scale[i][None, :, None, None] + bn_bias[i][None, :, None, None]
        y = y * jax.nn.sigmoid(y)
        feats.append(y)
        cur = y
    z = jnp.concatenate(feats, axis=1)
    return lax.conv_general_dilated(z, w_cv2[:, :, None, None], (1, 1),
                                    padding=((0, 0), (0, 0)), dimension_numbers=dn,
                                    precision=prec)


if __name__ == "__main__":
    key = jax.random.PRNGKey(0)
    ks = jax.random.split(key, 8)

    N, c1, c2, H, W = 2, 32, 32, 32, 32
    dilations = (2, 4, 6, 8)
    c_ = c1 // 4

    x = jax.random.normal(ks[0], (N, c1, H, W), jnp.float32)

    w_cv1 = 0.3 * jax.random.normal(ks[1], (c_, c1), jnp.float32)
    w_cv2 = 0.3 * jax.random.normal(ks[2], (c2, 5 * c_), jnp.float32)
    dw_w = 0.3 * jax.random.normal(ks[3], (len(dilations), c_, 3, 3), jnp.float32)
    gamma = 1.0 + 0.1 * jax.random.normal(ks[4], (len(dilations), c_), jnp.float32)
    beta = 0.1 * jax.random.normal(ks[5], (len(dilations), c_), jnp.float32)
    rmean = 0.1 * jax.random.normal(ks[6], (len(dilations), c_), jnp.float32)
    rvar = jax.random.uniform(ks[7], (len(dilations), c_), jnp.float32, 0.5, 1.5)
    eps = 1e-5
    bn_scale = gamma / jnp.sqrt(rvar + eps)
    bn_bias = beta - rmean * bn_scale

    params = (w_cv1, dw_w, bn_scale, bn_bias, w_cv2)

    out = jax.block_until_ready(spdc_forward(x, params, dilations))
    ref = jax.block_until_ready(_ref_spdc(x, params, dilations))

    assert out.shape == ref.shape == (N, c2, H, W)
    assert bool(jnp.all(jnp.isfinite(out)))
    # Tolerance budget: MXU f32 matmuls (multi-pass bf16) + the EUP approximate
    # reciprocal in SiLU give O(1e-3) normalized error; genuine indexing /
    # padding / weight bugs show up as O(0.1 - 1) normalized error.
    denom = jnp.maximum(jnp.max(jnp.abs(ref)), 1e-6)
    rel = float(jnp.max(jnp.abs(out - ref)) / denom)
    assert rel < 1e-2, f"normalized max error {rel:.3e}"

    print("KERNEL_OK")
</pallas_src>

<mosaic_0001>
module attributes {stable_mosaic.version = 11 : i64} {
  func.func @_spdc_kernel(%arg0: i32, %arg1: memref<1x32x1024xf32, #tpu.memory_space<vmem>>, %arg2: memref<1x1024xi32, #tpu.memory_space<vmem>>, %arg3: memref<8x32xf32, #tpu.memory_space<vmem>>, %arg4: memref<4x9x8x1xf32, #tpu.memory_space<vmem>>, %arg5: memref<4x8x1xf32, #tpu.memory_space<vmem>>, %arg6: memref<4x8x1xf32, #tpu.memory_space<vmem>>, %arg7: memref<5x32x8xf32, #tpu.memory_space<vmem>>, %arg8: memref<1x32x1024xf32, #tpu.memory_space<vmem>>, %arg9: memref<8x1792xf32, #tpu.memory_space<vmem>>) attributes {dimension_semantics = [#tpu.dimension_semantics<parallel>], iteration_bounds = array<i64: 2>, scalar_prefetch = 0 : i64, scratch_operands = 1 : i64, tpu.core_type = #tpu.core_type<tc>, window_params = [{transform_indices = @transform_0, window_bounds = array<i64: 1, 32, 1024>}, {pipeline_mode = #tpu.pipeline_mode<synchronous>, transform_indices = @transform_1, window_bounds = array<i64: 1, 1024>}, {pipeline_mode = #tpu.pipeline_mode<synchronous>, transform_indices = @transform_2, window_bounds = array<i64: 8, 32>}, {pipeline_mode = #tpu.pipeline_mode<synchronous>, transform_indices = @transform_3, window_bounds = array<i64: 4, 9, 8, 1>}, {pipeline_mode = #tpu.pipeline_mode<synchronous>, transform_indices = @transform_4, window_bounds = array<i64: 4, 8, 1>}, {pipeline_mode = #tpu.pipeline_mode<synchronous>, transform_indices = @transform_5, window_bounds = array<i64: 4, 8, 1>}, {pipeline_mode = #tpu.pipeline_mode<synchronous>, transform_indices = @transform_6, window_bounds = array<i64: 5, 32, 8>}, {transform_indices = @transform_7, window_bounds = array<i64: 1, 32, 1024>}]} {
    %cst = arith.constant 0.000000e+00 : f32
    %0 = vector.broadcast %cst : f32 to vector<8x384xf32>
    %c0 = arith.constant 0 : index
    %c0_0 = arith.constant 0 : index
    %1 = vector.load %arg9[%c0, %c0_0] : memref<8x1792xf32, #tpu.memory_space<vmem>>, vector<8x384xf32>
    tpu.vector_store %arg9[%c0, %c0_0], %0 {strides = array<i32>} : memref<8x1792xf32, #tpu.memory_space<vmem>>, vector<8x384xf32>,
    %cst_1 = arith.constant 0.000000e+00 : f32
    %2 = vector.broadcast %cst_1 : f32 to vector<8x384xf32>
    %c0_2 = arith.constant 0 : index
    %c1408 = arith.constant 1408 : index
    %3 = vector.load %arg9[%c0_2, %c1408] : memref<8x1792xf32, #tpu.memory_space<vmem>>, vector<8x384xf32>
    tpu.vector_store %arg9[%c0_2, %c1408], %2 {strides = array<i32>} : memref<8x1792xf32, #tpu.memory_space<vmem>>, vector<8x384xf32>,
    %c0_3 = arith.constant 0 : index
    %c0_4 = arith.constant 0 : index
    %4 = vector.load %arg2[%c0_3, %c0_4] : memref<1x1024xi32, #tpu.memory_space<vmem>>, vector<1x1024xi32>
    %c0_5 = arith.constant 0 : index
    %c0_6 = arith.constant 0 : index
    %5 = vector.load %arg3[%c0_5, %c0_6] : memref<8x32xf32, #tpu.memory_space<vmem>>, vector<8x32xf32>
    %c0_7 = arith.constant 0 : index
    %c0_8 = arith.constant 0 : index
    %c0_9 = arith.constant 0 : index
    %6 = vector.load %arg1[%c0_7, %c0_8, %c0_9] : memref<1x32x1024xf32, #tpu.memory_space<vmem>>, vector<1x32x1024xf32>
    %7 = vector.shape_cast %6 : vector<1x32x1024xf32> to vector<32x1024xf32>
    %cst_10 = arith.constant dense<0.000000e+00> : vector<8x1024xf32>
    %8 = tpu.matmul %5, %7, %cst_10 {dimension_numbers = #tpu.dot_dimension_numbers<[1], [0], [0], [1], [0, 0, 1, 1], [], []>} : vector<8x32xf32>, vector<32x1024xf32>, vector<8x1024xf32> -> vector<8x1024xf32>
    %c0_11 = arith.constant 0 : index
    %c0_12 = arith.constant 0 : index
    %c0_13 = arith.constant 0 : index
    %9 = vector.load %arg7[%c0_11, %c0_12, %c0_13] : memref<5x32x8xf32, #tpu.memory_space<vmem>>, vector<1x32x8xf32>
    %10 = vector.shape_cast %9 : vector<1x32x8xf32> to vector<32x8xf32>
    %cst_14 = arith.constant dense<0.000000e+00> : vector<32x1024xf32>
    %11 = tpu.matmul %10, %8, %cst_14 {dimension_numbers = #tpu.dot_dimension_numbers<[1], [0], [0], [1], [0, 0, 1, 1], [], []>} : vector<32x8xf32>, vector<8x1024xf32>, vector<32x1024xf32> -> vector<32x1024xf32>
    %c0_15 = arith.constant 0 : index
    %c384 = arith.constant 384 : index
    %12 = vector.load %arg9[%c0_15, %c384] : memref<8x1792xf32, #tpu.memory_space<vmem>>, vector<8x1024xf32>
    tpu.vector_store %arg9[%c0_15, %c384], %8 {strides = array<i32>} : memref<8x1792xf32, #tpu.memory_space<vmem>>, vector<8x1024xf32>,
    %c0_16 = arith.constant 0 : index
    %c320 = arith.constant 320 : index
    %13 = vector.load %arg9[%c0_16, %c320] : memref<8x1792xf32, #tpu.memory_space<vmem>>, vector<8x1024xf32>
    %c0_17 = arith.constant 0 : index
    %c1 = arith.constant 1 : index
    %c0_18 = arith.constant 0 : index
    %c0_19 = arith.constant 0 : index
    %14 = vector.load %arg4[%c0_17, %c1, %c0_18, %c0_19] : memref<4x9x8x1xf32, #tpu.memory_space<vmem>>, vector<1x1x8x1xf32>
    %15 = vector.shape_cast %14 : vector<1x1x8x1xf32> to vector<8x1xf32>
    %16 = vector.broadcast %15 : vector<8x1xf32> to vector<8x1024xf32>
    %17 = arith.mulf %13, %16 : vector<8x1024xf32>
    %c0_20 = arith.constant 0 : index
    %c384_21 = arith.constant 384 : index
    %18 = vector.load %arg9[%c0_20, %c384_21] : memref<8x1792xf32, #tpu.memory_space<vmem>>, vector<8x1024xf32>
    %c0_22 = arith.constant 0 : index
    %c4 = arith.constant 4 : index
    %c0_23 = arith.constant 0 : index
    %c0_24 = arith.constant 0 : index
    %19 = vector.load %arg4[%c0_22, %c4, %c0_23, %c0_24] : memref<4x9x8x1xf32, #tpu.memory_space<vmem>>, vector<1x1x8x1xf32>
    %20 = vector.shape_cast %19 : vector<1x1x8x1xf32> to vector<8x1xf32>
    %21 = vector.broadcast %20 : vector<8x1xf32> to vector<8x1024xf32>
    %22 = arith.mulf %18, %21 : vector<8x1024xf32>
    %23 = arith.addf %17, %22 : vector<8x1024xf32>
    %c0_25 = arith.constant 0 : index
    %c448 = arith.constant 448 : index
    %24 = vector.load %arg9[%c0_25, %c448] : memref<8x1792xf32, #tpu.memory_space<vmem>>, vector<8x1024xf32>
    %c0_26 = arith.constant 0 : index
    %c7 = arith.constant 7 : index
    %c0_27 = arith.constant 0 : index
    %c0_28 = arith.constant 0 : index
    %25 = vector.load %arg4[%c0_26, %c7, %c0_27, %c0_28] : memref<4x9x8x1xf32, #tpu.memory_space<vmem>>, vector<1x1x8x1xf32>
    %26 = vector.shape_cast %25 : vector<1x1x8x1xf32> to vector<8x1xf32>
    %27 = vector.broadcast %26 : vector<8x1xf32> to vector<8x1024xf32>
    %28 = arith.mulf %24, %27 : vector<8x1024xf32>
    %29 = arith.addf %23, %28 : vector<8x1024xf32>
    %c0_29 = arith.constant 0 : index
    %c318 = arith.constant 318 : index
    %30 = vector.load %arg9[%c0_29, %c318] : memref<8x1792xf32, #tpu.memory_space<vmem>>, vector<8x1024xf32>
    %c0_30 = arith.constant 0 : index
    %c0_31 = arith.constant 0 : index
    %c0_32 = arith.constant 0 : index
    %c0_33 = arith.constant 0 : index
    %31 = vector.load %arg4[%c0_30, %c0_31, %c0_32, %c0_33] : memref<4x9x8x1xf32, #tpu.memory_space<vmem>>, vector<1x1x8x1xf32>
    %32 = vector.shape_cast %31 : vector<1x1x8x1xf32> to vector<8x1xf32>
    %33 = vector.broadcast %32 : vector<8x1xf32> to vector<8x1024xf32>
    %34 = arith.mulf %30, %33 : vector<8x1024xf32>
    %c0_34 = arith.constant 0 : index
    %c382 = arith.constant 382 : index
    %35 = vector.load %arg9[%c0_34, %c382] : memref<8x1792xf32, #tpu.memory_space<vmem>>, vector<8x1024xf32>
    %c0_35 = arith.constant 0 : index
    %c3 = arith.constant 3 : index
    %c0_36 = arith.constant 0 : index
    %c0_37 = arith.constant 0 : index
    %36 = vector.load %arg4[%c0_35, %c3, %c0_36, %c0_37] : memref<4x9x8x1xf32, #tpu.memory_space<vmem>>, vector<1x1x8x1xf32>
    %37 = vector.shape_cast %36 : vector<1x1x8x1xf32> to vector<8x1xf32>
    %38 = vector.broadcast %37 : vector<8x1xf32> to vector<8x1024xf32>
    %39 = arith.mulf %35, %38 : vector<8x1024xf32>
    %40 = arith.addf %34, %39 : vector<8x1024xf32>
    %c0_38 = arith.constant 0 : index
    %c446 = arith.constant 446 : index
    %41 = vector.load %arg9[%c0_38, %c446] : memref<8x1792xf32, #tpu.memory_space<vmem>>, vector<8x1024xf32>
    %c0_39 = arith.constant 0 : index
    %c6 = arith.constant 6 : index
    %c0_40 = arith.constant 0 : index
    %c0_41 = arith.constant 0 : index
    %42 = vector.load %arg4[%c0_39, %c6, %c0_40, %c0_41] : memref<4x9x8x1xf32, #tpu.memory_space<vmem>>, vector<1x1x8x1xf32>
    %43 = vector.shape_cast %42 : vector<1x1x8x1xf32> to vector<8x1xf32>
    %44 = vector.broadcast %43 : vector<8x1xf32> to vector<8x1024xf32>
    %45 = arith.mulf %41, %44 : vector<8x1024xf32>
    %46 = arith.addf %40, %45 : vector<8x1024xf32>
    %c0_42 = arith.constant 0 : index
    %c322 = arith.constant 322 : index
    %47 = vector.load %arg9[%c0_42, %c322] : memref<8x1792xf32, #tpu.memory_space<vmem>>, vector<8x1024xf32>
    %c0_43 = arith.constant 0 : index
    %c2 = arith.constant 2 : index
    %c0_44 = arith.constant 0 : index
    %c0_45 = arith.constant 0 : index
    %48 = vector.load %arg4[%c0_43, %c2, %c0_44, %c0_45] : memref<4x9x8x1xf32, #tpu.memory_space<vmem>>, vector<1x1x8x1xf32>
    %49 = vector.shape_cast %48 : vector<1x1x8x1xf32> to vector<8x1xf32>
    %50 = vector.broadcast %49 : vector<8x1xf32> to vector<8x1024xf32>
    %51 = arith.mulf %47, %50 : vector<8x1024xf32>
    %c0_46 = arith.constant 0 : index
    %c386 = arith.constant 386 : index
    %52 = vector.load %arg9[%c0_46, %c386] : memref<8x1792xf32, #tpu.memory_space<vmem>>, vector<8x1024xf32>
    %c0_47 = arith.constant 0 : index
    %c5 = arith.constant 5 : index
    %c0_48 = arith.constant 0 : index
    %c0_49 = arith.constant 0 : index
    %53 = vector.load %arg4[%c0_47, %c5, %c0_48, %c0_49] : memref<4x9x8x1xf32, #tpu.memory_space<vmem>>, vector<1x1x8x1xf32>
    %54 = vector.shape_cast %53 : vector<1x1x8x1xf32> to vector<8x1xf32>
    %55 = vector.broadcast %54 : vector<8x1xf32> to vector<8x1024xf32>
    %56 = arith.mulf %52, %55 : vector<8x1024xf32>
    %57 = arith.addf %51, %56 : vector<8x1024xf32>
    %c0_50 = arith.constant 0 : index
    %c450 = arith.constant 450 : index
    %58 = vector.load %arg9[%c0_50, %c450] : memref<8x1792xf32, #tpu.memory_space<vmem>>, vector<8x1024xf32>
    %c0_51 = arith.constant 0 : index
    %c8 = arith.constant 8 : index
    %c0_52 = arith.constant 0 : index
    %c0_53 = arith.constant 0 : index
    %59 = vector.load %arg4[%c0_51, %c8, %c0_52, %c0_53] : memref<4x9x8x1xf32, #tpu.memory_space<vmem>>, vector<1x1x8x1xf32>
    %60 = vector.shape_cast %59 : vector<1x1x8x1xf32> to vector<8x1xf32>
    %61 = vector.broadcast %60 : vector<8x1xf32> to vector<8x1024xf32>
    %62 = arith.mulf %58, %61 : vector<8x1024xf32>
    %63 = arith.addf %57, %62 : vector<8x1024xf32>
    %c2_i32 = arith.constant 2 : i32
    %64 = vector.broadcast %c2_i32 : i32 to vector<1x1024xi32>
    %65 = arith.cmpi sge, %4, %64 : vector<1x1024xi32>
    %cst_54 = arith.constant 0.000000e+00 : f32
    %66 = vector.shape_cast %65 : vector<1x1024xi1> to vector<1x1024xi1>
    %67 = vector.broadcast %66 : vector<1x1024xi1> to vector<8x1024xi1>
    %68 = vector.broadcast %cst_54 : f32 to vector<8x1024xf32>
    %69 = arith.select %67, %46, %68 : vector<8x1024xi1>, vector<8x1024xf32>
    %70 = arith.addf %29, %69 : vector<8x1024xf32>
    %c30_i32 = arith.constant 30 : i32
    %71 = vector.broadcast %c30_i32 : i32 to vector<1x1024xi32>
    %72 = arith.cmpi slt, %4, %71 : vector<1x1024xi32>
    %cst_55 = arith.constant 0.000000e+00 : f32
    %73 = vector.shape_cast %72 : vector<1x1024xi1> to vector<1x1024xi1>
    %74 = vector.broadcast %73 : vector<1x1024xi1> to vector<8x1024xi1>
    %75 = vector.broadcast %cst_55 : f32 to vector<8x1024xf32>
    %76 = arith.select %74, %63, %75 : vector<8x1024xi1>, vector<8x1024xf32>
    %77 = arith.addf %70, %76 : vector<8x1024xf32>
    %c0_56 = arith.constant 0 : index
    %c0_57 = arith.constant 0 : index
    %c0_58 = arith.constant 0 : index
    %78 = vector.load %arg5[%c0_56, %c0_57, %c0_58] : memref<4x8x1xf32, #tpu.memory_space<vmem>>, vector<1x8x1xf32>
    %79 = vector.shape_cast %78 : vector<1x8x1xf32> to vector<8x1xf32>
    %80 = vector.broadcast %79 : vector<8x1xf32> to vector<8x1024xf32>
    %81 = arith.mulf %77, %80 : vector<8x1024xf32>
    %c0_59 = arith.constant 0 : index
    %c0_60 = arith.constant 0 : index
    %c0_61 = arith.constant 0 : index
    %82 = vector.load %arg6[%c0_59, %c0_60, %c0_61] : memref<4x8x1xf32, #tpu.memory_space<vmem>>, vector<1x8x1xf32>
    %83 = vector.shape_cast %82 : vector<1x8x1xf32> to vector<8x1xf32>
    %84 = vector.broadcast %83 : vector<8x1xf32> to vector<8x1024xf32>
    %85 = arith.addf %81, %84 : vector<8x1024xf32>
    %cst_62 = arith.constant 0.000000e+00 : f32
    %86 = vector.broadcast %cst_62 : f32 to vector<8x1024xf32>
    %87 = arith.subf %86, %85 : vector<8x1024xf32>
    %88 = math.exp %87 : vector<8x1024xf32>
    %cst_63 = arith.constant 1.000000e+00 : f32
    %89 = vector.broadcast %cst_63 : f32 to vector<8x1024xf32>
    %90 = arith.addf %89, %88 : vector<8x1024xf32>
    %91 = tpu.reciprocal %90 {approx = true} : vector<8x1024xf32> -> vector<8x1024xf32>
    %92 = arith.mulf %85, %91 : vector<8x1024xf32>
    %c1_64 = arith.constant 1 : index
    %c0_65 = arith.constant 0 : index
    %c0_66 = arith.constant 0 : index
    %93 = vector.load %arg7[%c1_64, %c0_65, %c0_66] : memref<5x32x8xf32, #tpu.memory_space<vmem>>, vector<1x32x8xf32>
    %94 = vector.shape_cast %93 : vector<1x32x8xf32> to vector<32x8xf32>
    %cst_67 = arith.constant dense<0.000000e+00> : vector<32x1024xf32>
    %95 = tpu.matmul %94, %92, %cst_67 {dimension_numbers = #tpu.dot_dimension_numbers<[1], [0], [0], [1], [0, 0, 1, 1], [], []>} : vector<32x8xf32>, vector<8x1024xf32>, vector<32x1024xf32> -> vector<32x1024xf32>
    %96 = arith.addf %11, %95 : vector<32x1024xf32>
    %c0_68 = arith.constant 0 : index
    %c384_69 = arith.constant 384 : index
    %97 = vector.load %arg9[%c0_68, %c384_69] : memref<8x1792xf32, #tpu.memory_space<vmem>>, vector<8x1024xf32>
    tpu.vector_store %arg9[%c0_68, %c384_69], %92 {strides = array<i32>} : memref<8x1792xf32, #tpu.memory_space<vmem>>, vector<8x1024xf32>,
    %c0_70 = arith.constant 0 : index
    %c256 = arith.constant 256 : index
    %98 = vector.load %arg9[%c0_70, %c256] : memref<8x1792xf32, #tpu.memory_space<vmem>>, vector<8x1024xf32>
    %c1_71 = arith.constant 1 : index
    %c1_72 = arith.constant 1 : index
    %c0_73 = arith.constant 0 : index
    %c0_74 = arith.constant 0 : index
    %99 = vector.load %arg4[%c1_71, %c1_72, %c0_73, %c0_74] : memref<4x9x8x1xf32, #tpu.memory_space<vmem>>, vector<1x1x8x1xf32>
    %100 = vector.shape_cast %99 : vector<1x1x8x1xf32> to vector<8x1xf32>
    %101 = vector.broadcast %100 : vector<8x1xf32> to vector<8x1024xf32>
    %102 = arith.mulf %98, %101 : vector<8x1024xf32>
    %c0_75 = arith.constant 0 : index
    %c384_76 = arith.constant 384 : index
    %103 = vector.load %arg9[%c0_75, %c384_76] : memref<8x1792xf32, #tpu.memory_space<vmem>>, vector<8x1024xf32>
    %c1_77 = arith.constant 1 : index
    %c4_78 = arith.constant 4 : index
    %c0_79 = arith.constant 0 : index
    %c0_80 = arith.constant 0 : index
    %104 = vector.load %arg4[%c1_77, %c4_78, %c0_79, %c0_80] : memref<4x9x8x1xf32, #tpu.memory_space<vmem>>, vector<1x1x8x1xf32>
    %105 = vector.shape_cast %104 : vector<1x1x8x1xf32> to vector<8x1xf32>
    %106 = vector.broadcast %105 : vector<8x1xf32> to vector<8x1024xf32>
    %107 = arith.mulf %103, %106 : vector<8x1024xf32>
    %108 = arith.addf %102, %107 : vector<8x1024xf32>
    %c0_81 = arith.constant 0 : index
    %c512 = arith.constant 512 : index
    %109 = vector.load %arg9[%c0_81, %c512] : memref<8x1792xf32, #tpu.memory_space<vmem>>, vector<8x1024xf32>
    %c1_82 = arith.constant 1 : index
    %c7_83 = arith.constant 7 : index
    %c0_84 = arith.constant 0 : index
    %c0_85 = arith.constant 0 : index
    %110 = vector.load %arg4[%c1_82, %c7_83, %c0_84, %c0_85] : memref<4x9x8x1xf32, #tpu.memory_space<vmem>>, vector<1x1x8x1xf32>
    %111 = vector.shape_cast %110 : vector<1x1x8x1xf32> to vector<8x1xf32>
    %112 = vector.broadcast %111 : vector<8x1xf32> to vector<8x1024xf32>
    %113 = arith.mulf %109, %112 : vector<8x1024xf32>
    %114 = arith.addf %108, %113 : vector<8x1024xf32>
    %c0_86 = arith.constant 0 : index
    %c252 = arith.constant 252 : index
    %115 = vector.load %arg9[%c0_86, %c252] : memref<8x1792xf32, #tpu.memory_space<vmem>>, vector<8x1024xf32>
    %c1_87 = arith.constant 1 : index
    %c0_88 = arith.constant 0 : index
    %c0_89 = arith.constant 0 : index
    %c0_90 = arith.constant 0 : index
    %116 = vector.load %arg4[%c1_87, %c0_88, %c0_89, %c0_90] : memref<4x9x8x1xf32, #tpu.memory_space<vmem>>, vector<1x1x8x1xf32>
    %117 = vector.shape_cast %116 : vector<1x1x8x1xf32> to vector<8x1xf32>
    %118 = vector.broadcast %117 : vector<8x1xf32> to vector<8x1024xf32>
    %119 = arith.mulf %115, %118 : vector<8x1024xf32>
    %c0_91 = arith.constant 0 : index
    %c380 = arith.constant 380 : index
    %120 = vector.load %arg9[%c0_91, %c380] : memref<8x1792xf32, #tpu.memory_space<vmem>>, vector<8x1024xf32>
    %c1_92 = arith.constant 1 : index
    %c3_93 = arith.constant 3 : index
    %c0_94 = arith.constant 0 : index
    %c0_95 = arith.constant 0 : index
    %121 = vector.load %arg4[%c1_92, %c3_93, %c0_94, %c0_95] : memref<4x9x8x1xf32, #tpu.memory_space<vmem>>, vector<1x1x8x1xf32>
    %122 = vector.shape_cast %121 : vector<1x1x8x1xf32> to vector<8x1xf32>
    %123 = vector.broadcast %122 : vector<8x1xf32> to vector<8x1024xf32>
    %124 = arith.mulf %120, %123 : vector<8x1024xf32>
    %125 = arith.addf %119, %124 : vector<8x1024xf32>
    %c0_96 = arith.constant 0 : index
    %c508 = arith.constant 508 : index
    %126 = vector.load %arg9[%c0_96, %c508] : memref<8x1792xf32, #tpu.memory_space<vmem>>, vector<8x1024xf32>
    %c1_97 = arith.constant 1 : index
    %c6_98 = arith.constant 6 : index
    %c0_99 = arith.constant 0 : index
    %c0_100 = arith.constant 0 : index
    %127 = vector.load %arg4[%c1_97, %c6_98, %c0_99, %c0_100] : memref<4x9x8x1xf32, #tpu.memory_space<vmem>>, vector<1x1x8x1xf32>
    %128 = vector.shape_cast %127 : vector<1x1x8x1xf32> to vector<8x1xf32>
    %129 = vector.broadcast %128 : vector<8x1xf32> to vector<8x1024xf32>
    %130 = arith.mulf %126, %129 : vector<8x1024xf32>
    %131 = arith.addf %125, %130 : vector<8x1024xf32>
    %c0_101 = arith.constant 0 : index
    %c260 = arith.constant 260 : index
    %132 = vector.load %arg9[%c0_101, %c260] : memref<8x1792xf32, #tpu.memory_space<vmem>>, vector<8x1024xf32>
    %c1_102 = arith.constant 1 : index
    %c2_103 = arith.constant 2 : index
    %c0_104 = arith.constant 0 : index
    %c0_105 = arith.constant 0 : index
    %133 = vector.load %arg4[%c1_102, %c2_103, %c0_104, %c0_105] : memref<4x9x8x1xf32, #tpu.memory_space<vmem>>, vector<1x1x8x1xf32>
    %134 = vector.shape_cast %133 : vector<1x1x8x1xf32> to vector<8x1xf32>
    %135 = vector.broadcast %134 : vector<8x1xf32> to vector<8x1024xf32>
    %136 = arith.mulf %132, %135 : vector<8x1024xf32>
    %c0_106 = arith.constant 0 : index
    %c388 = arith.constant 388 : index
    %137 = vector.load %arg9[%c0_106, %c388] : memref<8x1792xf32, #tpu.memory_space<vmem>>, vector<8x1024xf32>
    %c1_107 = arith.constant 1 : index
    %c5_108 = arith.constant 5 : index
    %c0_109 = arith.constant 0 : index
    %c0_110 = arith.constant 0 : index
    %138 = vector.load %arg4[%c1_107, %c5_108, %c0_109, %c0_110] : memref<4x9x8x1xf32, #tpu.memory_space<vmem>>, vector<1x1x8x1xf32>
    %139 = vector.shape_cast %138 : vector<1x1x8x1xf32> to vector<8x1xf32>
    %140 = vector.broadcast %139 : vector<8x1xf32> to vector<8x1024xf32>
    %141 = arith.mulf %137, %140 : vector<8x1024xf32>
    %142 = arith.addf %136, %141 : vector<8x1024xf32>
    %c0_111 = arith.constant 0 : index
    %c516 = arith.constant 516 : index
    %143 = vector.load %arg9[%c0_111, %c516] : memref<8x1792xf32, #tpu.memory_space<vmem>>, vector<8x1024xf32>
    %c1_112 = arith.constant 1 : index
    %c8_113 = arith.constant 8 : index
    %c0_114 = arith.constant 0 : index
    %c0_115 = arith.constant 0 : index
    %144 = vector.load %arg4[%c1_112, %c8_113, %c0_114, %c0_115] : memref<4x9x8x1xf32, #tpu.memory_space<vmem>>, vector<1x1x8x1xf32>
    %145 = vector.shape_cast %144 : vector<1x1x8x1xf32> to vector<8x1xf32>
    %146 = vector.broadcast %145 : vector<8x1xf32> to vector<8x1024xf32>
    %147 = arith.mulf %143, %146 : vector<8x1024xf32>
    %148 = arith.addf %142, %147 : vector<8x1024xf32>
    %c4_i32 = arith.constant 4 : i32
    %149 = vector.broadcast %c4_i32 : i32 to vector<1x1024xi32>
    %150 = arith.cmpi sge, %4, %149 : vector<1x1024xi32>
    %cst_116 = arith.constant 0.000000e+00 : f32
    %151 = vector.shape_cast %150 : vector<1x1024xi1> to vector<1x1024xi1>
    %152 = vector.broadcast %151 : vector<1x1024xi1> to vector<8x1024xi1>
    %153 = vector.broadcast %cst_116 : f32 to vector<8x1024xf32>
    %154 = arith.select %152, %131, %153 : vector<8x1024xi1>, vector<8x1024xf32>
    %155 = arith.addf %114, %154 : vector<8x1024xf32>
    %c28_i32 = arith.constant 28 : i32
    %156 = vector.broadcast %c28_i32 : i32 to vector<1x1024xi32>
    %157 = arith.cmpi slt, %4, %156 : vector<1x1024xi32>
    %cst_117 = arith.constant 0.000000e+00 : f32
    %158 = vector.shape_cast %157 : vector<1x1024xi1> to vector<1x1024xi1>
    %159 = vector.broadcast %158 : vector<1x1024xi1> to vector<8x1024xi1>
    %160 = vector.broadcast %cst_117 : f32 to vector<8x1024xf32>
    %161 = arith.select %159, %148, %160 : vector<8x1024xi1>, vector<8x1024xf32>
    %162 = arith.addf %155, %161 : vector<8x1024xf32>
    %c1_118 = arith.constant 1 : index
    %c0_119 = arith.constant 0 : index
    %c0_120 = arith.constant 0 : index
    %163 = vector.load %arg5[%c1_118, %c0_119, %c0_120] : memref<4x8x1xf32, #tpu.memory_space<vmem>>, vector<1x8x1xf32>
    %164 = vector.shape_cast %163 : vector<1x8x1xf32> to vector<8x1xf32>
    %165 = vector.broadcast %164 : vector<8x1xf32> to vector<8x1024xf32>
    %166 = arith.mulf %162, %165 : vector<8x1024xf32>
    %c1_121 = arith.constant 1 : index
    %c0_122 = arith.constant 0 : index
    %c0_123 = arith.constant 0 : index
    %167 = vector.load %arg6[%c1_121, %c0_122, %c0_123] : memref<4x8x1xf32, #tpu.memory_space<vmem>>, vector<1x8x1xf32>
    %168 = vector.shape_cast %167 : vector<1x8x1xf32> to vector<8x1xf32>
    %169 = vector.broadcast %168 : vector<8x1xf32> to vector<8x1024xf32>
    %170 = arith.addf %166, %169 : vector<8x1024xf32>
    %cst_124 = arith.constant 0.000000e+00 : f32
    %171 = vector.broadcast %cst_124 : f32 to vector<8x1024xf32>
    %172 = arith.subf %171, %170 : vector<8x1024xf32>
    %173 = math.exp %172 : vector<8x1024xf32>
    %cst_125 = arith.constant 1.000000e+00 : f32
    %174 = vector.broadcast %cst_125 : f32 to vector<8x1024xf32>
    %175 = arith.addf %174, %173 : vector<8x1024xf32>
    %176 = tpu.reciprocal %175 {approx = true} : vector<8x1024xf32> -> vector<8x1024xf32>
    %177 = arith.mulf %170, %176 : vector<8x1024xf32>
    %c2_126 = arith.constant 2 : index
    %c0_127 = arith.constant 0 : index
    %c0_128 = arith.constant 0 : index
    %178 = vector.load %arg7[%c2_126, %c0_127, %c0_128] : memref<5x32x8xf32, #tpu.memory_space<vmem>>, vector<1x32x8xf32>
    %179 = vector.shape_cast %178 : vector<1x32x8xf32> to vector<32x8xf32>
    %cst_129 = arith.constant dense<0.000000e+00> : vector<32x1024xf32>
    %180 = tpu.matmul %179, %177, %cst_129 {dimension_numbers = #tpu.dot_dimension_numbers<[1], [0], [0], [1], [0, 0, 1, 1], [], []>} : vector<32x8xf32>, vector<8x1024xf32>, vector<32x1024xf32> -> vector<32x1024xf32>
    %181 = arith.addf %96, %180 : vector<32x1024xf32>
    %c0_130 = arith.constant 0 : index
    %c384_131 = arith.constant 384 : index
    %182 = vector.load %arg9[%c0_130, %c384_131] : memref<8x1792xf32, #tpu.memory_space<vmem>>, vector<8x1024xf32>
    tpu.vector_store %arg9[%c0_130, %c384_131], %177 {strides = array<i32>} : memref<8x1792xf32, #tpu.memory_space<vmem>>, vector<8x1024xf32>,
    %c0_132 = arith.constant 0 : index
    %c192 = arith.constant 192 : index
    %183 = vector.load %arg9[%c0_132, %c192] : memref<8x1792xf32, #tpu.memory_space<vmem>>, vector<8x1024xf32>
    %c2_133 = arith.constant 2 : index
    %c1_134 = arith.constant 1 : index
    %c0_135 = arith.constant 0 : index
    %c0_136 = arith.constant 0 : index
    %184 = vector.load %arg4[%c2_133, %c1_134, %c0_135, %c0_136] : memref<4x9x8x1xf32, #tpu.memory_space<vmem>>, vector<1x1x8x1xf32>
    %185 = vector.shape_cast %184 : vector<1x1x8x1xf32> to vector<8x1xf32>
    %186 = vector.broadcast %185 : vector<8x1xf32> to vector<8x1024xf32>
    %187 = arith.mulf %183, %186 : vector<8x1024xf32>
    %c0_137 = arith.constant 0 : index
    %c384_138 = arith.constant 384 : index
    %188 = vector.load %arg9[%c0_137, %c384_138] : memref<8x1792xf32, #tpu.memory_space<vmem>>, vector<8x1024xf32>
    %c2_139 = arith.constant 2 : index
    %c4_140 = arith.constant 4 : index
    %c0_141 = arith.constant 0 : index
    %c0_142 = arith.constant 0 : index
    %189 = vector.load %arg4[%c2_139, %c4_140, %c0_141, %c0_142] : memref<4x9x8x1xf32, #tpu.memory_space<vmem>>, vector<1x1x8x1xf32>
    %190 = vector.shape_cast %189 : vector<1x1x8x1xf32> to vector<8x1xf32>
    %191 = vector.broadcast %190 : vector<8x1xf32> to vector<8x1024xf32>
    %192 = arith.mulf %188, %191 : vector<8x1024xf32>
    %193 = arith.addf %187, %192 : vector<8x1024xf32>
    %c0_143 = arith.constant 0 : index
    %c576 = arith.constant 576 : index
    %194 = vector.load %arg9[%c0_143, %c576] : memref<8x1792xf32, #tpu.memory_space<vmem>>, vector<8x1024xf32>
    %c2_144 = arith.constant 2 : index
    %c7_145 = arith.constant 7 : index
    %c0_146 = arith.constant 0 : index
    %c0_147 = arith.constant 0 : index
    %195 = vector.load %arg4[%c2_144, %c7_145, %c0_146, %c0_147] : memref<4x9x8x1xf32, #tpu.memory_space<vmem>>, vector<1x1x8x1xf32>
    %196 = vector.shape_cast %195 : vector<1x1x8x1xf32> to vector<8x1xf32>
    %197 = vector.broadcast %196 : vector<8x1xf32> to vector<8x1024xf32>
    %198 = arith.mulf %194, %197 : vector<8x1024xf32>
    %199 = arith.addf %193, %198 : vector<8x1024xf32>
    %c0_148 = arith.constant 0 : index
    %c186 = arith.constant 186 : index
    %200 = vector.load %arg9[%c0_148, %c186] : memref<8x1792xf32, #tpu.memory_space<vmem>>, vector<8x1024xf32>
    %c2_149 = arith.constant 2 : index
    %c0_150 = arith.constant 0 : index
    %c0_151 = arith.constant 0 : index
    %c0_152 = arith.constant 0 : index
    %201 = vector.load %arg4[%c2_149, %c0_150, %c0_151, %c0_152] : memref<4x9x8x1xf32, #tpu.memory_space<vmem>>, vector<1x1x8x1xf32>
    %202 = vector.shape_cast %201 : vector<1x1x8x1xf32> to vector<8x1xf32>
    %203 = vector.broadcast %202 : vector<8x1xf32> to vector<8x1024xf32>
    %204 = arith.mulf %200, %203 : vector<8x1024xf32>
    %c0_153 = arith.constant 0 : index
    %c378 = arith.constant 378 : index
    %205 = vector.load %arg9[%c0_153, %c378] : memref<8x1792xf32, #tpu.memory_space<vmem>>, vector<8x1024xf32>
    %c2_154 = arith.constant 2 : index
    %c3_155 = arith.constant 3 : index
    %c0_156 = arith.constant 0 : index
    %c0_157 = arith.constant 0 : index
    %206 = vector.load %arg4[%c2_154, %c3_155, %c0_156, %c0_157] : memref<4x9x8x1xf32, #tpu.memory_space<vmem>>, vector<1x1x8x1xf32>
    %207 = vector.shape_cast %206 : vector<1x1x8x1xf32> to vector<8x1xf32>
    %208 = vector.broadcast %207 : vector<8x1xf32> to vector<8x1024xf32>
    %209 = arith.mulf %205, %208 : vector<8x1024xf32>
    %210 = arith.addf %204, %209 : vector<8x1024xf32>
    %c0_158 = arith.constant 0 : index
    %c570 = arith.constant 570 : index
    %211 = vector.load %arg9[%c0_158, %c570] : memref<8x1792xf32, #tpu.memory_space<vmem>>, vector<8x1024xf32>
    %c2_159 = arith.constant 2 : index
    %c6_160 = arith.constant 6 : index
    %c0_161 = arith.constant 0 : index
    %c0_162 = arith.constant 0 : index
    %212 = vector.load %arg4[%c2_159, %c6_160, %c0_161, %c0_162] : memref<4x9x8x1xf32, #tpu.memory_space<vmem>>, vector<1x1x8x1xf32>
    %213 = vector.shape_cast %212 : vector<1x1x8x1xf32> to vector<8x1xf32>
    %214 = vector.broadcast %213 : vector<8x1xf32> to vector<8x1024xf32>
    %215 = arith.mulf %211, %214 : vector<8x1024xf32>
    %216 = arith.addf %210, %215 : vector<8x1024xf32>
    %c0_163 = arith.constant 0 : index
    %c198 = arith.constant 198 : index
    %217 = vector.load %arg9[%c0_163, %c198] : memref<8x1792xf32, #tpu.memory_space<vmem>>, vector<8x1024xf32>
    %c2_164 = arith.constant 2 : index
    %c2_165 = arith.constant 2 : index
    %c0_166 = arith.constant 0 : index
    %c0_167 = arith.constant 0 : index
    %218 = vector.load %arg4[%c2_164, %c2_165, %c0_166, %c0_167] : memref<4x9x8x1xf32, #tpu.memory_space<vmem>>, vector<1x1x8x1xf32>
    %219 = vector.shape_cast %218 : vector<1x1x8x1xf32> to vector<8x1xf32>
    %220 = vector.broadcast %219 : vector<8x1xf32> to vector<8x1024xf32>
    %221 = arith.mulf %217, %220 : vector<8x1024xf32>
    %c0_168 = arith.constant 0 : index
    %c390 = arith.constant 390 : index
    %222 = vector.load %arg9[%c0_168, %c390] : memref<8x1792xf32, #tpu.memory_space<vmem>>, vector<8x1024xf32>
    %c2_169 = arith.constant 2 : index
    %c5_170 = arith.constant 5 : index
    %c0_171 = arith.constant 0 : index
    %c0_172 = arith.constant 0 : index
    %223 = vector.load %arg4[%c2_169, %c5_170, %c0_171, %c0_172] : memref<4x9x8x1xf32, #tpu.memory_space<vmem>>, vector<1x1x8x1xf32>
    %224 = vector.shape_cast %223 : vector<1x1x8x1xf32> to vector<8x1xf32>
    %225 = vector.broadcast %224 : vector<8x1xf32> to vector<8x1024xf32>
    %226 = arith.mulf %222, %225 : vector<8x1024xf32>
    %227 = arith.addf %221, %226 : vector<8x1024xf32>
    %c0_173 = arith.constant 0 : index
    %c582 = arith.constant 582 : index
    %228 = vector.load %arg9[%c0_173, %c582] : memref<8x1792xf32, #tpu.memory_space<vmem>>, vector<8x1024xf32>
    %c2_174 = arith.constant 2 : index
    %c8_175 = arith.constant 8 : index
    %c0_176 = arith.constant 0 : index
    %c0_177 = arith.constant 0 : index
    %229 = vector.load %arg4[%c2_174, %c8_175, %c0_176, %c0_177] : memref<4x9x8x1xf32, #tpu.memory_space<vmem>>, vector<1x1x8x1xf32>
    %230 = vector.shape_cast %229 : vector<1x1x8x1xf32> to vector<8x1xf32>
    %231 = vector.broadcast %230 : vector<8x1xf32> to vector<8x1024xf32>
    %232 = arith.mulf %228, %231 : vector<8x1024xf32>
    %233 = arith.addf %227, %232 : vector<8x1024xf32>
    %c6_i32 = arith.constant 6 : i32
    %234 = vector.broadcast %c6_i32 : i32 to vector<1x1024xi32>
    %235 = arith.cmpi sge, %4, %234 : vector<1x1024xi32>
    %cst_178 = arith.constant 0.000000e+00 : f32
    %236 = vector.shape_cast %235 : vector<1x1024xi1> to vector<1x1024xi1>
    %237 = vector.broadcast %236 : vector<1x1024xi1> to vector<8x1024xi1>
    %238 = vector.broadcast %cst_178 : f32 to vector<8x1024xf32>
    %239 = arith.select %237, %216, %238 : vector<8x1024xi1>, vector<8x1024xf32>
    %240 = arith.addf %199, %239 : vector<8x1024xf32>
    %c26_i32 = arith.constant 26 : i32
    %241 = vector.broadcast %c26_i32 : i32 to vector<1x1024xi32>
    %242 = arith.cmpi slt, %4, %241 : vector<1x1024xi32>
    %cst_179 = arith.constant 0.000000e+00 : f32
    %243 = vector.shape_cast %242 : vector<1x1024xi1> to vector<1x1024xi1>
    %244 = vector.broadcast %243 : vector<1x1024xi1> to vector<8x1024xi1>
    %245 = vector.broadcast %cst_179 : f32 to vector<8x1024xf32>
    %246 = arith.select %244, %233, %245 : vector<8x1024xi1>, vector<8x1024xf32>
    %247 = arith.addf %240, %246 : vector<8x1024xf32>
    %c2_180 = arith.constant 2 : index
    %c0_181 = arith.constant 0 : index
    %c0_182 = arith.constant 0 : index
    %248 = vector.load %arg5[%c2_180, %c0_181, %c0_182] : memref<4x8x1xf32, #tpu.memory_space<vmem>>, vector<1x8x1xf32>
    %249 = vector.shape_cast %248 : vector<1x8x1xf32> to vector<8x1xf32>
    %250 = vector.broadcast %249 : vector<8x1xf32> to vector<8x1024xf32>
    %251 = arith.mulf %247, %250 : vector<8x1024xf32>
    %c2_183 = arith.constant 2 : index
    %c0_184 = arith.constant 0 : index
    %c0_185 = arith.constant 0 : index
    %252 = vector.load %arg6[%c2_183, %c0_184, %c0_185] : memref<4x8x1xf32, #tpu.memory_space<vmem>>, vector<1x8x1xf32>
    %253 = vector.shape_cast %252 : vector<1x8x1xf32> to vector<8x1xf32>
    %254 = vector.broadcast %253 : vector<8x1xf32> to vector<8x1024xf32>
    %255 = arith.addf %251, %254 : vector<8x1024xf32>
    %cst_186 = arith.constant 0.000000e+00 : f32
    %256 = vector.broadcast %cst_186 : f32 to vector<8x1024xf32>
    %257 = arith.subf %256, %255 : vector<8x1024xf32>
    %258 = math.exp %257 : vector<8x1024xf32>
    %cst_187 = arith.constant 1.000000e+00 : f32
    %259 = vector.broadcast %cst_187 : f32 to vector<8x1024xf32>
    %260 = arith.addf %259, %258 : vector<8x1024xf32>
    %261 = tpu.reciprocal %260 {approx = true} : vector<8x1024xf32> -> vector<8x1024xf32>
    %262 = arith.mulf %255, %261 : vector<8x1024xf32>
    %c3_188 = arith.constant 3 : index
    %c0_189 = arith.constant 0 : index
    %c0_190 = arith.constant 0 : index
    %263 = vector.load %arg7[%c3_188, %c0_189, %c0_190] : memref<5x32x8xf32, #tpu.memory_space<vmem>>, vector<1x32x8xf32>
    %264 = vector.shape_cast %263 : vector<1x32x8xf32> to vector<32x8xf32>
    %cst_191 = arith.constant dense<0.000000e+00> : vector<32x1024xf32>
    %265 = tpu.matmul %264, %262, %cst_191 {dimension_numbers = #tpu.dot_dimension_numbers<[1], [0], [0], [1], [0, 0, 1, 1], [], []>} : vector<32x8xf32>, vector<8x1024xf32>, vector<32x1024xf32> -> vector<32x1024xf32>
    %266 = arith.addf %181, %265 : vector<32x1024xf32>
    %c0_192 = arith.constant 0 : index
    %c384_193 = arith.constant 384 : index
    %267 = vector.load %arg9[%c0_192, %c384_193] : memref<8x1792xf32, #tpu.memory_space<vmem>>, vector<8x1024xf32>
    tpu.vector_store %arg9[%c0_192, %c384_193], %262 {strides = array<i32>} : memref<8x1792xf32, #tpu.memory_space<vmem>>, vector<8x1024xf32>,
    %c0_194 = arith.constant 0 : index
    %c128 = arith.constant 128 : index
    %268 = vector.load %arg9[%c0_194, %c128] : memref<8x1792xf32, #tpu.memory_space<vmem>>, vector<8x1024xf32>
    %c3_195 = arith.constant 3 : index
    %c1_196 = arith.constant 1 : index
    %c0_197 = arith.constant 0 : index
    %c0_198 = arith.constant 0 : index
    %269 = vector.load %arg4[%c3_195, %c1_196, %c0_197, %c0_198] : memref<4x9x8x1xf32, #tpu.memory_space<vmem>>, vector<1x1x8x1xf32>
    %270 = vector.shape_cast %269 : vector<1x1x8x1xf32> to vector<8x1xf32>
    %271 = vector.broadcast %270 : vector<8x1xf32> to vector<8x1024xf32>
    %272 = arith.mulf %268, %271 : vector<8x1024xf32>
    %c0_199 = arith.constant 0 : index
    %c384_200 = arith.constant 384 : index
    %273 = vector.load %arg9[%c0_199, %c384_200] : memref<8x1792xf32, #tpu.memory_space<vmem>>, vector<8x1024xf32>
    %c3_201 = arith.constant 3 : index
    %c4_202 = arith.constant 4 : index
    %c0_203 = arith.constant 0 : index
    %c0_204 = arith.constant 0 : index
    %274 = vector.load %arg4[%c3_201, %c4_202, %c0_203, %c0_204] : memref<4x9x8x1xf32, #tpu.memory_space<vmem>>, vector<1x1x8x1xf32>
    %275 = vector.shape_cast %274 : vector<1x1x8x1xf32> to vector<8x1xf32>
    %276 = vector.broadcast %275 : vector<8x1xf32> to vector<8x1024xf32>
    %277 = arith.mulf %273, %276 : vector<8x1024xf32>
    %278 = arith.addf %272, %277 : vector<8x1024xf32>
    %c0_205 = arith.constant 0 : index
    %c640 = arith.constant 640 : index
    %279 = vector.load %arg9[%c0_205, %c640] : memref<8x1792xf32, #tpu.memory_space<vmem>>, vector<8x1024xf32>
    %c3_206 = arith.constant 3 : index
    %c7_207 = arith.constant 7 : index
    %c0_208 = arith.constant 0 : index
    %c0_209 = arith.constant 0 : index
    %280 = vector.load %arg4[%c3_206, %c7_207, %c0_208, %c0_209] : memref<4x9x8x1xf32, #tpu.memory_space<vmem>>, vector<1x1x8x1xf32>
    %281 = vector.shape_cast %280 : vector<1x1x8x1xf32> to vector<8x1xf32>
    %282 = vector.broadcast %281 : vector<8x1xf32> to vector<8x1024xf32>
    %283 = arith.mulf %279, %282 : vector<8x1024xf32>
    %284 = arith.addf %278, %283 : vector<8x1024xf32>
    %c0_210 = arith.constant 0 : index
    %c120 = arith.constant 120 : index
    %285 = vector.load %arg9[%c0_210, %c120] : memref<8x1792xf32, #tpu.memory_space<vmem>>, vector<8x1024xf32>
    %c3_211 = arith.constant 3 : index
    %c0_212 = arith.constant 0 : index
    %c0_213 = arith.constant 0 : index
    %c0_214 = arith.constant 0 : index
    %286 = vector.load %arg4[%c3_211, %c0_212, %c0_213, %c0_214] : memref<4x9x8x1xf32, #tpu.memory_space<vmem>>, vector<1x1x8x1xf32>
    %287 = vector.shape_cast %286 : vector<1x1x8x1xf32> to vector<8x1xf32>
    %288 = vector.broadcast %287 : vector<8x1xf32> to vector<8x1024xf32>
    %289 = arith.mulf %285, %288 : vector<8x1024xf32>
    %c0_215 = arith.constant 0 : index
    %c376 = arith.constant 376 : index
    %290 = vector.load %arg9[%c0_215, %c376] : memref<8x1792xf32, #tpu.memory_space<vmem>>, vector<8x1024xf32>
    %c3_216 = arith.constant 3 : index
    %c3_217 = arith.constant 3 : index
    %c0_218 = arith.constant 0 : index
    %c0_219 = arith.constant 0 : index
    %291 = vector.load %arg4[%c3_216, %c3_217, %c0_218, %c0_219] : memref<4x9x8x1xf32, #tpu.memory_space<vmem>>, vector<1x1x8x1xf32>
    %292 = vector.shape_cast %291 : vector<1x1x8x1xf32> to vector<8x1xf32>
    %293 = vector.broadcast %292 : vector<8x1xf32> to vector<8x1024xf32>
    %294 = arith.mulf %290, %293 : vector<8x1024xf32>
    %295 = arith.addf %289, %294 : vector<8x1024xf32>
    %c0_220 = arith.constant 0 : index
    %c632 = arith.constant 632 : index
    %296 = vector.load %arg9[%c0_220, %c632] : memref<8x1792xf32, #tpu.memory_space<vmem>>, vector<8x1024xf32>
    %c3_221 = arith.constant 3 : index
    %c6_222 = arith.constant 6 : index
    %c0_223 = arith.constant 0 : index
    %c0_224 = arith.constant 0 : index
    %297 = vector.load %arg4[%c3_221, %c6_222, %c0_223, %c0_224] : memref<4x9x8x1xf32, #tpu.memory_space<vmem>>, vector<1x1x8x1xf32>
    %298 = vector.shape_cast %297 : vector<1x1x8x1xf32> to vector<8x1xf32>
    %299 = vector.broadcast %298 : vector<8x1xf32> to vector<8x1024xf32>
    %300 = arith.mulf %296, %299 : vector<8x1024xf32>
    %301 = arith.addf %295, %300 : vector<8x1024xf32>
    %c0_225 = arith.constant 0 : index
    %c136 = arith.constant 136 : index
    %302 = vector.load %arg9[%c0_225, %c136] : memref<8x1792xf32, #tpu.memory_space<vmem>>, vector<8x1024xf32>
    %c3_226 = arith.constant 3 : index
    %c2_227 = arith.constant 2 : index
    %c0_228 = arith.constant 0 : index
    %c0_229 = arith.constant 0 : index
    %303 = vector.load %arg4[%c3_226, %c2_227, %c0_228, %c0_229] : memref<4x9x8x1xf32, #tpu.memory_space<vmem>>, vector<1x1x8x1xf32>
    %304 = vector.shape_cast %303 : vector<1x1x8x1xf32> to vector<8x1xf32>
    %305 = vector.broadcast %304 : vector<8x1xf32> to vector<8x1024xf32>
    %306 = arith.mulf %302, %305 : vector<8x1024xf32>
    %c0_230 = arith.constant 0 : index
    %c392 = arith.constant 392 : index
    %307 = vector.load %arg9[%c0_230, %c392] : memref<8x1792xf32, #tpu.memory_space<vmem>>, vector<8x1024xf32>
    %c3_231 = arith.constant 3 : index
    %c5_232 = arith.constant 5 : index
    %c0_233 = arith.constant 0 : index
    %c0_234 = arith.constant 0 : index
    %308 = vector.load %arg4[%c3_231, %c5_232, %c0_233, %c0_234] : memref<4x9x8x1xf32, #tpu.memory_space<vmem>>, vector<1x1x8x1xf32>
    %309 = vector.shape_cast %308 : vector<1x1x8x1xf32> to vector<8x1xf32>
    %310 = vector.broadcast %309 : vector<8x1xf32> to vector<8x1024xf32>
    %311 = arith.mulf %307, %310 : vector<8x1024xf32>
    %312 = arith.addf %306, %311 : vector<8x1024xf32>
    %c0_235 = arith.constant 0 : index
    %c648 = arith.constant 648 : index
    %313 = vector.load %arg9[%c0_235, %c648] : memref<8x1792xf32, #tpu.memory_space<vmem>>, vector<8x1024xf32>
    %c3_236 = arith.constant 3 : index
    %c8_237 = arith.constant 8 : index
    %c0_238 = arith.constant 0 : index
    %c0_239 = arith.constant 0 : index
    %314 = vector.load %arg4[%c3_236, %c8_237, %c0_238, %c0_239] : memref<4x9x8x1xf32, #tpu.memory_space<vmem>>, vector<1x1x8x1xf32>
    %315 = vector.shape_cast %314 : vector<1x1x8x1xf32> to vector<8x1xf32>
    %316 = vector.broadcast %315 : vector<8x1xf32> to vector<8x1024xf32>
    %317 = arith.mulf %313, %316 : vector<8x1024xf32>
    %318 = arith.addf %312, %317 : vector<8x1024xf32>
    %c8_i32 = arith.constant 8 : i32
    %319 = vector.broadcast %c8_i32 : i32 to vector<1x1024xi32>
    %320 = arith.cmpi sge, %4, %319 : vector<1x1024xi32>
    %cst_240 = arith.constant 0.000000e+00 : f32
    %321 = vector.shape_cast %320 : vector<1x1024xi1> to vector<1x1024xi1>
    %322 = vector.broadcast %321 : vector<1x1024xi1> to vector<8x1024xi1>
    %323 = vector.broadcast %cst_240 : f32 to vector<8x1024xf32>
    %324 = arith.select %322, %301, %323 : vector<8x1024xi1>, vector<8x1024xf32>
    %325 = arith.addf %284, %324 : vector<8x1024xf32>
    %c24_i32 = arith.constant 24 : i32
    %326 = vector.broadcast %c24_i32 : i32 to vector<1x1024xi32>
    %327 = arith.cmpi slt, %4, %326 : vector<1x1024xi32>
    %cst_241 = arith.constant 0.000000e+00 : f32
    %328 = vector.shape_cast %327 : vector<1x1024xi1> to vector<1x1024xi1>
    %329 = vector.broadcast %328 : vector<1x1024xi1> to vector<8x1024xi1>
    %330 = vector.broadcast %cst_241 : f32 to vector<8x1024xf32>
    %331 = arith.select %329, %318, %330 : vector<8x1024xi1>, vector<8x1024xf32>
    %332 = arith.addf %325, %331 : vector<8x1024xf32>
    %c3_242 = arith.constant 3 : index
    %c0_243 = arith.constant 0 : index
    %c0_244 = arith.constant 0 : index
    %333 = vector.load %arg5[%c3_242, %c0_243, %c0_244] : memref<4x8x1xf32, #tpu.memory_space<vmem>>, vector<1x8x1xf32>
    %334 = vector.shape_cast %333 : vector<1x8x1xf32> to vector<8x1xf32>
    %335 = vector.broadcast %334 : vector<8x1xf32> to vector<8x1024xf32>
    %336 = arith.mulf %332, %335 : vector<8x1024xf32>
    %c3_245 = arith.constant 3 : index
    %c0_246 = arith.constant 0 : index
    %c0_247 = arith.constant 0 : index
    %337 = vector.load %arg6[%c3_245, %c0_246, %c0_247] : memref<4x8x1xf32, #tpu.memory_space<vmem>>, vector<1x8x1xf32>
    %338 = vector.shape_cast %337 : vector<1x8x1xf32> to vector<8x1xf32>
    %339 = vector.broadcast %338 : vector<8x1xf32> to vector<8x1024xf32>
    %340 = arith.addf %336, %339 : vector<8x1024xf32>
    %cst_248 = arith.constant 0.000000e+00 : f32
    %341 = vector.broadcast %cst_248 : f32 to vector<8x1024xf32>
    %342 = arith.subf %341, %340 : vector<8x1024xf32>
    %343 = math.exp %342 : vector<8x1024xf32>
    %cst_249 = arith.constant 1.000000e+00 : f32
    %344 = vector.broadcast %cst_249 : f32 to vector<8x1024xf32>
    %345 = arith.addf %344, %343 : vector<8x1024xf32>
    %346 = tpu.reciprocal %345 {approx = true} : vector<8x1024xf32> -> vector<8x1024xf32>
    %347 = arith.mulf %340, %346 : vector<8x1024xf32>
    %c4_250 = arith.constant 4 : index
    %c0_251 = arith.constant 0 : index
    %c0_252 = arith.constant 0 : index
    %348 = vector.load %arg7[%c4_250, %c0_251, %c0_252] : memref<5x32x8xf32, #tpu.memory_space<vmem>>, vector<1x32x8xf32>
    %349 = vector.shape_cast %348 : vector<1x32x8xf32> to vector<32x8xf32>
    %cst_253 = arith.constant dense<0.000000e+00> : vector<32x1024xf32>
    %350 = tpu.matmul %349, %347, %cst_253 {dimension_numbers = #tpu.dot_dimension_numbers<[1], [0], [0], [1], [0, 0, 1, 1], [], []>} : vector<32x8xf32>, vector<8x1024xf32>, vector<32x1024xf32> -> vector<32x1024xf32>
    %351 = arith.addf %266, %350 : vector<32x1024xf32>
    %c0_254 = arith.constant 0 : index
    %c0_255 = arith.constant 0 : index
    %c0_256 = arith.constant 0 : index
    %352 = vector.load %arg8[%c0_254, %c0_255, %c0_256] : memref<1x32x1024xf32, #tpu.memory_space<vmem>>, vector<1x32x1024xf32>
    %353 = vector.shape_cast %352 : vector<1x32x1024xf32> to vector<32x1024xf32>
    %354 = vector.shape_cast %351 : vector<32x1024xf32> to vector<1x32x1024xf32>
    tpu.vector_store %arg8[%c0_254, %c0_255, %c0_256], %354 {strides = array<i32>} : memref<1x32x1024xf32, #tpu.memory_space<vmem>>, vector<1x32x1024xf32>,
    return
  }
  func.func @transform_0(%arg0: i32) -> (i32, i32, i32) {
    %c0_i32 = arith.constant 0 : i32
    %c0_i32_0 = arith.constant 0 : i32
    %c0_i32_1 = arith.constant 0 : i32
    return %arg0, %c0_i32, %c0_i32_0 : i32, i32, i32
  }
  func.func @transform_1(%arg0: i32) -> (i32, i32) {
    %c0_i32 = arith.constant 0 : i32
    %c0_i32_0 = arith.constant 0 : i32
    %c0_i32_1 = arith.constant 0 : i32
    return %c0_i32, %c0_i32_0 : i32, i32
  }
  func.func @transform_2(%arg0: i32) -> (i32, i32) {
    %c0_i32 = arith.constant 0 : i32
    %c0_i32_0 = arith.constant 0 : i32
    %c0_i32_1 = arith.constant 0 : i32
    return %c0_i32, %c0_i32_0 : i32, i32
  }
  func.func @transform_3(%arg0: i32) -> (i32, i32, i32, i32) {
    %c0_i32 = arith.constant 0 : i32
    %c0_i32_0 = arith.constant 0 : i32
    %c0_i32_1 = arith.constant 0 : i32
    %c0_i32_2 = arith.constant 0 : i32
    %c0_i32_3 = arith.constant 0 : i32
    return %c0_i32, %c0_i32_0, %c0_i32_1, %c0_i32_2 : i32, i32, i32, i32
  }
  func.func @transform_4(%arg0: i32) -> (i32, i32, i32) {
    %c0_i32 = arith.constant 0 : i32
    %c0_i32_0 = arith.constant 0 : i32
    %c0_i32_1 = arith.constant 0 : i32
    %c0_i32_2 = arith.constant 0 : i32
    return %c0_i32, %c0_i32_0, %c0_i32_1 : i32, i32, i32
  }
  func.func @transform_5(%arg0: i32) -> (i32, i32, i32) {
    %c0_i32 = arith.constant 0 : i32
    %c0_i32_0 = arith.constant 0 : i32
    %c0_i32_1 = arith.constant 0 : i32
    %c0_i32_2 = arith.constant 0 : i32
    return %c0_i32, %c0_i32_0, %c0_i32_1 : i32, i32, i32
  }
  func.func @transform_6(%arg0: i32) -> (i32, i32, i32) {
    %c0_i32 = arith.constant 0 : i32
    %c0_i32_0 = arith.constant 0 : i32
    %c0_i32_1 = arith.constant 0 : i32
    %c0_i32_2 = arith.constant 0 : i32
    return %c0_i32, %c0_i32_0, %c0_i32_1 : i32, i32, i32
  }
  func.func @transform_7(%arg0: i32) -> (i32, i32, i32) {
    %c0_i32 = arith.constant 0 : i32
    %c0_i32_0 = arith.constant 0 : i32
    %c0_i32_1 = arith.constant 0 : i32
    return %arg0, %c0_i32, %c0_i32_0 : i32, i32, i32
  }
}

</mosaic_0001>

<llo_original>
// kernel: tpu_custom_call.1
$region0: #{tpu_custom_call.1}
  #allocation0 [shape = 'u32[]', space=smem, size = 0x4, offset = 0x4, fixed_abs, tag = 'smem constant byte address 0x4 - core index']
  #allocation1 [shape = 'u32[144,128]{1,0:T(1,128)}', space=vmem, size = 0x12000, scoped, tag = 'internal scratch']
  #allocation2 [shape = 'f32[8,1792]{1,0:T(8,128)}', space=vmem, size = 0xe000, scoped, tag = 'scratch operand']
  %s0 = inlined_call_operand.vmem [shape: f32[2,32,1024], index: 0, kind: input, shape index: {}]
  %s1 = inlined_call_operand.vmem [shape: s32[1,1024], index: 1, kind: input, shape index: {}]
  %s2 = inlined_call_operand.hbm [shape: f32[8,32], index: 2, kind: input, shape index: {}]
  %s3 = inlined_call_operand.vmem [shape: f32[4,9,8,1], index: 3, kind: input, shape index: {}]
  %s4 = inlined_call_operand.vmem [shape: f32[4,8,1], index: 4, kind: input, shape index: {}]
  %s5 = inlined_call_operand.vmem [shape: f32[4,8,1], index: 5, kind: input, shape index: {}]
  %s6 = inlined_call_operand.vmem [shape: f32[5,32,8], index: 6, kind: input, shape index: {}]
  %s7 = inlined_call_operand.hbm [shape: f32[2,32,1024], index: 7, kind: output, shape index: {}]
  %s8 = sld [smem:[#allocation0]]
  $region65: #{tpu_custom_call.1} parent=0
    _
  %s10 = ssub.s32 1, %s8
  %s11 = scalar_select 0, %s10, %s8
  $region1: #{tpu_custom_call.1} parent=0
    #allocation3 [shape = 'u8[4096]{0}', space=vmem, size = 0x1000, scoped, tag = 'input window, operand 2, single buffered']
    #allocation4 [shape = 's32[2]{0}', space=sflag, size = 0x8, scoped, tag = 'scoped memory for tpu_custom_call.1']
    #allocation5 [shape = 's32[2]{0}', space=sflag, size = 0x8, scoped, tag = 'scoped memory for tpu_custom_call.1']
    #allocation6 [shape = 'u8[262144]{0}', space=vmem, size = 0x40000, scoped, tag = 'output window, operand 0']
    %12 = vsyncpa [#allocation4], 0
    %13 = vsyncpa [#allocation5], 0
    %s14 = scalar_lea.sflag [#allocation5], 1
    %15 = vsyncpa %s14, 0
    loop: start=0, step=1, limit=4
    $region2: #{tpu_custom_call.1} parent=1 // loop_pre_header
      _
    $region3: #{tpu_custom_call.1} parent=1 // loop_header
      %s17 = sphi 0, %s21
      %p18 = scmp.ge.s32.totalorder %s17, 4
      %s27 = sphi 0, %s29
      %s30 = sphi 0, %s27
      %s31 = sphi 0, %s30
      %s47 = sphi 0, %s31
      %s51 = sphi 0, %s51
      %s53 = sphi 0, %s51
      %s54 = sphi 0, %s53
      %s68 = sphi 0, %s54
      %s72 = sphi 0, %s72
      %s74 = sphi 0, %s72
      %s75 = sphi 0, %s74
      %s89 = sphi 0, %s75
      %s93 = sphi 0, %s93
      %s95 = sphi 0, %s93
      %s96 = sphi 0, %s95
      %s110 = sphi 0, %s96
      %s114 = sphi 0, %s114
      %s116 = sphi 0, %s114
      %s117 = sphi 0, %s116
      %s131 = sphi 0, %s117
      %s135 = sphi 0, %s135
      %s137 = sphi 0, %s135
      %s138 = sphi 0, %s137
      %s152 = sphi 0, %s138
      %s156 = sphi 0, %s156
      %s158 = sphi 0, %s156
      %s159 = sphi 0, %s158
      %s173 = sphi 0, %s159
      %s179 = sphi 0, %s181
      %s182 = sphi 0, %s179
      %s183 = sphi 0, %s182
      %s199 = sphi 0, %s183
    $region4: #{tpu_custom_call.1} parent=1 // loop_header_branch
      %20 = sbr.rel (%p18) target = $region8
    $region5: #{tpu_custom_call.1} parent=1 // loop_body
      %s22 = ssub.s32 %s17, 1
      %s23 = ssub.s32 %s17, 2
      %s24 = sadd.s32 %s17, 1
      %s25 = ssub.s32 %s17, %s24
      %p26 = scmp.eq.s32.totalorder %s25, 0
      %s28 = sadd.s32 %s27, 1
      %s29 = scalar_select %p26, %s27, %s28
      %p32 = pneg %p26
      %p33 = scmp.eq.s32.totalorder %s17, 1
      %p34 = por %p32, %p33
      %p35 = scmp.ne.s32.totalorder %s27, %s30
      %p36 = scmp.eq.s32.totalorder %s17, 0
      %p37 = por %p35, %p36
      %p38 = scmp.ne.s32.totalorder %s27, %s30
      %p39 = scmp.eq.s32.totalorder %s22, 1
      %p40 = por %p38, %p39
      %p41 = scmp.ne.s32.totalorder %s30, %s31
      %p42 = scmp.eq.s32.totalorder %s22, 0
      %p43 = por %p41, %p42
      %p44 = scmp.ne.s32.totalorder %s30, %s31
      %p45 = scmp.eq.s32.totalorder %s23, 1
      %p46 = por %p44, %p45
      %p48 = scmp.ne.s32.totalorder %s31, %s47
      %p49 = scmp.eq.s32.totalorder %s23, 0
      %p50 = por %p48, %p49
      %s52 = sadd.s32 %s51, 1
      %p55 = scmp.eq.s32.totalorder %s17, 1
      %p56 = scmp.ne.s32.totalorder %s51, %s53
      %p57 = scmp.eq.s32.totalorder %s17, 0
      %p58 = por %p56, %p57
      %p59 = scmp.ne.s32.totalorder %s51, %s53
      %p60 = scmp.eq.s32.totalorder %s22, 1
      %p61 = por %p59, %p60
      %p62 = scmp.ne.s32.totalorder %s53, %s54
      %p63 = scmp.eq.s32.totalorder %s22, 0
      %p64 = por %p62, %p63
      %p65 = scmp.ne.s32.totalorder %s53, %s54
      %p66 = scmp.eq.s32.totalorder %s23, 1
      %p67 = por %p65, %p66
      %p69 = scmp.ne.s32.totalorder %s54, %s68
      %p70 = scmp.eq.s32.totalorder %s23, 0
      %p71 = por %p69, %p70
      %s73 = sadd.s32 %s72, 1
      %p76 = scmp.eq.s32.totalorder %s17, 1
      %p77 = scmp.ne.s32.totalorder %s72, %s74
      %p78 = scmp.eq.s32.totalorder %s17, 0
      %p79 = por %p77, %p78
      %p80 = scmp.ne.s32.totalorder %s72, %s74
      %p81 = scmp.eq.s32.totalorder %s22, 1
      %p82 = por %p80, %p81
      %p83 = scmp.ne.s32.totalorder %s74, %s75
      %p84 = scmp.eq.s32.totalorder %s22, 0
      %p85 = por %p83, %p84
      %p86 = scmp.ne.s32.totalorder %s74, %s75
      %p87 = scmp.eq.s32.totalorder %s23, 1
      %p88 = por %p86, %p87
      %p90 = scmp.ne.s32.totalorder %s75, %s89
      %p91 = scmp.eq.s32.totalorder %s23, 0
      %p92 = por %p90, %p91
      %s94 = sadd.s32 %s93, 1
      %p97 = scmp.eq.s32.totalorder %s17, 1
      %p98 = scmp.ne.s32.totalorder %s93, %s95
      %p99 = scmp.eq.s32.totalorder %s17, 0
      %p100 = por %p98, %p99
      %p101 = scmp.ne.s32.totalorder %s93, %s95
      %p102 = scmp.eq.s32.totalorder %s22, 1
      %p103 = por %p101, %p102
      %p104 = scmp.ne.s32.totalorder %s95, %s96
      %p105 = scmp.eq.s32.totalorder %s22, 0
      %p106 = por %p104, %p105
      %p107 = scmp.ne.s32.totalorder %s95, %s96
      %p108 = scmp.eq.s32.totalorder %s23, 1
      %p109 = por %p107, %p108
      %p111 = scmp.ne.s32.totalorder %s96, %s110
      %p112 = scmp.eq.s32.totalorder %s23, 0
      %p113 = por %p111, %p112
      %s115 = sadd.s32 %s114, 1
      %p118 = scmp.eq.s32.totalorder %s17, 1
      %p119 = scmp.ne.s32.totalorder %s114, %s116
      %p120 = scmp.eq.s32.totalorder %s17, 0
      %p121 = por %p119, %p120
      %p122 = scmp.ne.s32.totalorder %s114, %s116
      %p123 = scmp.eq.s32.totalorder %s22, 1
      %p124 = por %p122, %p123
      %p125 = scmp.ne.s32.totalorder %s116, %s117
      %p126 = scmp.eq.s32.totalorder %s22, 0
      %p127 = por %p125, %p126
      %p128 = scmp.ne.s32.totalorder %s116, %s117
      %p129 = scmp.eq.s32.totalorder %s23, 1
      %p130 = por %p128, %p129
      %p132 = scmp.ne.s32.totalorder %s117, %s131
      %p133 = scmp.eq.s32.totalorder %s23, 0
      %p134 = por %p132, %p133
      %s136 = sadd.s32 %s135, 1
      %p139 = scmp.eq.s32.totalorder %s17, 1
      %p140 = scmp.ne.s32.totalorder %s135, %s137
      %p141 = scmp.eq.s32.totalorder %s17, 0
      %p142 = por %p140, %p141
      %p143 = scmp.ne.s32.totalorder %s135, %s137
      %p144 = scmp.eq.s32.totalorder %s22, 1
      %p145 = por %p143, %p144
      %p146 = scmp.ne.s32.totalorder %s137, %s138
      %p147 = scmp.eq.s32.totalorder %s22, 0
      %p148 = por %p146, %p147
      %p149 = scmp.ne.s32.totalorder %s137, %s138
      %p150 = scmp.eq.s32.totalorder %s23, 1
      %p151 = por %p149, %p150
      %p153 = scmp.ne.s32.totalorder %s138, %s152
      %p154 = scmp.eq.s32.totalorder %s23, 0
      %p155 = por %p153, %p154
      %s157 = sadd.s32 %s156, 1
      %p160 = scmp.eq.s32.totalorder %s17, 1
      %p161 = scmp.ne.s32.totalorder %s156, %s158
      %p162 = scmp.eq.s32.totalorder %s17, 0
      %p163 = por %p161, %p162
      %p164 = scmp.ne.s32.totalorder %s156, %s158
      %p165 = scmp.eq.s32.totalorder %s22, 1
      %p166 = por %p164, %p165
      %p167 = scmp.ne.s32.totalorder %s158, %s159
      %p168 = scmp.eq.s32.totalorder %s22, 0
      %p169 = por %p167, %p168
      %p170 = scmp.ne.s32.totalorder %s158, %s159
      %p171 = scmp.eq.s32.totalorder %s23, 1
      %p172 = por %p170, %p171
      %p174 = scmp.ne.s32.totalorder %s159, %s173
      %p175 = scmp.eq.s32.totalorder %s23, 0
      %p176 = por %p174, %p175
      %s177 = ssub.s32 %s17, %s24
      %p178 = scmp.eq.s32.totalorder %s177, 0
      %s180 = sadd.s32 %s179, 1
      %s181 = scalar_select %p178, %s179, %s180
      %p184 = pneg %p178
      %p185 = scmp.eq.s32.totalorder %s17, 1
      %p186 = por %p184, %p185
      %p187 = scmp.ne.s32.totalorder %s179, %s182
      %p188 = scmp.eq.s32.totalorder %s17, 0
      %p189 = por %p187, %p188
      %p190 = scmp.ne.s32.totalorder %s179, %s182
      %p191 = scmp.eq.s32.totalorder %s22, 1
      %p192 = por %p190, %p191
      %p193 = scmp.ne.s32.totalorder %s182, %s183
      %p194 = scmp.eq.s32.totalorder %s22, 0
      %p195 = por %p193, %p194
      %p196 = scmp.ne.s32.totalorder %s182, %s183
      %p197 = scmp.eq.s32.totalorder %s23, 1
      %p198 = por %p196, %p197
      %p200 = scmp.ne.s32.totalorder %s183, %s199
      %p201 = scmp.eq.s32.totalorder %s23, 0
      %p202 = por %p200, %p201
      %p203 = scmp.le.s32.totalorder 1, %s17
      %p204 = scmp.lt.s32.totalorder %s17, 3
      %p205 = pnand %p203, %p204
      %p206 = pneg %p205
      // Predicated region
      $region9: #{tpu_custom_call.1} parent=5 // pred_check
        _
      $region10: #{tpu_custom_call.1} parent=5 // pred_check_branch
        %208 = sbr.rel (%p205) target = $region12
      $region11: #{tpu_custom_call.1} parent=5 // pred_region
        %s209 = ssub.s32 %s17, 1
        // Predicated region
        $region13: #{tpu_custom_call.1} parent=11 // pred_check
          %p210 = pneg %p64
        $region14: #{tpu_custom_call.1} parent=11 // pred_check_branch
          %212 = sbr.rel (%p210) target = $region16
        $region15: #{tpu_custom_call.1} parent=11 // pred_region
          _
        $region16: #{tpu_custom_call.1} parent=11 // pred_fallthru
          _
        // Predicated region
        $region17: #{tpu_custom_call.1} parent=11 // pred_check
          %p213 = pneg %p85
        $region18: #{tpu_custom_call.1} parent=11 // pred_check_branch
          %215 = sbr.rel (%p213) target = $region20
        $region19: #{tpu_custom_call.1} parent=11 // pred_region
          %s217 = ssub.s32 128, 128
          %218 = vsyncadd [#allocation4], %s217
          %s220 = sshll.u32 [#allocation3], 4
          %s221 = int_to_ptr.vmem [resolvable:$true] %s220
          %223 = dma.hbm_to_vmem [thread:$0]  %s2, 128, %s221, [#allocation4]
        $region20: #{tpu_custom_call.1} parent=11 // pred_fallthru
          _
        // Predicated region
        $region21: #{tpu_custom_call.1} parent=11 // pred_check
          %p224 = pneg %p106
        $region22: #{tpu_custom_call.1} parent=11 // pred_check_branch
          %226 = sbr.rel (%p224) target = $region24
        $region23: #{tpu_custom_call.1} parent=11 // pred_region
          _
        $region24: #{tpu_custom_call.1} parent=11 // pred_fallthru
          _
        // Predicated region
        $region25: #{tpu_custom_call.1} parent=11 // pred_check
          %p227 = pneg %p127
        $region26: #{tpu_custom_call.1} parent=11 // pred_check_branch
          %229 = sbr.rel (%p227) target = $region28
        $region27: #{tpu_custom_call.1} parent=11 // pred_region
          _
        $region28: #{tpu_custom_call.1} parent=11 // pred_fallthru
          _
        // Predicated region
        $region29: #{tpu_custom_call.1} parent=11 // pred_check
          %p230 = pneg %p148
        $region30: #{tpu_custom_call.1} parent=11 // pred_check_branch
          %232 = sbr.rel (%p230) target = $region32
        $region31: #{tpu_custom_call.1} parent=11 // pred_region
          _
        $region32: #{tpu_custom_call.1} parent=11 // pred_fallthru
          _
        // Predicated region
        $region33: #{tpu_custom_call.1} parent=11 // pred_check
          %p233 = pneg %p169
        $region34: #{tpu_custom_call.1} parent=11 // pred_check_branch
          %235 = sbr.rel (%p233) target = $region36
        $region35: #{tpu_custom_call.1} parent=11 // pred_region
          _
        $region36: #{tpu_custom_call.1} parent=11 // pred_fallthru
          _
      $region12: #{tpu_custom_call.1} parent=5 // pred_fallthru
        _
      %p236 = scmp.lt.s32.totalorder %s17, 2
      // Predicated region
      $region37: #{tpu_custom_call.1} parent=5 // pred_check
        %p237 = pneg %p236
      $region38: #{tpu_custom_call.1} parent=5 // pred_check_branch
        %239 = sbr.rel (%p237) target = $region40
      $region39: #{tpu_custom_call.1} parent=5 // pred_region
        // Predicated region
        $region41: #{tpu_custom_call.1} parent=39 // pred_check
          %p240 = pneg %p37
        $region42: #{tpu_custom_call.1} parent=39 // pred_check_branch
          %242 = sbr.rel (%p240) target = $region44
        $region43: #{tpu_custom_call.1} parent=39 // pred_region
          %p243 = scmp.lt.s32.totalorder %s17, 1
          %s244 = scalar_select %p243, %s17, 1
          %s245 = smul.addr %s244, 32
          %s246 = smul.addr %s245, 8
          %s247 = scalar_lea.vmem %s0, %s246
        $region44: #{tpu_custom_call.1} parent=39 // pred_fallthru
          _
      $region40: #{tpu_custom_call.1} parent=5 // pred_fallthru
        _
      %p248 = scmp.le.s32.totalorder 1, %s17
      %p249 = scmp.lt.s32.totalorder %s17, 3
      %p250 = pnand %p248, %p249
      %p251 = pneg %p250
      // Predicated region
      $region45: #{tpu_custom_call.1} parent=5 // pred_check
        _
      $region46: #{tpu_custom_call.1} parent=5 // pred_check_branch
        %253 = sbr.rel (%p250) target = $region48
      $region47: #{tpu_custom_call.1} parent=5 // pred_region
        %s254 = ssub.s32 %s17, 1
        // Predicated region
        $region49: #{tpu_custom_call.1} parent=47 // pred_check
          %p255 = pneg %p85
        $region50: #{tpu_custom_call.1} parent=47 // pred_check_branch
          %257 = sbr.rel (%p255) target = $region52
        $region51: #{tpu_custom_call.1} parent=47 // pred_region
          %258 = dma.done [#allocation4], 128
        $region52: #{tpu_custom_call.1} parent=47 // pred_fallthru
          _
        %p259 = scmp.lt.s32.totalorder %s22, 1
        %s260 = scalar_select %p259, %s22, 1
        %s261 = smul.addr %s260, 32
        %s262 = smul.addr %s261, 8
        %s263 = scalar_lea.vmem %s0, %s262
        %p264 = pneg %p43
        %p265 = pneg %p40
        %p266 = pneg %p64
        %p267 = pneg %p61
        %p268 = pneg %p85
        %p269 = pneg %p82
        %p270 = pneg %p106
        %p271 = pneg %p103
        %p272 = pneg %p127
        %p273 = pneg %p124
        %p274 = pneg %p148
        %p275 = pneg %p145
        %p276 = pneg %p169
        %p277 = pneg %p166
        %p278 = pneg %p195
        %p279 = pneg %p192
        %s280 = sand.u32 %s182, 1
        %s281 = scalar_lea.sflag [#allocation5], %s280
        %s282 = sand.u32 %s182, 1
        %s283 = smul.addr %s282, 256
        %s284 = scalar_lea.vmem [#allocation6], %s283
        %p285 = scmp.lt.s32.totalorder %s22, 1
        %s286 = scalar_select %p285, %s22, 1
        %s287 = smul.addr %s286, 32
        %s288 = smul.addr %s287, 8
        %s289 = scalar_lea.vmem %s0, %s288
        %290 = vst [vmem:[#allocation2] sm:$0xff] 0.0
        %291 = vst [vmem:[#allocation2 + $0x8] sm:$0xff] 0.0
        %292 = vst [vmem:[#allocation2 + $0x10] sm:$0xff] 0.0
        %293 = vst [vmem:[#allocation2 + $0x58] sm:$0xff] 0.0
        %294 = vst [vmem:[#allocation2 + $0x60] sm:$0xff] 0.0
        %295 = vst [vmem:[#allocation2 + $0x68] sm:$0xff] 0.0
        %v296 = vld [vmem:[%s1] sm:$0xff]
        %v297 = vld [vmem:[#allocation3] sm:$0xff]
        %v298 = vld [vmem:[%s289] sm:$0xff]
        %v299 = vld [vmem:[%s289 + $0x8] sm:$0xff]
        %v300 = vld [vmem:[%s289 + $0x10] sm:$0xff]
        %v301 = vld [vmem:[%s289 + $0x18] sm:$0xff]
        %v302 = vld [vmem:[%s289 + $0x20] sm:$0xff]
        %v303 = vld [vmem:[%s289 + $0x28] sm:$0xff]
        %v304 = vld [vmem:[%s289 + $0x30] sm:$0xff]
        %v305 = vld [vmem:[%s289 + $0x38] sm:$0xff]
        %v306 = vld [vmem:[%s289 + $0x40] sm:$0xff]
        %v307 = vld [vmem:[%s289 + $0x48] sm:$0xff]
        %v308 = vld [vmem:[%s289 + $0x50] sm:$0xff]
        %v309 = vld [vmem:[%s289 + $0x58] sm:$0xff]
        %v310 = vld [vmem:[%s289 + $0x60] sm:$0xff]
        %v311 = vld [vmem:[%s289 + $0x68] sm:$0xff]
        %v312 = vld [vmem:[%s289 + $0x70] sm:$0xff]
        %v313 = vld [vmem:[%s289 + $0x78] sm:$0xff]
        %v314 = vld [vmem:[%s289 + $0x80] sm:$0xff]
        %v315 = vld [vmem:[%s289 + $0x88] sm:$0xff]
        %v316 = vld [vmem:[%s289 + $0x90] sm:$0xff]
        %v317 = vld [vmem:[%s289 + $0x98] sm:$0xff]
        %v318 = vld [vmem:[%s289 + $0xa0] sm:$0xff]
        %v319 = vld [vmem:[%s289 + $0xa8] sm:$0xff]
        %v320 = vld [vmem:[%s289 + $0xb0] sm:$0xff]
        %v321 = vld [vmem:[%s289 + $0xb8] sm:$0xff]
        %v322 = vld [vmem:[%s289 + $0xc0] sm:$0xff]
        %v323 = vld [vmem:[%s289 + $0xc8] sm:$0xff]
        %v324 = vld [vmem:[%s289 + $0xd0] sm:$0xff]
        %v325 = vld [vmem:[%s289 + $0xd8] sm:$0xff]
        %v326 = vld [vmem:[%s289 + $0xe0] sm:$0xff]
        %v327 = vld [vmem:[%s289 + $0xe8] sm:$0xff]
        %v328 = vld [vmem:[%s289 + $0xf0] sm:$0xff]
        %v329 = vld [vmem:[%s289 + $0xf8] sm:$0xff]
        %vm330 = vcmask 261120
        %v332 = vsel %vm330, %v297, 0
        %334 = vmatprep.subr.mxu0 0.0
        %335 = vmatpush1.msra.mxu0 0.0
        %336 = vmatprep.subr.mxu0 0.0
        %337 = vmatpush1.msra.mxu0 0.0
        %338 = vmatprep.subr.mxu0 0.0
        %339 = vmatpush1.msra.mxu0 0.0
        %340 = vmatprep.subr.mxu0 0.0
        %341 = vmatpush1.msra.mxu0 0.0
        %342 = vmatprep.subr.mxu0 0.0
        %343 = vmatpush1.msra.mxu0 0.0
        %344 = vmatprep.subr.mxu0 0.0
        %345 = vmatpush1.msra.mxu0 0.0
        %346 = vmatprep.subr.mxu0 0.0
        %347 = vmatpush1.msra.mxu0 0.0
        %348 = vmatprep.subr.mxu0 0.0
        %349 = vmatpush1.msra.mxu0 0.0
        %350 = vmatprep.subr.mxu0 0.0
        %351 = vmatpush1.msra.mxu0 0.0
        %352 = vmatprep.subr.mxu0 0.0
        %353 = vmatpush1.msra.mxu0 0.0
        %354 = vmatprep.subr.mxu0 0.0
        %355 = vmatpush1.msra.mxu0 0.0
        %356 = vmatprep.subr.mxu0 0.0
        %357 = vmatpush1.msra.mxu0 0.0
        %358 = vmatprep.subr.mxu0 %v323
        %359 = vmatpush1.msra.mxu0 %v322
        %360 = vmatprep.subr.mxu0 %v315
        %361 = vmatpush1.msra.mxu0 %v314
        %362 = vmatprep.subr.mxu0 %v307
        %363 = vmatpush1.msra.mxu0 %v306
        %364 = vmatprep.subr.mxu0 %v299
        %365 = vmatpush1.msra.mxu0 %v298
        %366 = vmatprep.subr.mxu0 0.0
        %367 = vmatpush2.msra.mxu0 0.0
        %368 = vmatprep.subr.mxu0 0.0
        %369 = vmatpush2.msra.mxu0 0.0
        %370 = vmatprep.subr.mxu0 0.0
        %371 = vmatpush2.msra.mxu0 0.0
        %372 = vmatprep.subr.mxu0 0.0
        %373 = vmatpush2.msra.mxu0 0.0
        %374 = vmatprep.subr.mxu0 0.0
        %375 = vmatpush2.msra.mxu0 0.0
        %376 = vmatprep.subr.mxu0 0.0
        %377 = vmatpush2.msra.mxu0 0.0
        %378 = vmatprep.subr.mxu0 0.0
        %379 = vmatpush2.msra.mxu0 0.0
        %380 = vmatprep.subr.mxu0 0.0
        %381 = vmatpush2.msra.mxu0 0.0
        %382 = vmatprep.subr.mxu0 0.0
        %383 = vmatpush2.msra.mxu0 0.0
        %384 = vmatprep.subr.mxu0 0.0
        %385 = vmatpush2.msra.mxu0 0.0
        %386 = vmatprep.subr.mxu0 0.0
        %387 = vmatpush2.msra.mxu0 0.0
        %388 = vmatprep.subr.mxu0 0.0
        %389 = vmatpush2.msra.mxu0 0.0
        %390 = vmatprep.subr.mxu0 0.0
        %391 = vmatpush2.msra.mxu0 0.0
        %392 = vmatprep.subr.mxu0 0.0
        %393 = vmatpush2.msra.mxu0 0.0
        %394 = vmatprep.subr.mxu0 0.0
        %395 = vmatpush2.msra.mxu0 0.0
        %396 = vmatprep.subr.mxu0 0.0
        %397 = vmatpush2.msra.mxu0 0.0
        %398 = vmatprep.mubr.f32.mxu0 0.0
        %399 = vmatmul.mubr.f32.gmra.mxu0 %v332
        %v400 = vpop.f32.mrf.mxu0
        %v401 = vadd.f32 0.0, %v400
        %v402 = vpop.f32.mrf.mxu0
        %v403 = vadd.f32 0.0, %v402
        %404 = vdwg.mxu0
        %405 = vmatprep.subr.mxu0 0.0
        %406 = vmatpush1.msra.mxu0 0.0
        %407 = vmatprep.subr.mxu0 0.0
        %408 = vmatpush1.msra.mxu0 0.0
        %409 = vmatprep.subr.mxu0 0.0
        %410 = vmatpush1.msra.mxu0 0.0
        %411 = vmatprep.subr.mxu0 0.0
        %412 = vmatpush1.msra.mxu0 0.0
        %413 = vmatprep.subr.mxu0 0.0
        %414 = vmatpush1.msra.mxu0 0.0
        %415 = vmatprep.subr.mxu0 0.0
        %416 = vmatpush1.msra.mxu0 0.0
        %417 = vmatprep.subr.mxu0 0.0
        %418 = vmatpush1.msra.mxu0 0.0
        %419 = vmatprep.subr.mxu0 0.0
        %420 = vmatpush1.msra.mxu0 0.0
        %421 = vmatprep.subr.mxu0 0.0
        %422 = vmatpush1.msra.mxu0 0.0
        %423 = vmatprep.subr.mxu0 0.0
        %424 = vmatpush1.msra.mxu0 0.0
        %425 = vmatprep.subr.mxu0 0.0
        %426 = vmatpush1.msra.mxu0 0.0
        %427 = vmatprep.subr.mxu0 0.0
        %428 = vmatpush1.msra.mxu0 0.0
        %429 = vmatprep.subr.mxu0 %v325
        %430 = vmatpush1.msra.mxu0 %v324
        %431 = vmatprep.subr.mxu0 %v317
        %432 = vmatpush1.msra.mxu0 %v316
        %433 = vmatprep.subr.mxu0 %v309
        %434 = vmatpush1.msra.mxu0 %v308
        %435 = vmatprep.subr.mxu0 %v301
        %436 = vmatpush1.msra.mxu0 %v300
        %437 = vmatprep.subr.mxu0 0.0
        %438 = vmatpush2.msra.mxu0 0.0
        %439 = vmatprep.subr.mxu0 0.0
        %440 = vmatpush2.msra.mxu0 0.0
        %441 = vmatprep.subr.mxu0 0.0
        %442 = vmatpush2.msra.mxu0 0.0
        %443 = vmatprep.subr.mxu0 0.0
        %444 = vmatpush2.msra.mxu0 0.0
        %445 = vmatprep.subr.mxu0 0.0
        %446 = vmatpush2.msra.mxu0 0.0
        %447 = vmatprep.subr.mxu0 0.0
        %448 = vmatpush2.msra.mxu0 0.0
        %449 = vmatprep.subr.mxu0 0.0
        %450 = vmatpush2.msra.mxu0 0.0
        %451 = vmatprep.subr.mxu0 0.0
        %452 = vmatpush2.msra.mxu0 0.0
        %453 = vmatprep.subr.mxu0 0.0
        %454 = vmatpush2.msra.mxu0 0.0
        %455 = vmatprep.subr.mxu0 0.0
        %456 = vmatpush2.msra.mxu0 0.0
        %457 = vmatprep.subr.mxu0 0.0
        %458 = vmatpush2.msra.mxu0 0.0
        %459 = vmatprep.subr.mxu0 0.0
        %460 = vmatpush2.msra.mxu0 0.0
        %461 = vmatprep.subr.mxu0 0.0
        %462 = vmatpush2.msra.mxu0 0.0
        %463 = vmatprep.subr.mxu0 0.0
        %464 = vmatpush2.msra.mxu0 0.0
        %465 = vmatprep.subr.mxu0 0.0
        %466 = vmatpush2.msra.mxu0 0.0
        %467 = vmatprep.subr.mxu0 0.0
        %468 = vmatpush2.msra.mxu0 0.0
        %469 = vmatprep.mubr.f32.mxu0 0.0
        %470 = vmatmul.mubr.f32.gmra.mxu0 %v332
        %v471 = vpop.f32.mrf.mxu0
        %v472 = vadd.f32 0.0, %v471
        %v473 = vpop.f32.mrf.mxu0
        %v474 = vadd.f32 0.0, %v473
        %475 = vdwg.mxu0
        %476 = vmatprep.subr.mxu0 0.0
        %477 = vmatpush1.msra.mxu0 0.0
        %478 = vmatprep.subr.mxu0 0.0
        %479 = vmatpush1.msra.mxu0 0.0
        %480 = vmatprep.subr.mxu0 0.0
        %481 = vmatpush1.msra.mxu0 0.0
        %482 = vmatprep.subr.mxu0 0.0
        %483 = vmatpush1.msra.mxu0 0.0
        %484 = vmatprep.subr.mxu0 0.0
        %485 = vmatpush1.msra.mxu0 0.0
        %486 = vmatprep.subr.mxu0 0.0
        %487 = vmatpush1.msra.mxu0 0.0
        %488 = vmatprep.subr.mxu0 0.0
        %489 = vmatpush1.msra.mxu0 0.0
        %490 = vmatprep.subr.mxu0 0.0
        %491 = vmatpush1.msra.mxu0 0.0
        %492 = vmatprep.subr.mxu0 0.0
        %493 = vmatpush1.msra.mxu0 0.0
        %494 = vmatprep.subr.mxu0 0.0
        %495 = vmatpush1.msra.mxu0 0.0
        %496 = vmatprep.subr.mxu0 0.0
        %497 = vmatpush1.msra.mxu0 0.0
        %498 = vmatprep.subr.mxu0 0.0
        %499 = vmatpush1.msra.mxu0 0.0
        %500 = vmatprep.subr.mxu0 %v327
        %501 = vmatpush1.msra.mxu0 %v326
        %502 = vmatprep.subr.mxu0 %v319
        %503 = vmatpush1.msra.mxu0 %v318
        %504 = vmatprep.subr.mxu0 %v311
        %505 = vmatpush1.msra.mxu0 %v310
        %506 = vmatprep.subr.mxu0 %v303
        %507 = vmatpush1.msra.mxu0 %v302
        %508 = vmatprep.subr.mxu0 0.0
        %509 = vmatpush2.msra.mxu0 0.0
        %510 = vmatprep.subr.mxu0 0.0
        %511 = vmatpush2.msra.mxu0 0.0
        %512 = vmatprep.subr.mxu0 0.0
        %513 = vmatpush2.msra.mxu0 0.0
        %514 = vmatprep.subr.mxu0 0.0
        %515 = vmatpush2.msra.mxu0 0.0
        %516 = vmatprep.subr.mxu0 0.0
        %517 = vmatpush2.msra.mxu0 0.0
        %518 = vmatprep.subr.mxu0 0.0
        %519 = vmatpush2.msra.mxu0 0.0
        %520 = vmatprep.subr.mxu0 0.0
        %521 = vmatpush2.msra.mxu0 0.0
        %522 = vmatprep.subr.mxu0 0.0
        %523 = vmatpush2.msra.mxu0 0.0
        %524 = vmatprep.subr.mxu0 0.0
        %525 = vmatpush2.msra.mxu0 0.0
        %526 = vmatprep.subr.mxu0 0.0
        %527 = vmatpush2.msra.mxu0 0.0
        %528 = vmatprep.subr.mxu0 0.0
        %529 = vmatpush2.msra.mxu0 0.0
        %530 = vmatprep.subr.mxu0 0.0
        %531 = vmatpush2.msra.mxu0 0.0
        %532 = vmatprep.subr.mxu0 0.0
        %533 = vmatpush2.msra.mxu0 0.0
        %534 = vmatprep.subr.mxu0 0.0
        %535 = vmatpush2.msra.mxu0 0.0
        %536 = vmatprep.subr.mxu0 0.0
        %537 = vmatpush2.msra.mxu0 0.0
        %538 = vmatprep.subr.mxu0 0.0
        %539 = vmatpush2.msra.mxu0 0.0
        %540 = vmatprep.mubr.f32.mxu0 0.0
        %541 = vmatmul.mubr.f32.gmra.mxu0 %v332
        %v542 = vpop.f32.mrf.mxu0
        %v543 = vadd.f32 0.0, %v542
        %v544 = vpop.f32.mrf.mxu0
        %v545 = vadd.f32 0.0, %v544
        %546 = vdwg.mxu0
        %547 = vmatprep.subr.mxu0 0.0
        %548 = vmatpush1.msra.mxu0 0.0
        %549 = vmatprep.subr.mxu0 0.0
        %550 = vmatpush1.msra.mxu0 0.0
        %551 = vmatprep.subr.mxu0 0.0
        %552 = vmatpush1.msra.mxu0 0.0
        %553 = vmatprep.subr.mxu0 0.0
        %554 = vmatpush1.msra.mxu0 0.0
        %555 = vmatprep.subr.mxu0 0.0
        %556 = vmatpush1.msra.mxu0 0.0
        %557 = vmatprep.subr.mxu0 0.0
        %558 = vmatpush1.msra.mxu0 0.0
        %559 = vmatprep.subr.mxu0 0.0
        %560 = vmatpush1.msra.mxu0 0.0
        %561 = vmatprep.subr.mxu0 0.0
        %562 = vmatpush1.msra.mxu0 0.0
        %563 = vmatprep.subr.mxu0 0.0
        %564 = vmatpush1.msra.mxu0 0.0
        %565 = vmatprep.subr.mxu0 0.0
        %566 = vmatpush1.msra.mxu0 0.0
        %567 = vmatprep.subr.mxu0 0.0
        %568 = vmatpush1.msra.mxu0 0.0
        %569 = vmatprep.subr.mxu0 0.0
        %570 = vmatpush1.msra.mxu0 0.0
        %571 = vmatprep.subr.mxu0 %v329
        %572 = vmatpush1.msra.mxu0 %v328
        %573 = vmatprep.subr.mxu0 %v321
        %574 = vmatpush1.msra.mxu0 %v320
        %575 = vmatprep.subr.mxu0 %v313
        %576 = vmatpush1.msra.mxu0 %v312
        %577 = vmatprep.subr.mxu0 %v305
        %578 = vmatpush1.msra.mxu0 %v304
        %579 = vmatprep.subr.mxu0 0.0
        %580 = vmatpush2.msra.mxu0 0.0
        %581 = vmatprep.subr.mxu0 0.0
        %582 = vmatpush2.msra.mxu0 0.0
        %583 = vmatprep.subr.mxu0 0.0
        %584 = vmatpush2.msra.mxu0 0.0
        %585 = vmatprep.subr.mxu0 0.0
        %586 = vmatpush2.msra.mxu0 0.0
        %587 = vmatprep.subr.mxu0 0.0
        %588 = vmatpush2.msra.mxu0 0.0
        %589 = vmatprep.subr.mxu0 0.0
        %590 = vmatpush2.msra.mxu0 0.0
        %591 = vmatprep.subr.mxu0 0.0
        %592 = vmatpush2.msra.mxu0 0.0
        %593 = vmatprep.subr.mxu0 0.0
        %594 = vmatpush2.msra.mxu0 0.0
        %595 = vmatprep.subr.mxu0 0.0
        %596 = vmatpush2.msra.mxu0 0.0
        %597 = vmatprep.subr.mxu0 0.0
        %598 = vmatpush2.msra.mxu0 0.0
        %599 = vmatprep.subr.mxu0 0.0
        %600 = vmatpush2.msra.mxu0 0.0
        %601 = vmatprep.subr.mxu0 0.0
        %602 = vmatpush2.msra.mxu0 0.0
        %603 = vmatprep.subr.mxu0 0.0
        %604 = vmatpush2.msra.mxu0 0.0
        %605 = vmatprep.subr.mxu0 0.0
        %606 = vmatpush2.msra.mxu0 0.0
        %607 = vmatprep.subr.mxu0 0.0
        %608 = vmatpush2.msra.mxu0 0.0
        %609 = vmatprep.subr.mxu0 0.0
        %610 = vmatpush2.msra.mxu0 0.0
        %611 = vmatprep.mubr.f32.mxu0 0.0
        %612 = vmatmul.mubr.f32.gmra.mxu0 %v332
        %v613 = vpop.f32.mrf.mxu0
        %v614 = vadd.f32 0.0, %v613
        %v615 = vpop.f32.mrf.mxu0
        %v616 = vadd.f32 0.0, %v615
        %617 = vdwg.mxu0
        %v618 = vld [vmem:[%s6] sm:$0xff]
        %v619 = vld [vmem:[%s6 + $0x8] sm:$0xff]
        %v620 = vld [vmem:[%s6 + $0x10] sm:$0xff]
        %v621 = vld [vmem:[%s6 + $0x18] sm:$0xff]
        %622 = vst [vmem:[#allocation2 + $0x18] sm:$0xff] %v401
        %623 = vst [vmem:[#allocation2 + $0x20] sm:$0xff] %v403
        %624 = vst [vmem:[#allocation2 + $0x28] sm:$0xff] %v472
        %625 = vst [vmem:[#allocation2 + $0x30] sm:$0xff] %v474
        %626 = vst [vmem:[#allocation2 + $0x38] sm:$0xff] %v543
        %627 = vst [vmem:[#allocation2 + $0x40] sm:$0xff] %v545
        %628 = vst [vmem:[#allocation2 + $0x48] sm:$0xff] %v614
        %629 = vst [vmem:[#allocation2 + $0x50] sm:$0xff] %v616
        %v630 = vld [vmem:[#allocation2 + $0x10] sm:$0xff]
        %v631 = vld [vmem:[#allocation2 + $0x18] sm:$0xff]
        %v632 = vld [vmem:[#allocation2 + $0x20] sm:$0xff]
        %v633 = vld [vmem:[#allocation2 + $0x28] sm:$0xff]
        %v634 = vld [vmem:[#allocation2 + $0x30] sm:$0xff]
        %v635 = vld [vmem:[#allocation2 + $0x38] sm:$0xff]
        %v636 = vld [vmem:[#allocation2 + $0x40] sm:$0xff]
        %v637 = vld [vmem:[#allocation2 + $0x48] sm:$0xff]
        %v638 = vld [vmem:[#allocation2 + $0x50] sm:$0xff]
        %s639 = scalar_lea.vmem %s3, 8
        %v640 = vld [vmem:[%s639] sm:$0xff]
        %642 = vset.pattern.permute.xlu0 0
        %643 = vperm.xlu0 %642, %v640
        %v644 = vpop.permute.xlu0 %643
        %v646 = vmul.f32 %v630, %v644
        %v647 = vmul.f32 %v631, %v644
        %v648 = vmul.f32 %v632, %v644
        %v649 = vmul.f32 %v633, %v644
        %v650 = vmul.f32 %v634, %v644
        %v651 = vmul.f32 %v635, %v644
        %v652 = vmul.f32 %v636, %v644
        %v653 = vmul.f32 %v637, %v644
        %v654 = vmul.f32 %v638, %v644
        %s655 = scalar_lea.vmem %s3, 32
        %v656 = vld [vmem:[%s655] sm:$0xff]
        %658 = vset.pattern.permute.xlu0 0
        %659 = vperm.xlu0 %658, %v656
        %v660 = vpop.permute.xlu0 %659
        %v662 = vmul.f32 %v631, %v660
        %v663 = vmul.f32 %v632, %v660
        %v664 = vmul.f32 %v633, %v660
        %v665 = vmul.f32 %v634, %v660
        %v666 = vmul.f32 %v635, %v660
        %v667 = vmul.f32 %v636, %v660
        %v668 = vmul.f32 %v637, %v660
        %v669 = vmul.f32 %v638, %v660
        %678 = vrot.lane.b32.xlu0 %v662, 64
        %v679 = vpop.permute.xlu0 %678
        %680 = vrot.lane.b32.xlu0 %v663, 64
        %v681 = vpop.permute.xlu0 %680
        %682 = vrot.lane.b32.xlu0 %v664, 64
        %v683 = vpop.permute.xlu0 %682
        %684 = vrot.lane.b32.xlu0 %v665, 64
        %v685 = vpop.permute.xlu0 %684
        %686 = vrot.lane.b32.xlu0 %v666, 64
        %v687 = vpop.permute.xlu0 %686
        %688 = vrot.lane.b32.xlu0 %v667, 64
        %v689 = vpop.permute.xlu0 %688
        %690 = vrot.lane.b32.xlu0 %v668, 64
        %v691 = vpop.permute.xlu0 %690
        %692 = vrot.lane.b32.xlu0 %v669, 64
        %v693 = vpop.permute.xlu0 %692
        %vm694 = vcmask 523264
        %v695 = vsel %vm694, %v679, %v681
        %v696 = vsel %vm694, %v681, %v683
        %v697 = vsel %vm694, %v683, %v685
        %v698 = vsel %vm694, %v685, %v687
        %v699 = vsel %vm694, %v687, %v689
        %v700 = vsel %vm694, %v689, %v691
        %v701 = vsel %vm694, %v691, %v693
        %v711 = vadd.f32 %v646, %v679
        %v712 = vadd.f32 %v647, %v695
        %v713 = vadd.f32 %v648, %v696
        %v714 = vadd.f32 %v649, %v697
        %v715 = vadd.f32 %v650, %v698
        %v716 = vadd.f32 %v651, %v699
        %v717 = vadd.f32 %v652, %v700
        %v718 = vadd.f32 %v653, %v701
        %v719 = vadd.f32 %v654, %v693
        %v720 = vld [vmem:[#allocation2 + $0x18] sm:$0xff]
        %v721 = vld [vmem:[#allocation2 + $0x20] sm:$0xff]
        %v722 = vld [vmem:[#allocation2 + $0x28] sm:$0xff]
        %v723 = vld [vmem:[#allocation2 + $0x30] sm:$0xff]
        %v724 = vld [vmem:[#allocation2 + $0x38] sm:$0xff]
        %v725 = vld [vmem:[#allocation2 + $0x40] sm:$0xff]
        %v726 = vld [vmem:[#allocation2 + $0x48] sm:$0xff]
        %v727 = vld [vmem:[#allocation2 + $0x50] sm:$0xff]
        %v728 = vld [vmem:[#allocation2 + $0x58] sm:$0xff]
        %s729 = scalar_lea.vmem %s3, 56
        %v730 = vld [vmem:[%s729] sm:$0xff]
        %732 = vset.pattern.permute.xlu0 0
        %733 = vperm.xlu0 %732, %v730
        %v734 = vpop.permute.xlu0 %733
        %v736 = vmul.f32 %v720, %v734
        %v737 = vmul.f32 %v721, %v734
        %v738 = vmul.f32 %v722, %v734
        %v739 = vmul.f32 %v723, %v734
        %v740 = vmul.f32 %v724, %v734
        %v741 = vmul.f32 %v725, %v734
        %v742 = vmul.f32 %v726, %v734
        %v743 = vmul.f32 %v727, %v734
        %v744 = vmul.f32 %v728, %v734
        %v745 = vadd.f32 %v711, %v736
        %v746 = vadd.f32 %v712, %v737
        %v747 = vadd.f32 %v713, %v738
        %v748 = vadd.f32 %v714, %v739
        %v749 = vadd.f32 %v715, %v740
        %v750 = vadd.f32 %v716, %v741
        %v751 = vadd.f32 %v717, %v742
        %v752 = vadd.f32 %v718, %v743
        %v753 = vadd.f32 %v719, %v744
        %v754 = vld [vmem:[%s3] sm:$0xff]
        %756 = vset.pattern.permute.xlu0 0
        %757 = vperm.xlu0 %756, %v754
        %v758 = vpop.permute.xlu0 %757
        %v760 = vmul.f32 %v630, %v758
        %v761 = vmul.f32 %v631, %v758
        %v762 = vmul.f32 %v632, %v758
        %v763 = vmul.f32 %v633, %v758
        %v764 = vmul.f32 %v634, %v758
        %v765 = vmul.f32 %v635, %v758
        %v766 = vmul.f32 %v636, %v758
        %v767 = vmul.f32 %v637, %v758
        %v768 = vmul.f32 %v638, %v758
        %s769 = scalar_lea.vmem %s3, 24
        %v770 = vld [vmem:[%s769] sm:$0xff]
        %772 = vset.pattern.permute.xlu0 0
        %773 = vperm.xlu0 %772, %v770
        %v774 = vpop.permute.xlu0 %773
        %v776 = vmul.f32 %v630, %v774
        %v777 = vmul.f32 %v631, %v774
        %v778 = vmul.f32 %v632, %v774
        %v779 = vmul.f32 %v633, %v774
        %v780 = vmul.f32 %v634, %v774
        %v781 = vmul.f32 %v635, %v774
        %v782 = vmul.f32 %v636, %v774
        %v783 = vmul.f32 %v637, %v774
        %v784 = vmul.f32 %v638, %v774
        %794 = vrot.lane.b32.xlu0 %v776, 64
        %v795 = vpop.permute.xlu0 %794
        %796 = vrot.lane.b32.xlu0 %v777, 64
        %v797 = vpop.permute.xlu0 %796
        %798 = vrot.lane.b32.xlu0 %v778, 64
        %v799 = vpop.permute.xlu0 %798
        %800 = vrot.lane.b32.xlu0 %v779, 64
        %v801 = vpop.permute.xlu0 %800
        %802 = vrot.lane.b32.xlu0 %v780, 64
        %v803 = vpop.permute.xlu0 %802
        %804 = vrot.lane.b32.xlu0 %v781, 64
        %v805 = vpop.permute.xlu0 %804
        %806 = vrot.lane.b32.xlu0 %v782, 64
        %v807 = vpop.permute.xlu0 %806
        %808 = vrot.lane.b32.xlu0 %v783, 64
        %v809 = vpop.permute.xlu0 %808
        %810 = vrot.lane.b32.xlu0 %v784, 64
        %v811 = vpop.permute.xlu0 %810
        %v812 = vsel %vm694, %v795, %v797
        %v813 = vsel %vm694, %v797, %v799
        %v814 = vsel %vm694, %v799, %v801
        %v815 = vsel %vm694, %v801, %v803
        %v816 = vsel %vm694, %v803, %v805
        %v817 = vsel %vm694, %v805, %v807
        %v818 = vsel %vm694, %v807, %v809
        %v819 = vsel %vm694, %v809, %v811
        %v829 = vadd.f32 %v760, %v812
        %v830 = vadd.f32 %v761, %v813
        %v831 = vadd.f32 %v762, %v814
        %v832 = vadd.f32 %v763, %v815
        %v833 = vadd.f32 %v764, %v816
        %v834 = vadd.f32 %v765, %v817
        %v835 = vadd.f32 %v766, %v818
        %v836 = vadd.f32 %v767, %v819
        %v837 = vadd.f32 %v768, %v811
        %s838 = scalar_lea.vmem %s3, 48
        %v839 = vld [vmem:[%s838] sm:$0xff]
        %841 = vset.pattern.permute.xlu0 0
        %842 = vperm.xlu0 %841, %v839
        %v843 = vpop.permute.xlu0 %842
        %v845 = vmul.f32 %v720, %v843
        %v846 = vmul.f32 %v721, %v843
        %v847 = vmul.f32 %v722, %v843
        %v848 = vmul.f32 %v723, %v843
        %v849 = vmul.f32 %v724, %v843
        %v850 = vmul.f32 %v725, %v843
        %v851 = vmul.f32 %v726, %v843
        %v852 = vmul.f32 %v727, %v843
        %v853 = vmul.f32 %v728, %v843
        %v854 = vadd.f32 %v829, %v845
        %v855 = vadd.f32 %v830, %v846
        %v856 = vadd.f32 %v831, %v847
        %v857 = vadd.f32 %v832, %v848
        %v858 = vadd.f32 %v833, %v849
        %v859 = vadd.f32 %v834, %v850
        %v860 = vadd.f32 %v835, %v851
        %v861 = vadd.f32 %v836, %v852
        %v862 = vadd.f32 %v837, %v853
        %s863 = scalar_lea.vmem %s3, 16
        %v864 = vld [vmem:[%s863] sm:$0xff]
        %866 = vset.pattern.permute.xlu0 0
        %867 = vperm.xlu0 %866, %v864
        %v868 = vpop.permute.xlu0 %867
        %v870 = vmul.f32 %v630, %v868
        %v871 = vmul.f32 %v631, %v868
        %v872 = vmul.f32 %v632, %v868
        %v873 = vmul.f32 %v633, %v868
        %v874 = vmul.f32 %v634, %v868
        %v875 = vmul.f32 %v635, %v868
        %v876 = vmul.f32 %v636, %v868
        %v877 = vmul.f32 %v637, %v868
        %v878 = vmul.f32 %v638, %v868
        %s879 = scalar_lea.vmem %s3, 40
        %v880 = vld [vmem:[%s879] sm:$0xff]
        %882 = vset.pattern.permute.xlu0 0
        %883 = vperm.xlu0 %882, %v880
        %v884 = vpop.permute.xlu0 %883
        %v886 = vmul.f32 %v720, %v884
        %v887 = vmul.f32 %v721, %v884
        %v888 = vmul.f32 %v722, %v884
        %v889 = vmul.f32 %v723, %v884
        %v890 = vmul.f32 %v724, %v884
        %v891 = vmul.f32 %v725, %v884
        %v892 = vmul.f32 %v726, %v884
        %v893 = vmul.f32 %v727, %v884
        %v894 = vmul.f32 %v728, %v884
        %904 = vrot.lane.b32.xlu0 %v886, 64
        %v905 = vpop.permute.xlu0 %904
        %906 = vrot.lane.b32.xlu0 %v887, 64
        %v907 = vpop.permute.xlu0 %906
        %908 = vrot.lane.b32.xlu0 %v888, 64
        %v909 = vpop.permute.xlu0 %908
        %910 = vrot.lane.b32.xlu0 %v889, 64
        %v911 = vpop.permute.xlu0 %910
        %912 = vrot.lane.b32.xlu0 %v890, 64
        %v913 = vpop.permute.xlu0 %912
        %914 = vrot.lane.b32.xlu0 %v891, 64
        %v915 = vpop.permute.xlu0 %914
        %916 = vrot.lane.b32.xlu0 %v892, 64
        %v917 = vpop.permute.xlu0 %916
        %918 = vrot.lane.b32.xlu0 %v893, 64
        %v919 = vpop.permute.xlu0 %918
        %920 = vrot.lane.b32.xlu0 %v894, 64
        %v921 = vpop.permute.xlu0 %920
        %v922 = vsel %vm694, %v905, %v907
        %v923 = vsel %vm694, %v907, %v909
        %v924 = vsel %vm694, %v909, %v911
        %v925 = vsel %vm694, %v911, %v913
        %v926 = vsel %vm694, %v913, %v915
        %v927 = vsel %vm694, %v915, %v917
        %v928 = vsel %vm694, %v917, %v919
        %v929 = vsel %vm694, %v919, %v921
        %v939 = vadd.f32 %v870, %v905
        %v940 = vadd.f32 %v871, %v922
        %v941 = vadd.f32 %v872, %v923
        %v942 = vadd.f32 %v873, %v924
        %v943 = vadd.f32 %v874, %v925
        %v944 = vadd.f32 %v875, %v926
        %v945 = vadd.f32 %v876, %v927
        %v946 = vadd.f32 %v877, %v928
        %v947 = vadd.f32 %v878, %v929
        %s948 = scalar_lea.vmem %s3, 64
        %v949 = vld [vmem:[%s948] sm:$0xff]
        %951 = vset.pattern.permute.xlu0 0
        %952 = vperm.xlu0 %951, %v949
        %v953 = vpop.permute.xlu0 %952
        %v955 = vmul.f32 %v720, %v953
        %v956 = vmul.f32 %v721, %v953
        %v957 = vmul.f32 %v722, %v953
        %v958 = vmul.f32 %v723, %v953
        %v959 = vmul.f32 %v724, %v953
        %v960 = vmul.f32 %v725, %v953
        %v961 = vmul.f32 %v726, %v953
        %v962 = vmul.f32 %v727, %v953
        %v963 = vmul.f32 %v728, %v953
        %v964 = vadd.f32 %v939, %v955
        %v965 = vadd.f32 %v940, %v956
        %v966 = vadd.f32 %v941, %v957
        %v967 = vadd.f32 %v942, %v958
        %v968 = vadd.f32 %v943, %v959
        %v969 = vadd.f32 %v944, %v960
        %v970 = vadd.f32 %v945, %v961
        %v971 = vadd.f32 %v946, %v962
        %v972 = vadd.f32 %v947, %v963
        %vm973 = vcmp.ge.s32.totalorder %v296, 2
        %v974 = vsel %vm973, 1, 0
        %v975 = vlaneseq
        %v976 = vshrl.u32 %v975, 7
        %v977 = vsub.s32 0, %v976
        %v978 = vrot.slane %v974, %v977
        %v979 = vlaneseq
        %v980 = vshrl.u32 %v979, 7
        %v981 = vsub.s32 1, %v980
        %v982 = vrot.slane %v974, %v981
        %v983 = vlaneseq
        %v984 = vshrl.u32 %v983, 7
        %v985 = vsub.s32 2, %v984
        %v986 = vrot.slane %v974, %v985
        %v987 = vlaneseq
        %v988 = vshrl.u32 %v987, 7
        %v989 = vsub.s32 3, %v988
        %v990 = vrot.slane %v974, %v989
        %v991 = vlaneseq
        %v992 = vshrl.u32 %v991, 7
        %v993 = vsub.s32 4, %v992
        %v994 = vrot.slane %v974, %v993
        %v995 = vlaneseq
        %v996 = vshrl.u32 %v995, 7
        %v997 = vsub.s32 5, %v996
        %v998 = vrot.slane %v974, %v997
        %v999 = vlaneseq
        %v1000 = vshrl.u32 %v999, 7
        %v1001 = vsub.s32 6, %v1000
        %v1002 = vrot.slane %v974, %v1001
        %v1003 = vlaneseq
        %v1004 = vshrl.u32 %v1003, 7
        %v1005 = vsub.s32 7, %v1004
        %v1006 = vrot.slane %v974, %v1005
        %vm1007 = vcmp.eq.s32.totalorder %v978, 1
        %vm1008 = vcmp.eq.s32.totalorder %v982, 1
        %vm1009 = vcmp.eq.s32.totalorder %v986, 1
        %vm1010 = vcmp.eq.s32.totalorder %v990, 1
        %vm1011 = vcmp.eq.s32.totalorder %v994, 1
        %vm1012 = vcmp.eq.s32.totalorder %v998, 1
        %vm1013 = vcmp.eq.s32.totalorder %v1002, 1
        %vm1014 = vcmp.eq.s32.totalorder %v1006, 1
        %1024 = vrot.lane.b32.xlu0 %v854, 66
        %v1025 = vpop.permute.xlu0 %1024
        %1026 = vrot.lane.b32.xlu0 %v855, 66
        %v1027 = vpop.permute.xlu0 %1026
        %1028 = vrot.lane.b32.xlu0 %v856, 66
        %v1029 = vpop.permute.xlu0 %1028
        %1030 = vrot.lane.b32.xlu0 %v857, 66
        %v1031 = vpop.permute.xlu0 %1030
        %1032 = vrot.lane.b32.xlu0 %v858, 66
        %v1033 = vpop.permute.xlu0 %1032
        %1034 = vrot.lane.b32.xlu0 %v859, 66
        %v1035 = vpop.permute.xlu0 %1034
        %1036 = vrot.lane.b32.xlu0 %v860, 66
        %v1037 = vpop.permute.xlu0 %1036
        %1038 = vrot.lane.b32.xlu0 %v861, 66
        %v1039 = vpop.permute.xlu0 %1038
        %1040 = vrot.lane.b32.xlu0 %v862, 66
        %v1041 = vpop.permute.xlu0 %1040
        %vm1042 = vcmask 539648
        %v1043 = vsel %vm1042, %v1025, %v1027
        %v1044 = vsel %vm1042, %v1027, %v1029
        %v1045 = vsel %vm1042, %v1029, %v1031
        %v1046 = vsel %vm1042, %v1031, %v1033
        %v1047 = vsel %vm1042, %v1033, %v1035
        %v1048 = vsel %vm1042, %v1035, %v1037
        %v1049 = vsel %vm1042, %v1037, %v1039
        %v1050 = vsel %vm1042, %v1039, %v1041
        %v1059 = vsel %vm1007, %v1043, 0.0
        %v1060 = vsel %vm1008, %v1044, 0.0
        %v1061 = vsel %vm1009, %v1045, 0.0
        %v1062 = vsel %vm1010, %v1046, 0.0
        %v1063 = vsel %vm1011, %v1047, 0.0
        %v1064 = vsel %vm1012, %v1048, 0.0
        %v1065 = vsel %vm1013, %v1049, 0.0
        %v1066 = vsel %vm1014, %v1050, 0.0
        %1075 = vrot.lane.b32.xlu0 %v1059, 64
        %v1076 = vpop.permute.xlu0 %1075
        %1077 = vrot.lane.b32.xlu0 %v1060, 64
        %v1078 = vpop.permute.xlu0 %1077
        %1079 = vrot.lane.b32.xlu0 %v1061, 64
        %v1080 = vpop.permute.xlu0 %1079
        %1081 = vrot.lane.b32.xlu0 %v1062, 64
        %v1082 = vpop.permute.xlu0 %1081
        %1083 = vrot.lane.b32.xlu0 %v1063, 64
        %v1084 = vpop.permute.xlu0 %1083
        %1085 = vrot.lane.b32.xlu0 %v1064, 64
        %v1086 = vpop.permute.xlu0 %1085
        %1087 = vrot.lane.b32.xlu0 %v1065, 64
        %v1088 = vpop.permute.xlu0 %1087
        %1089 = vrot.lane.b32.xlu0 %v1066, 64
        %v1090 = vpop.permute.xlu0 %1089
        %v1091 = vsel %vm694, %v1076, %v1078
        %v1092 = vsel %vm694, %v1078, %v1080
        %v1093 = vsel %vm694, %v1080, %v1082
        %v1094 = vsel %vm694, %v1082, %v1084
        %v1095 = vsel %vm694, %v1084, %v1086
        %v1096 = vsel %vm694, %v1086, %v1088
        %v1097 = vsel %vm694, %v1088, %v1090
        %v1107 = vadd.f32 %v745, %v1076
        %v1108 = vadd.f32 %v746, %v1091
        %v1109 = vadd.f32 %v747, %v1092
        %v1110 = vadd.f32 %v748, %v1093
        %v1111 = vadd.f32 %v749, %v1094
        %v1112 = vadd.f32 %v750, %v1095
        %v1113 = vadd.f32 %v751, %v1096
        %v1114 = vadd.f32 %v752, %v1097
        %v1115 = vadd.f32 %v753, %v1090
        %vm1116 = vcmp.lt.s32.totalorder %v296, 30
        %v1117 = vsel %vm1116, 1, 0
        %v1118 = vlaneseq
        %v1119 = vshrl.u32 %v1118, 7
        %v1120 = vsub.s32 0, %v1119
        %v1121 = vrot.slane %v1117, %v1120
        %v1122 = vlaneseq
        %v1123 = vshrl.u32 %v1122, 7
        %v1124 = vsub.s32 1, %v1123
        %v1125 = vrot.slane %v1117, %v1124
        %v1126 = vlaneseq
        %v1127 = vshrl.u32 %v1126, 7
        %v1128 = vsub.s32 2, %v1127
        %v1129 = vrot.slane %v1117, %v1128
        %v1130 = vlaneseq
        %v1131 = vshrl.u32 %v1130, 7
        %v1132 = vsub.s32 3, %v1131
        %v1133 = vrot.slane %v1117, %v1132
        %v1134 = vlaneseq
        %v1135 = vshrl.u32 %v1134, 7
        %v1136 = vsub.s32 4, %v1135
        %v1137 = vrot.slane %v1117, %v1136
        %v1138 = vlaneseq
        %v1139 = vshrl.u32 %v1138, 7
        %v1140 = vsub.s32 5, %v1139
        %v1141 = vrot.slane %v1117, %v1140
        %v1142 = vlaneseq
        %v1143 = vshrl.u32 %v1142, 7
        %v1144 = vsub.s32 6, %v1143
        %v1145 = vrot.slane %v1117, %v1144
        %v1146 = vlaneseq
        %v1147 = vshrl.u32 %v1146, 7
        %v1148 = vsub.s32 7, %v1147
        %v1149 = vrot.slane %v1117, %v1148
        %vm1150 = vcmp.eq.s32.totalorder %v1121, 1
        %vm1151 = vcmp.eq.s32.totalorder %v1125, 1
        %vm1152 = vcmp.eq.s32.totalorder %v1129, 1
        %vm1153 = vcmp.eq.s32.totalorder %v1133, 1
        %vm1154 = vcmp.eq.s32.totalorder %v1137, 1
        %vm1155 = vcmp.eq.s32.totalorder %v1141, 1
        %vm1156 = vcmp.eq.s32.totalorder %v1145, 1
        %vm1157 = vcmp.eq.s32.totalorder %v1149, 1
        %1167 = vrot.lane.b32.xlu0 %v964, 62
        %v1168 = vpop.permute.xlu0 %1167
        %1169 = vrot.lane.b32.xlu0 %v965, 62
        %v1170 = vpop.permute.xlu0 %1169
        %1171 = vrot.lane.b32.xlu0 %v966, 62
        %v1172 = vpop.permute.xlu0 %1171
        %1173 = vrot.lane.b32.xlu0 %v967, 62
        %v1174 = vpop.permute.xlu0 %1173
        %1175 = vrot.lane.b32.xlu0 %v968, 62
        %v1176 = vpop.permute.xlu0 %1175
        %1177 = vrot.lane.b32.xlu0 %v969, 62
        %v1178 = vpop.permute.xlu0 %1177
        %1179 = vrot.lane.b32.xlu0 %v970, 62
        %v1180 = vpop.permute.xlu0 %1179
        %1181 = vrot.lane.b32.xlu0 %v971, 62
        %v1182 = vpop.permute.xlu0 %1181
        %1183 = vrot.lane.b32.xlu0 %v972, 62
        %v1184 = vpop.permute.xlu0 %1183
        %vm1185 = vcmask 506880
        %v1186 = vsel %vm1185, %v1168, %v1170
        %v1187 = vsel %vm1185, %v1170, %v1172
        %v1188 = vsel %vm1185, %v1172, %v1174
        %v1189 = vsel %vm1185, %v1174, %v1176
        %v1190 = vsel %vm1185, %v1176, %v1178
        %v1191 = vsel %vm1185, %v1178, %v1180
        %v1192 = vsel %vm1185, %v1180, %v1182
        %v1193 = vsel %vm1185, %v1182, %v1184
        %v1202 = vsel %vm1150, %v1186, 0.0
        %v1203 = vsel %vm1151, %v1187, 0.0
        %v1204 = vsel %vm1152, %v1188, 0.0
        %v1205 = vsel %vm1153, %v1189, 0.0
        %v1206 = vsel %vm1154, %v1190, 0.0
        %v1207 = vsel %vm1155, %v1191, 0.0
        %v1208 = vsel %vm1156, %v1192, 0.0
        %v1209 = vsel %vm1157, %v1193, 0.0
        %1218 = vrot.lane.b32.xlu0 %v1202, 64
        %v1219 = vpop.permute.xlu0 %1218
        %1220 = vrot.lane.b32.xlu0 %v1203, 64
        %v1221 = vpop.permute.xlu0 %1220
        %1222 = vrot.lane.b32.xlu0 %v1204, 64
        %v1223 = vpop.permute.xlu0 %1222
        %1224 = vrot.lane.b32.xlu0 %v1205, 64
        %v1225 = vpop.permute.xlu0 %1224
        %1226 = vrot.lane.b32.xlu0 %v1206, 64
        %v1227 = vpop.permute.xlu0 %1226
        %1228 = vrot.lane.b32.xlu0 %v1207, 64
        %v1229 = vpop.permute.xlu0 %1228
        %1230 = vrot.lane.b32.xlu0 %v1208, 64
        %v1231 = vpop.permute.xlu0 %1230
        %1232 = vrot.lane.b32.xlu0 %v1209, 64
        %v1233 = vpop.permute.xlu0 %1232
        %v1234 = vsel %vm694, %v1219, %v1221
        %v1235 = vsel %vm694, %v1221, %v1223
        %v1236 = vsel %vm694, %v1223, %v1225
        %v1237 = vsel %vm694, %v1225, %v1227
        %v1238 = vsel %vm694, %v1227, %v1229
        %v1239 = vsel %vm694, %v1229, %v1231
        %v1240 = vsel %vm694, %v1231, %v1233
        %v1250 = vadd.f32 %v1107, %v1219
        %v1251 = vadd.f32 %v1108, %v1234
        %v1252 = vadd.f32 %v1109, %v1235
        %v1253 = vadd.f32 %v1110, %v1236
        %v1254 = vadd.f32 %v1111, %v1237
        %v1255 = vadd.f32 %v1112, %v1238
        %v1256 = vadd.f32 %v1113, %v1239
        %v1257 = vadd.f32 %v1114, %v1240
        %v1258 = vadd.f32 %v1115, %v1233
        %v1259 = vld [vmem:[%s4] sm:$0xff]
        %1261 = vset.pattern.permute.xlu0 0
        %1262 = vperm.xlu0 %1261, %v1259
        %v1263 = vpop.permute.xlu0 %1262
        %v1265 = vmul.f32 %v1250, %v1263
        %v1266 = vmul.f32 %v1251, %v1263
        %v1267 = vmul.f32 %v1252, %v1263
        %v1268 = vmul.f32 %v1253, %v1263
        %v1269 = vmul.f32 %v1254, %v1263
        %v1270 = vmul.f32 %v1255, %v1263
        %v1271 = vmul.f32 %v1256, %v1263
        %v1272 = vmul.f32 %v1257, %v1263
        %v1273 = vmul.f32 %v1258, %v1263
        %v1274 = vld [vmem:[%s5] sm:$0xff]
        %1276 = vset.pattern.permute.xlu0 0
        %1277 = vperm.xlu0 %1276, %v1274
        %v1278 = vpop.permute.xlu0 %1277
        %v1280 = vadd.f32 %v1265, %v1278
        %v1281 = vadd.f32 %v1266, %v1278
        %v1282 = vadd.f32 %v1267, %v1278
        %v1283 = vadd.f32 %v1268, %v1278
        %v1284 = vadd.f32 %v1269, %v1278
        %v1285 = vadd.f32 %v1270, %v1278
        %v1286 = vadd.f32 %v1271, %v1278
        %v1287 = vadd.f32 %v1272, %v1278
        %v1288 = vadd.f32 %v1273, %v1278
        %v1289 = vsub.f32 0.0, %v1280
        %v1290 = vsub.f32 0.0, %v1281
        %v1291 = vsub.f32 0.0, %v1282
        %v1292 = vsub.f32 0.0, %v1283
        %v1293 = vsub.f32 0.0, %v1284
        %v1294 = vsub.f32 0.0, %v1285
        %v1295 = vsub.f32 0.0, %v1286
        %v1296 = vsub.f32 0.0, %v1287
        %v1297 = vsub.f32 0.0, %v1288
        %v1298 = vmul.f32 %v1289, 1.442695
        %v1299 = vpow.pop %v1298
        %v1300 = vmul.f32 %v1290, 1.442695
        %v1301 = vpow.pop %v1300
        %v1302 = vmul.f32 %v1291, 1.442695
        %v1303 = vpow.pop %v1302
        %v1304 = vmul.f32 %v1292, 1.442695
        %v1305 = vpow.pop %v1304
        %v1306 = vmul.f32 %v1293, 1.442695
        %v1307 = vpow.pop %v1306
        %v1308 = vmul.f32 %v1294, 1.442695
        %v1309 = vpow.pop %v1308
        %v1310 = vmul.f32 %v1295, 1.442695
        %v1311 = vpow.pop %v1310
        %v1312 = vmul.f32 %v1296, 1.442695
        %v1313 = vpow.pop %v1312
        %v1314 = vmul.f32 %v1297, 1.442695
        %v1315 = vpow.pop %v1314
        %v1316 = vadd.f32 %v1299, 1.0
        %v1317 = vadd.f32 %v1301, 1.0
        %v1318 = vadd.f32 %v1303, 1.0
        %v1319 = vadd.f32 %v1305, 1.0
        %v1320 = vadd.f32 %v1307, 1.0
        %v1321 = vadd.f32 %v1309, 1.0
        %v1322 = vadd.f32 %v1311, 1.0
        %v1323 = vadd.f32 %v1313, 1.0
        %v1324 = vadd.f32 %v1315, 1.0
        %v1325 = vrcp.pop %v1316
        %v1326 = vrcp.pop %v1317
        %v1327 = vrcp.pop %v1318
        %v1328 = vrcp.pop %v1319
        %v1329 = vrcp.pop %v1320
        %v1330 = vrcp.pop %v1321
        %v1331 = vrcp.pop %v1322
        %v1332 = vrcp.pop %v1323
        %v1333 = vrcp.pop %v1324
        %v1334 = vmul.f32 %v1280, %v1325
        %v1335 = vmul.f32 %v1281, %v1326
        %v1336 = vmul.f32 %v1282, %v1327
        %v1337 = vmul.f32 %v1283, %v1328
        %v1338 = vmul.f32 %v1284, %v1329
        %v1339 = vmul.f32 %v1285, %v1330
        %v1340 = vmul.f32 %v1286, %v1331
        %v1341 = vmul.f32 %v1287, %v1332
        %v1342 = vmul.f32 %v1288, %v1333
        %s1343 = scalar_lea.vmem %s6, 32
        %v1344 = vld [vmem:[%s1343] sm:$0xff]
        %v1345 = vld [vmem:[%s1343 + $0x8] sm:$0xff]
        %v1346 = vld [vmem:[%s1343 + $0x10] sm:$0xff]
        %v1347 = vld [vmem:[%s1343 + $0x18] sm:$0xff]
        %1357 = vrot.lane.b32.xlu0 %v1334, 64
        %v1358 = vpop.permute.xlu0 %1357
        %1359 = vrot.lane.b32.xlu0 %v1335, 64
        %v1360 = vpop.permute.xlu0 %1359
        %1361 = vrot.lane.b32.xlu0 %v1336, 64
        %v1362 = vpop.permute.xlu0 %1361
        %1363 = vrot.lane.b32.xlu0 %v1337, 64
        %v1364 = vpop.permute.xlu0 %1363
        %1365 = vrot.lane.b32.xlu0 %v1338, 64
        %v1366 = vpop.permute.xlu0 %1365
        %1367 = vrot.lane.b32.xlu0 %v1339, 64
        %v1368 = vpop.permute.xlu0 %1367
        %1369 = vrot.lane.b32.xlu0 %v1340, 64
        %v1370 = vpop.permute.xlu0 %1369
        %1371 = vrot.lane.b32.xlu0 %v1341, 64
        %v1372 = vpop.permute.xlu0 %1371
        %1373 = vrot.lane.b32.xlu0 %v1342, 64
        %v1374 = vpop.permute.xlu0 %1373
        %v1375 = vsel %vm694, %v1358, %v1360
        %v1376 = vsel %vm694, %v1360, %v1362
        %v1377 = vsel %vm694, %v1362, %v1364
        %v1378 = vsel %vm694, %v1364, %v1366
        %v1379 = vsel %vm694, %v1366, %v1368
        %v1380 = vsel %vm694, %v1368, %v1370
        %v1381 = vsel %vm694, %v1370, %v1372
        %v1382 = vsel %vm694, %v1372, %v1374
        %vm1391 = vcmask 64512
        %v1393 = vsel %vm1391, %v1344, 0
        %v1396 = vsel %vm1391, %v1345, 0
        %v1399 = vsel %vm1391, %v1346, 0
        %v1402 = vsel %vm1391, %v1347, 0
        %1404 = vmatprep.subr.mxu0 0.0
        %1405 = vmatpush1.msra.mxu0 0.0
        %1406 = vmatprep.subr.mxu0 0.0
        %1407 = vmatpush1.msra.mxu0 0.0
        %1408 = vmatprep.subr.mxu0 0.0
        %1409 = vmatpush1.msra.mxu0 0.0
        %1410 = vmatprep.subr.mxu0 0.0
        %1411 = vmatpush1.msra.mxu0 0.0
        %1412 = vmatprep.subr.mxu0 0.0
        %1413 = vmatpush1.msra.mxu0 0.0
        %1414 = vmatprep.subr.mxu0 0.0
        %1415 = vmatpush1.msra.mxu0 0.0
        %1416 = vmatprep.subr.mxu0 0.0
        %1417 = vmatpush1.msra.mxu0 0.0
        %1418 = vmatprep.subr.mxu0 0.0
        %1419 = vmatpush1.msra.mxu0 0.0
        %1420 = vmatprep.subr.mxu0 0.0
        %1421 = vmatpush1.msra.mxu0 0.0
        %1422 = vmatprep.subr.mxu0 0.0
        %1423 = vmatpush1.msra.mxu0 0.0
        %1424 = vmatprep.subr.mxu0 0.0
        %1425 = vmatpush1.msra.mxu0 0.0
        %1426 = vmatprep.subr.mxu0 0.0
        %1427 = vmatpush1.msra.mxu0 0.0
        %1428 = vmatprep.subr.mxu0 0.0
        %1429 = vmatpush1.msra.mxu0 0.0
        %1430 = vmatprep.subr.mxu0 0.0
        %1431 = vmatpush1.msra.mxu0 0.0
        %1432 = vmatprep.subr.mxu0 0.0
        %1433 = vmatpush1.msra.mxu0 0.0
        %1434 = vmatprep.subr.mxu0 %v1376
        %1435 = vmatpush1.msra.mxu0 %v1375
        %1436 = vmatprep.subr.mxu0 0.0
        %1437 = vmatpush2.msra.mxu0 0.0
        %1438 = vmatprep.subr.mxu0 0.0
        %1439 = vmatpush2.msra.mxu0 0.0
        %1440 = vmatprep.subr.mxu0 0.0
        %1441 = vmatpush2.msra.mxu0 0.0
        %1442 = vmatprep.subr.mxu0 0.0
        %1443 = vmatpush2.msra.mxu0 0.0
        %1444 = vmatprep.subr.mxu0 0.0
        %1445 = vmatpush2.msra.mxu0 0.0
        %1446 = vmatprep.subr.mxu0 0.0
        %1447 = vmatpush2.msra.mxu0 0.0
        %1448 = vmatprep.subr.mxu0 0.0
        %1449 = vmatpush2.msra.mxu0 0.0
        %1450 = vmatprep.subr.mxu0 0.0
        %1451 = vmatpush2.msra.mxu0 0.0
        %1452 = vmatprep.subr.mxu0 0.0
        %1453 = vmatpush2.msra.mxu0 0.0
        %1454 = vmatprep.subr.mxu0 0.0
        %1455 = vmatpush2.msra.mxu0 0.0
        %1456 = vmatprep.subr.mxu0 0.0
        %1457 = vmatpush2.msra.mxu0 0.0
        %1458 = vmatprep.subr.mxu0 0.0
        %1459 = vmatpush2.msra.mxu0 0.0
        %1460 = vmatprep.subr.mxu0 0.0
        %1461 = vmatpush2.msra.mxu0 0.0
        %1462 = vmatprep.subr.mxu0 0.0
        %1463 = vmatpush2.msra.mxu0 0.0
        %1464 = vmatprep.subr.mxu0 0.0
        %1465 = vmatpush2.msra.mxu0 0.0
        %1466 = vmatprep.subr.mxu0 0.0
        %1467 = vmatpush2.msra.mxu0 0.0
        %1468 = vmatprep.mubr.f32.mxu0 0.0
        %1469 = vmatmul.mubr.f32.gmra.mxu0 %v1393
        %v1470 = vpop.f32.mrf.mxu0
        %v1471 = vadd.f32 0.0, %v1470
        %v1472 = vpop.f32.mrf.mxu0
        %v1473 = vadd.f32 0.0, %v1472
        %1474 = vmatprep.mubr.f32.mxu0 0.0
        %1475 = vmatmul.mubr.f32.gmra.mxu0 %v1396
        %v1476 = vpop.f32.mrf.mxu0
        %v1477 = vadd.f32 0.0, %v1476
        %v1478 = vpop.f32.mrf.mxu0
        %v1479 = vadd.f32 0.0, %v1478
        %1480 = vmatprep.mubr.f32.mxu0 0.0
        %1481 = vmatmul.mubr.f32.gmra.mxu0 %v1399
        %v1482 = vpop.f32.mrf.mxu0
        %v1483 = vadd.f32 0.0, %v1482
        %v1484 = vpop.f32.mrf.mxu0
        %v1485 = vadd.f32 0.0, %v1484
        %1486 = vmatprep.mubr.f32.mxu0 0.0
        %1487 = vmatmul.mubr.f32.gmra.mxu0 %v1402
        %v1488 = vpop.f32.mrf.mxu0
        %v1489 = vadd.f32 0.0, %v1488
        %v1490 = vpop.f32.mrf.mxu0
        %v1491 = vadd.f32 0.0, %v1490
        %1492 = vdwg.mxu0
        %1493 = vmatprep.subr.mxu0 0.0
        %1494 = vmatpush1.msra.mxu0 0.0
        %1495 = vmatprep.subr.mxu0 0.0
        %1496 = vmatpush1.msra.mxu0 0.0
        %1497 = vmatprep.subr.mxu0 0.0
        %1498 = vmatpush1.msra.mxu0 0.0
        %1499 = vmatprep.subr.mxu0 0.0
        %1500 = vmatpush1.msra.mxu0 0.0
        %1501 = vmatprep.subr.mxu0 0.0
        %1502 = vmatpush1.msra.mxu0 0.0
        %1503 = vmatprep.subr.mxu0 0.0
        %1504 = vmatpush1.msra.mxu0 0.0
        %1505 = vmatprep.subr.mxu0 0.0
        %1506 = vmatpush1.msra.mxu0 0.0
        %1507 = vmatprep.subr.mxu0 0.0
        %1508 = vmatpush1.msra.mxu0 0.0
        %1509 = vmatprep.subr.mxu0 0.0
        %1510 = vmatpush1.msra.mxu0 0.0
        %1511 = vmatprep.subr.mxu0 0.0
        %1512 = vmatpush1.msra.mxu0 0.0
        %1513 = vmatprep.subr.mxu0 0.0
        %1514 = vmatpush1.msra.mxu0 0.0
        %1515 = vmatprep.subr.mxu0 0.0
        %1516 = vmatpush1.msra.mxu0 0.0
        %1517 = vmatprep.subr.mxu0 0.0
        %1518 = vmatpush1.msra.mxu0 0.0
        %1519 = vmatprep.subr.mxu0 0.0
        %1520 = vmatpush1.msra.mxu0 0.0
        %1521 = vmatprep.subr.mxu0 0.0
        %1522 = vmatpush1.msra.mxu0 0.0
        %1523 = vmatprep.subr.mxu0 %v1378
        %1524 = vmatpush1.msra.mxu0 %v1377
        %1525 = vmatprep.subr.mxu0 0.0
        %1526 = vmatpush2.msra.mxu0 0.0
        %1527 = vmatprep.subr.mxu0 0.0
        %1528 = vmatpush2.msra.mxu0 0.0
        %1529 = vmatprep.subr.mxu0 0.0
        %1530 = vmatpush2.msra.mxu0 0.0
        %1531 = vmatprep.subr.mxu0 0.0
        %1532 = vmatpush2.msra.mxu0 0.0
        %1533 = vmatprep.subr.mxu0 0.0
        %1534 = vmatpush2.msra.mxu0 0.0
        %1535 = vmatprep.subr.mxu0 0.0
        %1536 = vmatpush2.msra.mxu0 0.0
        %1537 = vmatprep.subr.mxu0 0.0
        %1538 = vmatpush2.msra.mxu0 0.0
        %1539 = vmatprep.subr.mxu0 0.0
        %1540 = vmatpush2.msra.mxu0 0.0
        %1541 = vmatprep.subr.mxu0 0.0
        %1542 = vmatpush2.msra.mxu0 0.0
        %1543 = vmatprep.subr.mxu0 0.0
        %1544 = vmatpush2.msra.mxu0 0.0
        %1545 = vmatprep.subr.mxu0 0.0
        %1546 = vmatpush2.msra.mxu0 0.0
        %1547 = vmatprep.subr.mxu0 0.0
        %1548 = vmatpush2.msra.mxu0 0.0
        %1549 = vmatprep.subr.mxu0 0.0
        %1550 = vmatpush2.msra.mxu0 0.0
        %1551 = vmatprep.subr.mxu0 0.0
        %1552 = vmatpush2.msra.mxu0 0.0
        %1553 = vmatprep.subr.mxu0 0.0
        %1554 = vmatpush2.msra.mxu0 0.0
        %1555 = vmatprep.subr.mxu0 0.0
        %1556 = vmatpush2.msra.mxu0 0.0
        %1557 = vmatprep.mubr.f32.mxu0 0.0
        %1558 = vmatmul.mubr.f32.gmra.mxu0 %v1393
        %v1559 = vpop.f32.mrf.mxu0
        %v1560 = vadd.f32 0.0, %v1559
        %v1561 = vpop.f32.mrf.mxu0
        %v1562 = vadd.f32 0.0, %v1561
        %1563 = vmatprep.mubr.f32.mxu0 0.0
        %1564 = vmatmul.mubr.f32.gmra.mxu0 %v1396
        %v1565 = vpop.f32.mrf.mxu0
        %v1566 = vadd.f32 0.0, %v1565
        %v1567 = vpop.f32.mrf.mxu0
        %v1568 = vadd.f32 0.0, %v1567
        %1569 = vmatprep.mubr.f32.mxu0 0.0
        %1570 = vmatmul.mubr.f32.gmra.mxu0 %v1399
        %v1571 = vpop.f32.mrf.mxu0
        %v1572 = vadd.f32 0.0, %v1571
        %v1573 = vpop.f32.mrf.mxu0
        %v1574 = vadd.f32 0.0, %v1573
        %1575 = vmatprep.mubr.f32.mxu0 0.0
        %1576 = vmatmul.mubr.f32.gmra.mxu0 %v1402
        %v1577 = vpop.f32.mrf.mxu0
        %v1578 = vadd.f32 0.0, %v1577
        %v1579 = vpop.f32.mrf.mxu0
        %v1580 = vadd.f32 0.0, %v1579
        %1581 = vdwg.mxu0
        %1582 = vmatprep.subr.mxu0 0.0
        %1583 = vmatpush1.msra.mxu0 0.0
        %1584 = vmatprep.subr.mxu0 0.0
        %1585 = vmatpush1.msra.mxu0 0.0
        %1586 = vmatprep.subr.mxu0 0.0
        %1587 = vmatpush1.msra.mxu0 0.0
        %1588 = vmatprep.subr.mxu0 0.0
        %1589 = vmatpush1.msra.mxu0 0.0
        %1590 = vmatprep.subr.mxu0 0.0
        %1591 = vmatpush1.msra.mxu0 0.0
        %1592 = vmatprep.subr.mxu0 0.0
        %1593 = vmatpush1.msra.mxu0 0.0
        %1594 = vmatprep.subr.mxu0 0.0
        %1595 = vmatpush1.msra.mxu0 0.0
        %1596 = vmatprep.subr.mxu0 0.0
        %1597 = vmatpush1.msra.mxu0 0.0
        %1598 = vmatprep.subr.mxu0 0.0
        %1599 = vmatpush1.msra.mxu0 0.0
        %1600 = vmatprep.subr.mxu0 0.0
        %1601 = vmatpush1.msra.mxu0 0.0
        %1602 = vmatprep.subr.mxu0 0.0
        %1603 = vmatpush1.msra.mxu0 0.0
        %1604 = vmatprep.subr.mxu0 0.0
        %1605 = vmatpush1.msra.mxu0 0.0
        %1606 = vmatprep.subr.mxu0 0.0
        %1607 = vmatpush1.msra.mxu0 0.0
        %1608 = vmatprep.subr.mxu0 0.0
        %1609 = vmatpush1.msra.mxu0 0.0
        %1610 = vmatprep.subr.mxu0 0.0
        %1611 = vmatpush1.msra.mxu0 0.0
        %1612 = vmatprep.subr.mxu0 %v1380
        %1613 = vmatpush1.msra.mxu0 %v1379
        %1614 = vmatprep.subr.mxu0 0.0
        %1615 = vmatpush2.msra.mxu0 0.0
        %1616 = vmatprep.subr.mxu0 0.0
        %1617 = vmatpush2.msra.mxu0 0.0
        %1618 = vmatprep.subr.mxu0 0.0
        %1619 = vmatpush2.msra.mxu0 0.0
        %1620 = vmatprep.subr.mxu0 0.0
        %1621 = vmatpush2.msra.mxu0 0.0
        %1622 = vmatprep.subr.mxu0 0.0
        %1623 = vmatpush2.msra.mxu0 0.0
        %1624 = vmatprep.subr.mxu0 0.0
        %1625 = vmatpush2.msra.mxu0 0.0
        %1626 = vmatprep.subr.mxu0 0.0
        %1627 = vmatpush2.msra.mxu0 0.0
        %1628 = vmatprep.subr.mxu0 0.0
        %1629 = vmatpush2.msra.mxu0 0.0
        %1630 = vmatprep.subr.mxu0 0.0
        %1631 = vmatpush2.msra.mxu0 0.0
        %1632 = vmatprep.subr.mxu0 0.0
        %1633 = vmatpush2.msra.mxu0 0.0
        %1634 = vmatprep.subr.mxu0 0.0
        %1635 = vmatpush2.msra.mxu0 0.0
        %1636 = vmatprep.subr.mxu0 0.0
        %1637 = vmatpush2.msra.mxu0 0.0
        %1638 = vmatprep.subr.mxu0 0.0
        %1639 = vmatpush2.msra.mxu0 0.0
        %1640 = vmatprep.subr.mxu0 0.0
        %1641 = vmatpush2.msra.mxu0 0.0
        %1642 = vmatprep.subr.mxu0 0.0
        %1643 = vmatpush2.msra.mxu0 0.0
        %1644 = vmatprep.subr.mxu0 0.0
        %1645 = vmatpush2.msra.mxu0 0.0
        %1646 = vmatprep.mubr.f32.mxu0 0.0
        %1647 = vmatmul.mubr.f32.gmra.mxu0 %v1393
        %v1648 = vpop.f32.mrf.mxu0
        %v1649 = vadd.f32 0.0, %v1648
        %v1650 = vpop.f32.mrf.mxu0
        %v1651 = vadd.f32 0.0, %v1650
        %1652 = vmatprep.mubr.f32.mxu0 0.0
        %1653 = vmatmul.mubr.f32.gmra.mxu0 %v1396
        %v1654 = vpop.f32.mrf.mxu0
        %v1655 = vadd.f32 0.0, %v1654
        %v1656 = vpop.f32.mrf.mxu0
        %v1657 = vadd.f32 0.0, %v1656
        %1658 = vmatprep.mubr.f32.mxu0 0.0
        %1659 = vmatmul.mubr.f32.gmra.mxu0 %v1399
        %v1660 = vpop.f32.mrf.mxu0
        %v1661 = vadd.f32 0.0, %v1660
        %v1662 = vpop.f32.mrf.mxu0
        %v1663 = vadd.f32 0.0, %v1662
        %1664 = vmatprep.mubr.f32.mxu0 0.0
        %1665 = vmatmul.mubr.f32.gmra.mxu0 %v1402
        %v1666 = vpop.f32.mrf.mxu0
        %v1667 = vadd.f32 0.0, %v1666
        %v1668 = vpop.f32.mrf.mxu0
        %v1669 = vadd.f32 0.0, %v1668
        %1670 = vdwg.mxu0
        %1671 = vmatprep.subr.mxu0 0.0
        %1672 = vmatpush1.msra.mxu0 0.0
        %1673 = vmatprep.subr.mxu0 0.0
        %1674 = vmatpush1.msra.mxu0 0.0
        %1675 = vmatprep.subr.mxu0 0.0
        %1676 = vmatpush1.msra.mxu0 0.0
        %1677 = vmatprep.subr.mxu0 0.0
        %1678 = vmatpush1.msra.mxu0 0.0
        %1679 = vmatprep.subr.mxu0 0.0
        %1680 = vmatpush1.msra.mxu0 0.0
        %1681 = vmatprep.subr.mxu0 0.0
        %1682 = vmatpush1.msra.mxu0 0.0
        %1683 = vmatprep.subr.mxu0 0.0
        %1684 = vmatpush1.msra.mxu0 0.0
        %1685 = vmatprep.subr.mxu0 0.0
        %1686 = vmatpush1.msra.mxu0 0.0
        %1687 = vmatprep.subr.mxu0 0.0
        %1688 = vmatpush1.msra.mxu0 0.0
        %1689 = vmatprep.subr.mxu0 0.0
        %1690 = vmatpush1.msra.mxu0 0.0
        %1691 = vmatprep.subr.mxu0 0.0
        %1692 = vmatpush1.msra.mxu0 0.0
        %1693 = vmatprep.subr.mxu0 0.0
        %1694 = vmatpush1.msra.mxu0 0.0
        %1695 = vmatprep.subr.mxu0 0.0
        %1696 = vmatpush1.msra.mxu0 0.0
        %1697 = vmatprep.subr.mxu0 0.0
        %1698 = vmatpush1.msra.mxu0 0.0
        %1699 = vmatprep.subr.mxu0 0.0
        %1700 = vmatpush1.msra.mxu0 0.0
        %1701 = vmatprep.subr.mxu0 %v1382
        %1702 = vmatpush1.msra.mxu0 %v1381
        %1703 = vmatprep.subr.mxu0 0.0
        %1704 = vmatpush2.msra.mxu0 0.0
        %1705 = vmatprep.subr.mxu0 0.0
        %1706 = vmatpush2.msra.mxu0 0.0
        %1707 = vmatprep.subr.mxu0 0.0
        %1708 = vmatpush2.msra.mxu0 0.0
        %1709 = vmatprep.subr.mxu0 0.0
        %1710 = vmatpush2.msra.mxu0 0.0
        %1711 = vmatprep.subr.mxu0 0.0
        %1712 = vmatpush2.msra.mxu0 0.0
        %1713 = vmatprep.subr.mxu0 0.0
        %1714 = vmatpush2.msra.mxu0 0.0
        %1715 = vmatprep.subr.mxu0 0.0
        %1716 = vmatpush2.msra.mxu0 0.0
        %1717 = vmatprep.subr.mxu0 0.0
        %1718 = vmatpush2.msra.mxu0 0.0
        %1719 = vmatprep.subr.mxu0 0.0
        %1720 = vmatpush2.msra.mxu0 0.0
        %1721 = vmatprep.subr.mxu0 0.0
        %1722 = vmatpush2.msra.mxu0 0.0
        %1723 = vmatprep.subr.mxu0 0.0
        %1724 = vmatpush2.msra.mxu0 0.0
        %1725 = vmatprep.subr.mxu0 0.0
        %1726 = vmatpush2.msra.mxu0 0.0
        %1727 = vmatprep.subr.mxu0 0.0
        %1728 = vmatpush2.msra.mxu0 0.0
        %1729 = vmatprep.subr.mxu0 0.0
        %1730 = vmatpush2.msra.mxu0 0.0
        %1731 = vmatprep.subr.mxu0 0.0
        %1732 = vmatpush2.msra.mxu0 0.0
        %1733 = vmatprep.subr.mxu0 0.0
        %1734 = vmatpush2.msra.mxu0 0.0
        %1735 = vmatprep.mubr.f32.mxu0 0.0
        %1736 = vmatmul.mubr.f32.gmra.mxu0 %v1393
        %v1737 = vpop.f32.mrf.mxu0
        %v1738 = vadd.f32 0.0, %v1737
        %v1739 = vpop.f32.mrf.mxu0
        %v1740 = vadd.f32 0.0, %v1739
        %1741 = vmatprep.mubr.f32.mxu0 0.0
        %1742 = vmatmul.mubr.f32.gmra.mxu0 %v1396
        %v1743 = vpop.f32.mrf.mxu0
        %v1744 = vadd.f32 0.0, %v1743
        %v1745 = vpop.f32.mrf.mxu0
        %v1746 = vadd.f32 0.0, %v1745
        %1747 = vmatprep.mubr.f32.mxu0 0.0
        %1748 = vmatmul.mubr.f32.gmra.mxu0 %v1399
        %v1749 = vpop.f32.mrf.mxu0
        %v1750 = vadd.f32 0.0, %v1749
        %v1751 = vpop.f32.mrf.mxu0
        %v1752 = vadd.f32 0.0, %v1751
        %1753 = vmatprep.mubr.f32.mxu0 0.0
        %1754 = vmatmul.mubr.f32.gmra.mxu0 %v1402
        %v1755 = vpop.f32.mrf.mxu0
        %v1756 = vadd.f32 0.0, %v1755
        %v1757 = vpop.f32.mrf.mxu0
        %v1758 = vadd.f32 0.0, %v1757
        %1759 = vdwg.mxu0
        %v1761 = vsel %vm1391, %v618, 0
        %v1764 = vsel %vm1391, %v619, 0
        %v1767 = vsel %vm1391, %v620, 0
        %v1770 = vsel %vm1391, %v621, 0
        %1772 = vmatprep.subr.mxu0 0.0
        %1773 = vmatpush1.msra.mxu0 0.0
        %1774 = vmatprep.subr.mxu0 0.0
        %1775 = vmatpush1.msra.mxu0 0.0
        %1776 = vmatprep.subr.mxu0 0.0
        %1777 = vmatpush1.msra.mxu0 0.0
        %1778 = vmatprep.subr.mxu0 0.0
        %1779 = vmatpush1.msra.mxu0 0.0
        %1780 = vmatprep.subr.mxu0 0.0
        %1781 = vmatpush1.msra.mxu0 0.0
        %1782 = vmatprep.subr.mxu0 0.0
        %1783 = vmatpush1.msra.mxu0 0.0
        %1784 = vmatprep.subr.mxu0 0.0
        %1785 = vmatpush1.msra.mxu0 0.0
        %1786 = vmatprep.subr.mxu0 0.0
        %1787 = vmatpush1.msra.mxu0 0.0
        %1788 = vmatprep.subr.mxu0 0.0
        %1789 = vmatpush1.msra.mxu0 0.0
        %1790 = vmatprep.subr.mxu0 0.0
        %1791 = vmatpush1.msra.mxu0 0.0
        %1792 = vmatprep.subr.mxu0 0.0
        %1793 = vmatpush1.msra.mxu0 0.0
        %1794 = vmatprep.subr.mxu0 0.0
        %1795 = vmatpush1.msra.mxu0 0.0
        %1796 = vmatprep.subr.mxu0 0.0
        %1797 = vmatpush1.msra.mxu0 0.0
        %1798 = vmatprep.subr.mxu0 0.0
        %1799 = vmatpush1.msra.mxu0 0.0
        %1800 = vmatprep.subr.mxu0 0.0
        %1801 = vmatpush1.msra.mxu0 0.0
        %1802 = vmatprep.subr.mxu0 %v403
        %1803 = vmatpush1.msra.mxu0 %v401
        %1804 = vmatprep.subr.mxu0 0.0
        %1805 = vmatpush2.msra.mxu0 0.0
        %1806 = vmatprep.subr.mxu0 0.0
        %1807 = vmatpush2.msra.mxu0 0.0
        %1808 = vmatprep.subr.mxu0 0.0
        %1809 = vmatpush2.msra.mxu0 0.0
        %1810 = vmatprep.subr.mxu0 0.0
        %1811 = vmatpush2.msra.mxu0 0.0
        %1812 = vmatprep.subr.mxu0 0.0
        %1813 = vmatpush2.msra.mxu0 0.0
        %1814 = vmatprep.subr.mxu0 0.0
        %1815 = vmatpush2.msra.mxu0 0.0
        %1816 = vmatprep.subr.mxu0 0.0
        %1817 = vmatpush2.msra.mxu0 0.0
        %1818 = vmatprep.subr.mxu0 0.0
        %1819 = vmatpush2.msra.mxu0 0.0
        %1820 = vmatprep.subr.mxu0 0.0
        %1821 = vmatpush2.msra.mxu0 0.0
        %1822 = vmatprep.subr.mxu0 0.0
        %1823 = vmatpush2.msra.mxu0 0.0
        %1824 = vmatprep.subr.mxu0 0.0
        %1825 = vmatpush2.msra.mxu0 0.0
        %1826 = vmatprep.subr.mxu0 0.0
        %1827 = vmatpush2.msra.mxu0 0.0
        %1828 = vmatprep.subr.mxu0 0.0
        %1829 = vmatpush2.msra.mxu0 0.0
        %1830 = vmatprep.subr.mxu0 0.0
        %1831 = vmatpush2.msra.mxu0 0.0
        %1832 = vmatprep.subr.mxu0 0.0
        %1833 = vmatpush2.msra.mxu0 0.0
        %1834 = vmatprep.subr.mxu0 0.0
        %1835 = vmatpush2.msra.mxu0 0.0
        %1836 = vmatprep.mubr.f32.mxu0 0.0
        %1837 = vmatmul.mubr.f32.gmra.mxu0 %v1761
        %v1838 = vpop.f32.mrf.mxu0
        %v1839 = vadd.f32 %v1471, %v1838
        %v1840 = vpop.f32.mrf.mxu0
        %v1841 = vadd.f32 %v1473, %v1840
        %1842 = vmatprep.mubr.f32.mxu0 0.0
        %1843 = vmatmul.mubr.f32.gmra.mxu0 %v1764
        %v1844 = vpop.f32.mrf.mxu0
        %v1845 = vadd.f32 %v1477, %v1844
        %v1846 = vpop.f32.mrf.mxu0
        %v1847 = vadd.f32 %v1479, %v1846
        %1848 = vmatprep.mubr.f32.mxu0 0.0
        %1849 = vmatmul.mubr.f32.gmra.mxu0 %v1767
        %v1850 = vpop.f32.mrf.mxu0
        %v1851 = vadd.f32 %v1483, %v1850
        %v1852 = vpop.f32.mrf.mxu0
        %v1853 = vadd.f32 %v1485, %v1852
        %1854 = vmatprep.mubr.f32.mxu0 0.0
        %1855 = vmatmul.mubr.f32.gmra.mxu0 %v1770
        %v1856 = vpop.f32.mrf.mxu0
        %v1857 = vadd.f32 %v1489, %v1856
        %v1858 = vpop.f32.mrf.mxu0
        %v1859 = vadd.f32 %v1491, %v1858
        %1860 = vdwg.mxu0
        %1861 = vmatprep.subr.mxu0 0.0
        %1862 = vmatpush1.msra.mxu0 0.0
        %1863 = vmatprep.subr.mxu0 0.0
        %1864 = vmatpush1.msra.mxu0 0.0
        %1865 = vmatprep.subr.mxu0 0.0
        %1866 = vmatpush1.msra.mxu0 0.0
        %1867 = vmatprep.subr.mxu0 0.0
        %1868 = vmatpush1.msra.mxu0 0.0
        %1869 = vmatprep.subr.mxu0 0.0
        %1870 = vmatpush1.msra.mxu0 0.0
        %1871 = vmatprep.subr.mxu0 0.0
        %1872 = vmatpush1.msra.mxu0 0.0
        %1873 = vmatprep.subr.mxu0 0.0
        %1874 = vmatpush1.msra.mxu0 0.0
        %1875 = vmatprep.subr.mxu0 0.0
        %1876 = vmatpush1.msra.mxu0 0.0
        %1877 = vmatprep.subr.mxu0 0.0
        %1878 = vmatpush1.msra.mxu0 0.0
        %1879 = vmatprep.subr.mxu0 0.0
        %1880 = vmatpush1.msra.mxu0 0.0
        %1881 = vmatprep.subr.mxu0 0.0
        %1882 = vmatpush1.msra.mxu0 0.0
        %1883 = vmatprep.subr.mxu0 0.0
        %1884 = vmatpush1.msra.mxu0 0.0
        %1885 = vmatprep.subr.mxu0 0.0
        %1886 = vmatpush1.msra.mxu0 0.0
        %1887 = vmatprep.subr.mxu0 0.0
        %1888 = vmatpush1.msra.mxu0 0.0
        %1889 = vmatprep.subr.mxu0 0.0
        %1890 = vmatpush1.msra.mxu0 0.0
        %1891 = vmatprep.subr.mxu0 %v474
        %1892 = vmatpush1.msra.mxu0 %v472
        %1893 = vmatprep.subr.mxu0 0.0
        %1894 = vmatpush2.msra.mxu0 0.0
        %1895 = vmatprep.subr.mxu0 0.0
        %1896 = vmatpush2.msra.mxu0 0.0
        %1897 = vmatprep.subr.mxu0 0.0
        %1898 = vmatpush2.msra.mxu0 0.0
        %1899 = vmatprep.subr.mxu0 0.0
        %1900 = vmatpush2.msra.mxu0 0.0
        %1901 = vmatprep.subr.mxu0 0.0
        %1902 = vmatpush2.msra.mxu0 0.0
        %1903 = vmatprep.subr.mxu0 0.0
        %1904 = vmatpush2.msra.mxu0 0.0
        %1905 = vmatprep.subr.mxu0 0.0
        %1906 = vmatpush2.msra.mxu0 0.0
        %1907 = vmatprep.subr.mxu0 0.0
        %1908 = vmatpush2.msra.mxu0 0.0
        %1909 = vmatprep.subr.mxu0 0.0
        %1910 = vmatpush2.msra.mxu0 0.0
        %1911 = vmatprep.subr.mxu0 0.0
        %1912 = vmatpush2.msra.mxu0 0.0
        %1913 = vmatprep.subr.mxu0 0.0
        %1914 = vmatpush2.msra.mxu0 0.0
        %1915 = vmatprep.subr.mxu0 0.0
        %1916 = vmatpush2.msra.mxu0 0.0
        %1917 = vmatprep.subr.mxu0 0.0
        %1918 = vmatpush2.msra.mxu0 0.0
        %1919 = vmatprep.subr.mxu0 0.0
        %1920 = vmatpush2.msra.mxu0 0.0
        %1921 = vmatprep.subr.mxu0 0.0
        %1922 = vmatpush2.msra.mxu0 0.0
        %1923 = vmatprep.subr.mxu0 0.0
        %1924 = vmatpush2.msra.mxu0 0.0
        %1925 = vmatprep.mubr.f32.mxu0 0.0
        %1926 = vmatmul.mubr.f32.gmra.mxu0 %v1761
        %v1927 = vpop.f32.mrf.mxu0
        %v1928 = vadd.f32 %v1560, %v1927
        %v1929 = vpop.f32.mrf.mxu0
        %v1930 = vadd.f32 %v1562, %v1929
        %1931 = vmatprep.mubr.f32.mxu0 0.0
        %1932 = vmatmul.mubr.f32.gmra.mxu0 %v1764
        %v1933 = vpop.f32.mrf.mxu0
        %v1934 = vadd.f32 %v1566, %v1933
        %v1935 = vpop.f32.mrf.mxu0
        %v1936 = vadd.f32 %v1568, %v1935
        %1937 = vmatprep.mubr.f32.mxu0 0.0
        %1938 = vmatmul.mubr.f32.gmra.mxu0 %v1767
        %v1939 = vpop.f32.mrf.mxu0
        %v1940 = vadd.f32 %v1572, %v1939
        %v1941 = vpop.f32.mrf.mxu0
        %v1942 = vadd.f32 %v1574, %v1941
        %1943 = vmatprep.mubr.f32.mxu0 0.0
        %1944 = vmatmul.mubr.f32.gmra.mxu0 %v1770
        %v1945 = vpop.f32.mrf.mxu0
        %v1946 = vadd.f32 %v1578, %v1945
        %v1947 = vpop.f32.mrf.mxu0
        %v1948 = vadd.f32 %v1580, %v1947
        %1949 = vdwg.mxu0
        %1950 = vmatprep.subr.mxu0 0.0
        %1951 = vmatpush1.msra.mxu0 0.0
        %1952 = vmatprep.subr.mxu0 0.0
        %1953 = vmatpush1.msra.mxu0 0.0
        %1954 = vmatprep.subr.mxu0 0.0
        %1955 = vmatpush1.msra.mxu0 0.0
        %1956 = vmatprep.subr.mxu0 0.0
        %1957 = vmatpush1.msra.mxu0 0.0
        %1958 = vmatprep.subr.mxu0 0.0
        %1959 = vmatpush1.msra.mxu0 0.0
        %1960 = vmatprep.subr.mxu0 0.0
        %1961 = vmatpush1.msra.mxu0 0.0
        %1962 = vmatprep.subr.mxu0 0.0
        %1963 = vmatpush1.msra.mxu0 0.0
        %1964 = vmatprep.subr.mxu0 0.0
        %1965 = vmatpush1.msra.mxu0 0.0
        %1966 = vmatprep.subr.mxu0 0.0
        %1967 = vmatpush1.msra.mxu0 0.0
        %1968 = vmatprep.subr.mxu0 0.0
        %1969 = vmatpush1.msra.mxu0 0.0
        %1970 = vmatprep.subr.mxu0 0.0
        %1971 = vmatpush1.msra.mxu0 0.0
        %1972 = vmatprep.subr.mxu0 0.0
        %1973 = vmatpush1.msra.mxu0 0.0
        %1974 = vmatprep.subr.mxu0 0.0
        %1975 = vmatpush1.msra.mxu0 0.0
        %1976 = vmatprep.subr.mxu0 0.0
        %1977 = vmatpush1.msra.mxu0 0.0
        %1978 = vmatprep.subr.mxu0 0.0
        %1979 = vmatpush1.msra.mxu0 0.0
        %1980 = vmatprep.subr.mxu0 %v545
        %1981 = vmatpush1.msra.mxu0 %v543
        %1982 = vmatprep.subr.mxu0 0.0
        %1983 = vmatpush2.msra.mxu0 0.0
        %1984 = vmatprep.subr.mxu0 0.0
        %1985 = vmatpush2.msra.mxu0 0.0
        %1986 = vmatprep.subr.mxu0 0.0
        %1987 = vmatpush2.msra.mxu0 0.0
        %1988 = vmatprep.subr.mxu0 0.0
        %1989 = vmatpush2.msra.mxu0 0.0
        %1990 = vmatprep.subr.mxu0 0.0
        %1991 = vmatpush2.msra.mxu0 0.0
        %1992 = vmatprep.subr.mxu0 0.0
        %1993 = vmatpush2.msra.mxu0 0.0
        %1994 = vmatprep.subr.mxu0 0.0
        %1995 = vmatpush2.msra.mxu0 0.0
        %1996 = vmatprep.subr.mxu0 0.0
        %1997 = vmatpush2.msra.mxu0 0.0
        %1998 = vmatprep.subr.mxu0 0.0
        %1999 = vmatpush2.msra.mxu0 0.0
        %2000 = vmatprep.subr.mxu0 0.0
        %2001 = vmatpush2.msra.mxu0 0.0
        %2002 = vmatprep.subr.mxu0 0.0
        %2003 = vmatpush2.msra.mxu0 0.0
        %2004 = vmatprep.subr.mxu0 0.0
        %2005 = vmatpush2.msra.mxu0 0.0
        %2006 = vmatprep.subr.mxu0 0.0
        %2007 = vmatpush2.msra.mxu0 0.0
        %2008 = vmatprep.subr.mxu0 0.0
        %2009 = vmatpush2.msra.mxu0 0.0
        %2010 = vmatprep.subr.mxu0 0.0
        %2011 = vmatpush2.msra.mxu0 0.0
        %2012 = vmatprep.subr.mxu0 0.0
        %2013 = vmatpush2.msra.mxu0 0.0
        %2014 = vmatprep.mubr.f32.mxu0 0.0
        %2015 = vmatmul.mubr.f32.gmra.mxu0 %v1761
        %v2016 = vpop.f32.mrf.mxu0
        %v2017 = vadd.f32 %v1649, %v2016
        %v2018 = vpop.f32.mrf.mxu0
        %v2019 = vadd.f32 %v1651, %v2018
        %2020 = vmatprep.mubr.f32.mxu0 0.0
        %2021 = vmatmul.mubr.f32.gmra.mxu0 %v1764
        %v2022 = vpop.f32.mrf.mxu0
        %v2023 = vadd.f32 %v1655, %v2022
        %v2024 = vpop.f32.mrf.mxu0
        %v2025 = vadd.f32 %v1657, %v2024
        %2026 = vmatprep.mubr.f32.mxu0 0.0
        %2027 = vmatmul.mubr.f32.gmra.mxu0 %v1767
        %v2028 = vpop.f32.mrf.mxu0
        %v2029 = vadd.f32 %v1661, %v2028
        %v2030 = vpop.f32.mrf.mxu0
        %v2031 = vadd.f32 %v1663, %v2030
        %2032 = vmatprep.mubr.f32.mxu0 0.0
        %2033 = vmatmul.mubr.f32.gmra.mxu0 %v1770
        %v2034 = vpop.f32.mrf.mxu0
        %v2035 = vadd.f32 %v1667, %v2034
        %v2036 = vpop.f32.mrf.mxu0
        %v2037 = vadd.f32 %v1669, %v2036
        %2038 = vdwg.mxu0
        %2039 = vmatprep.subr.mxu0 0.0
        %2040 = vmatpush1.msra.mxu0 0.0
        %2041 = vmatprep.subr.mxu0 0.0
        %2042 = vmatpush1.msra.mxu0 0.0
        %2043 = vmatprep.subr.mxu0 0.0
        %2044 = vmatpush1.msra.mxu0 0.0
        %2045 = vmatprep.subr.mxu0 0.0
        %2046 = vmatpush1.msra.mxu0 0.0
        %2047 = vmatprep.subr.mxu0 0.0
        %2048 = vmatpush1.msra.mxu0 0.0
        %2049 = vmatprep.subr.mxu0 0.0
        %2050 = vmatpush1.msra.mxu0 0.0
        %2051 = vmatprep.subr.mxu0 0.0
        %2052 = vmatpush1.msra.mxu0 0.0
        %2053 = vmatprep.subr.mxu0 0.0
        %2054 = vmatpush1.msra.mxu0 0.0
        %2055 = vmatprep.subr.mxu0 0.0
        %2056 = vmatpush1.msra.mxu0 0.0
        %2057 = vmatprep.subr.mxu0 0.0
        %2058 = vmatpush1.msra.mxu0 0.0
        %2059 = vmatprep.subr.mxu0 0.0
        %2060 = vmatpush1.msra.mxu0 0.0
        %2061 = vmatprep.subr.mxu0 0.0
        %2062 = vmatpush1.msra.mxu0 0.0
        %2063 = vmatprep.subr.mxu0 0.0
        %2064 = vmatpush1.msra.mxu0 0.0
        %2065 = vmatprep.subr.mxu0 0.0
        %2066 = vmatpush1.msra.mxu0 0.0
        %2067 = vmatprep.subr.mxu0 0.0
        %2068 = vmatpush1.msra.mxu0 0.0
        %2069 = vmatprep.subr.mxu0 %v616
        %2070 = vmatpush1.msra.mxu0 %v614
        %2071 = vmatprep.subr.mxu0 0.0
        %2072 = vmatpush2.msra.mxu0 0.0
        %2073 = vmatprep.subr.mxu0 0.0
        %2074 = vmatpush2.msra.mxu0 0.0
        %2075 = vmatprep.subr.mxu0 0.0
        %2076 = vmatpush2.msra.mxu0 0.0
        %2077 = vmatprep.subr.mxu0 0.0
        %2078 = vmatpush2.msra.mxu0 0.0
        %2079 = vmatprep.subr.mxu0 0.0
        %2080 = vmatpush2.msra.mxu0 0.0
        %2081 = vmatprep.subr.mxu0 0.0
        %2082 = vmatpush2.msra.mxu0 0.0
        %2083 = vmatprep.subr.mxu0 0.0
        %2084 = vmatpush2.msra.mxu0 0.0
        %2085 = vmatprep.subr.mxu0 0.0
        %2086 = vmatpush2.msra.mxu0 0.0
        %2087 = vmatprep.subr.mxu0 0.0
        %2088 = vmatpush2.msra.mxu0 0.0
        %2089 = vmatprep.subr.mxu0 0.0
        %2090 = vmatpush2.msra.mxu0 0.0
        %2091 = vmatprep.subr.mxu0 0.0
        %2092 = vmatpush2.msra.mxu0 0.0
        %2093 = vmatprep.subr.mxu0 0.0
        %2094 = vmatpush2.msra.mxu0 0.0
        %2095 = vmatprep.subr.mxu0 0.0
        %2096 = vmatpush2.msra.mxu0 0.0
        %2097 = vmatprep.subr.mxu0 0.0
        %2098 = vmatpush2.msra.mxu0 0.0
        %2099 = vmatprep.subr.mxu0 0.0
        %2100 = vmatpush2.msra.mxu0 0.0
        %2101 = vmatprep.subr.mxu0 0.0
        %2102 = vmatpush2.msra.mxu0 0.0
        %2103 = vmatprep.mubr.f32.mxu0 0.0
        %2104 = vmatmul.mubr.f32.gmra.mxu0 %v1761
        %v2105 = vpop.f32.mrf.mxu0
        %v2106 = vadd.f32 %v1738, %v2105
        %v2107 = vpop.f32.mrf.mxu0
        %v2108 = vadd.f32 %v1740, %v2107
        %2109 = vmatprep.mubr.f32.mxu0 0.0
        %2110 = vmatmul.mubr.f32.gmra.mxu0 %v1764
        %v2111 = vpop.f32.mrf.mxu0
        %v2112 = vadd.f32 %v1744, %v2111
        %v2113 = vpop.f32.mrf.mxu0
        %v2114 = vadd.f32 %v1746, %v2113
        %2115 = vmatprep.mubr.f32.mxu0 0.0
        %2116 = vmatmul.mubr.f32.gmra.mxu0 %v1767
        %v2117 = vpop.f32.mrf.mxu0
        %v2118 = vadd.f32 %v1750, %v2117
        %v2119 = vpop.f32.mrf.mxu0
        %v2120 = vadd.f32 %v1752, %v2119
        %2121 = vmatprep.mubr.f32.mxu0 0.0
        %2122 = vmatmul.mubr.f32.gmra.mxu0 %v1770
        %v2123 = vpop.f32.mrf.mxu0
        %v2124 = vadd.f32 %v1756, %v2123
        %v2125 = vpop.f32.mrf.mxu0
        %v2126 = vadd.f32 %v1758, %v2125
        %2127 = vdwg.mxu0
        %2128 = vst [vmem:[#allocation2 + $0x18] sm:$0xff] %v1375
        %2129 = vst [vmem:[#allocation2 + $0x20] sm:$0xff] %v1376
        %2130 = vst [vmem:[#allocation2 + $0x28] sm:$0xff] %v1377
        %2131 = vst [vmem:[#allocation2 + $0x30] sm:$0xff] %v1378
        %2132 = vst [vmem:[#allocation2 + $0x38] sm:$0xff] %v1379
        %2133 = vst [vmem:[#allocation2 + $0x40] sm:$0xff] %v1380
        %2134 = vst [vmem:[#allocation2 + $0x48] sm:$0xff] %v1381
        %2135 = vst [vmem:[#allocation2 + $0x50] sm:$0xff] %v1382
        %v2136 = vld [vmem:[#allocation2 + $0x10] sm:$0xff]
        %v2137 = vld [vmem:[#allocation2 + $0x18] sm:$0xff]
        %v2138 = vld [vmem:[#allocation2 + $0x20] sm:$0xff]
        %v2139 = vld [vmem:[#allocation2 + $0x28] sm:$0xff]
        %v2140 = vld [vmem:[#allocation2 + $0x30] sm:$0xff]
        %v2141 = vld [vmem:[#allocation2 + $0x38] sm:$0xff]
        %v2142 = vld [vmem:[#allocation2 + $0x40] sm:$0xff]
        %v2143 = vld [vmem:[#allocation2 + $0x48] sm:$0xff]
        %s2144 = scalar_lea.vmem %s3, 80
        %v2145 = vld [vmem:[%s2144] sm:$0xff]
        %2147 = vset.pattern.permute.xlu0 0
        %2148 = vperm.xlu0 %2147, %v2145
        %v2149 = vpop.permute.xlu0 %2148
        %v2151 = vmul.f32 %v2136, %v2149
        %v2152 = vmul.f32 %v2137, %v2149
        %v2153 = vmul.f32 %v2138, %v2149
        %v2154 = vmul.f32 %v2139, %v2149
        %v2155 = vmul.f32 %v2140, %v2149
        %v2156 = vmul.f32 %v2141, %v2149
        %v2157 = vmul.f32 %v2142, %v2149
        %v2158 = vmul.f32 %v2143, %v2149
        %v2159 = vld [vmem:[#allocation2 + $0x18] sm:$0xff]
        %v2160 = vld [vmem:[#allocation2 + $0x20] sm:$0xff]
        %v2161 = vld [vmem:[#allocation2 + $0x28] sm:$0xff]
        %v2162 = vld [vmem:[#allocation2 + $0x30] sm:$0xff]
        %v2163 = vld [vmem:[#allocation2 + $0x38] sm:$0xff]
        %v2164 = vld [vmem:[#allocation2 + $0x40] sm:$0xff]
        %v2165 = vld [vmem:[#allocation2 + $0x48] sm:$0xff]
        %v2166 = vld [vmem:[#allocation2 + $0x50] sm:$0xff]
        %s2167 = scalar_lea.vmem %s3, 104
        %v2168 = vld [vmem:[%s2167] sm:$0xff]
        %2170 = vset.pattern.permute.xlu0 0
        %2171 = vperm.xlu0 %2170, %v2168
        %v2172 = vpop.permute.xlu0 %2171
        %v2174 = vmul.f32 %v2159, %v2172
        %v2175 = vmul.f32 %v2160, %v2172
        %v2176 = vmul.f32 %v2161, %v2172
        %v2177 = vmul.f32 %v2162, %v2172
        %v2178 = vmul.f32 %v2163, %v2172
        %v2179 = vmul.f32 %v2164, %v2172
        %v2180 = vmul.f32 %v2165, %v2172
        %v2181 = vmul.f32 %v2166, %v2172
        %v2182 = vadd.f32 %v2151, %v2174
        %v2183 = vadd.f32 %v2152, %v2175
        %v2184 = vadd.f32 %v2153, %v2176
        %v2185 = vadd.f32 %v2154, %v2177
        %v2186 = vadd.f32 %v2155, %v2178
        %v2187 = vadd.f32 %v2156, %v2179
        %v2188 = vadd.f32 %v2157, %v2180
        %v2189 = vadd.f32 %v2158, %v2181
        %v2190 = vld [vmem:[#allocation2 + $0x20] sm:$0xff]
        %v2191 = vld [vmem:[#allocation2 + $0x28] sm:$0xff]
        %v2192 = vld [vmem:[#allocation2 + $0x30] sm:$0xff]
        %v2193 = vld [vmem:[#allocation2 + $0x38] sm:$0xff]
        %v2194 = vld [vmem:[#allocation2 + $0x40] sm:$0xff]
        %v2195 = vld [vmem:[#allocation2 + $0x48] sm:$0xff]
        %v2196 = vld [vmem:[#allocation2 + $0x50] sm:$0xff]
        %v2197 = vld [vmem:[#allocation2 + $0x58] sm:$0xff]
        %s2198 = scalar_lea.vmem %s3, 128
        %v2199 = vld [vmem:[%s2198] sm:$0xff]
        %2201 = vset.pattern.permute.xlu0 0
        %2202 = vperm.xlu0 %2201, %v2199
        %v2203 = vpop.permute.xlu0 %2202
        %v2205 = vmul.f32 %v2190, %v2203
        %v2206 = vmul.f32 %v2191, %v2203
        %v2207 = vmul.f32 %v2192, %v2203
        %v2208 = vmul.f32 %v2193, %v2203
        %v2209 = vmul.f32 %v2194, %v2203
        %v2210 = vmul.f32 %v2195, %v2203
        %v2211 = vmul.f32 %v2196, %v2203
        %v2212 = vmul.f32 %v2197, %v2203
        %v2213 = vadd.f32 %v2182, %v2205
        %v2214 = vadd.f32 %v2183, %v2206
        %v2215 = vadd.f32 %v2184, %v2207
        %v2216 = vadd.f32 %v2185, %v2208
        %v2217 = vadd.f32 %v2186, %v2209
        %v2218 = vadd.f32 %v2187, %v2210
        %v2219 = vadd.f32 %v2188, %v2211
        %v2220 = vadd.f32 %v2189, %v2212
        %v2221 = vld [vmem:[#allocation2 + $0x8] sm:$0xff]
        %s2222 = scalar_lea.vmem %s3, 72
        %v2223 = vld [vmem:[%s2222] sm:$0xff]
        %2225 = vset.pattern.permute.xlu0 0
        %2226 = vperm.xlu0 %2225, %v2223
        %v2227 = vpop.permute.xlu0 %2226
        %v2229 = vmul.f32 %v2221, %v2227
        %v2230 = vmul.f32 %v2136, %v2227
        %v2231 = vmul.f32 %v2137, %v2227
        %v2232 = vmul.f32 %v2138, %v2227
        %v2233 = vmul.f32 %v2139, %v2227
        %v2234 = vmul.f32 %v2140, %v2227
        %v2235 = vmul.f32 %v2141, %v2227
        %v2236 = vmul.f32 %v2142, %v2227
        %v2237 = vmul.f32 %v2143, %v2227
        %v2238 = vld [vmem:[#allocation2 + $0x10] sm:$0xff]
        %s2239 = scalar_lea.vmem %s3, 96
        %v2240 = vld [vmem:[%s2239] sm:$0xff]
        %2242 = vset.pattern.permute.xlu0 0
        %2243 = vperm.xlu0 %2242, %v2240
        %v2244 = vpop.permute.xlu0 %2243
        %v2246 = vmul.f32 %v2238, %v2244
        %v2247 = vmul.f32 %v2159, %v2244
        %v2248 = vmul.f32 %v2160, %v2244
        %v2249 = vmul.f32 %v2161, %v2244
        %v2250 = vmul.f32 %v2162, %v2244
        %v2251 = vmul.f32 %v2163, %v2244
        %v2252 = vmul.f32 %v2164, %v2244
        %v2253 = vmul.f32 %v2165, %v2244
        %v2254 = vmul.f32 %v2166, %v2244
        %v2255 = vadd.f32 %v2229, %v2246
        %v2256 = vadd.f32 %v2230, %v2247
        %v2257 = vadd.f32 %v2231, %v2248
        %v2258 = vadd.f32 %v2232, %v2249
        %v2259 = vadd.f32 %v2233, %v2250
        %v2260 = vadd.f32 %v2234, %v2251
        %v2261 = vadd.f32 %v2235, %v2252
        %v2262 = vadd.f32 %v2236, %v2253
        %v2263 = vadd.f32 %v2237, %v2254
        %v2264 = vld [vmem:[#allocation2 + $0x18] sm:$0xff]
        %s2265 = scalar_lea.vmem %s3, 120
        %v2266 = vld [vmem:[%s2265] sm:$0xff]
        %2268 = vset.pattern.permute.xlu0 0
        %2269 = vperm.xlu0 %2268, %v2266
        %v2270 = vpop.permute.xlu0 %2269
        %v2272 = vmul.f32 %v2264, %v2270
        %v2273 = vmul.f32 %v2190, %v2270
        %v2274 = vmul.f32 %v2191, %v2270
        %v2275 = vmul.f32 %v2192, %v2270
        %v2276 = vmul.f32 %v2193, %v2270
        %v2277 = vmul.f32 %v2194, %v2270
        %v2278 = vmul.f32 %v2195, %v2270
        %v2279 = vmul.f32 %v2196, %v2270
        %v2280 = vmul.f32 %v2197, %v2270
        %v2281 = vadd.f32 %v2255, %v2272
        %v2282 = vadd.f32 %v2256, %v2273
        %v2283 = vadd.f32 %v2257, %v2274
        %v2284 = vadd.f32 %v2258, %v2275
        %v2285 = vadd.f32 %v2259, %v2276
        %v2286 = vadd.f32 %v2260, %v2277
        %v2287 = vadd.f32 %v2261, %v2278
        %v2288 = vadd.f32 %v2262, %v2279
        %v2289 = vadd.f32 %v2263, %v2280
        %s2290 = scalar_lea.vmem %s3, 88
        %v2291 = vld [vmem:[%s2290] sm:$0xff]
        %2293 = vset.pattern.permute.xlu0 0
        %2294 = vperm.xlu0 %2293, %v2291
        %v2295 = vpop.permute.xlu0 %2294
        %v2297 = vmul.f32 %v2238, %v2295
        %v2298 = vmul.f32 %v2159, %v2295
        %v2299 = vmul.f32 %v2160, %v2295
        %v2300 = vmul.f32 %v2161, %v2295
        %v2301 = vmul.f32 %v2162, %v2295
        %v2302 = vmul.f32 %v2163, %v2295
        %v2303 = vmul.f32 %v2164, %v2295
        %v2304 = vmul.f32 %v2165, %v2295
        %v2305 = vmul.f32 %v2166, %v2295
        %s2306 = scalar_lea.vmem %s3, 112
        %v2307 = vld [vmem:[%s2306] sm:$0xff]
        %2309 = vset.pattern.permute.xlu0 0
        %2310 = vperm.xlu0 %2309, %v2307
        %v2311 = vpop.permute.xlu0 %2310
        %v2313 = vmul.f32 %v2264, %v2311
        %v2314 = vmul.f32 %v2190, %v2311
        %v2315 = vmul.f32 %v2191, %v2311
        %v2316 = vmul.f32 %v2192, %v2311
        %v2317 = vmul.f32 %v2193, %v2311
        %v2318 = vmul.f32 %v2194, %v2311
        %v2319 = vmul.f32 %v2195, %v2311
        %v2320 = vmul.f32 %v2196, %v2311
        %v2321 = vmul.f32 %v2197, %v2311
        %v2322 = vadd.f32 %v2297, %v2313
        %v2323 = vadd.f32 %v2298, %v2314
        %v2324 = vadd.f32 %v2299, %v2315
        %v2325 = vadd.f32 %v2300, %v2316
        %v2326 = vadd.f32 %v2301, %v2317
        %v2327 = vadd.f32 %v2302, %v2318
        %v2328 = vadd.f32 %v2303, %v2319
        %v2329 = vadd.f32 %v2304, %v2320
        %v2330 = vadd.f32 %v2305, %v2321
        %v2331 = vld [vmem:[#allocation2 + $0x20] sm:$0xff]
        %v2332 = vld [vmem:[#allocation2 + $0x28] sm:$0xff]
        %v2333 = vld [vmem:[#allocation2 + $0x30] sm:$0xff]
        %v2334 = vld [vmem:[#allocation2 + $0x38] sm:$0xff]
        %v2335 = vld [vmem:[#allocation2 + $0x40] sm:$0xff]
        %v2336 = vld [vmem:[#allocation2 + $0x48] sm:$0xff]
        %v2337 = vld [vmem:[#allocation2 + $0x50] sm:$0xff]
        %v2338 = vld [vmem:[#allocation2 + $0x58] sm:$0xff]
        %v2339 = vld [vmem:[#allocation2 + $0x60] sm:$0xff]
        %s2340 = scalar_lea.vmem %s3, 136
        %v2341 = vld [vmem:[%s2340] sm:$0xff]
        %2343 = vset.pattern.permute.xlu0 0
        %2344 = vperm.xlu0 %2343, %v2341
        %v2345 = vpop.permute.xlu0 %2344
        %v2347 = vmul.f32 %v2331, %v2345
        %v2348 = vmul.f32 %v2332, %v2345
        %v2349 = vmul.f32 %v2333, %v2345
        %v2350 = vmul.f32 %v2334, %v2345
        %v2351 = vmul.f32 %v2335, %v2345
        %v2352 = vmul.f32 %v2336, %v2345
        %v2353 = vmul.f32 %v2337, %v2345
        %v2354 = vmul.f32 %v2338, %v2345
        %v2355 = vmul.f32 %v2339, %v2345
        %v2356 = vadd.f32 %v2322, %v2347
        %v2357 = vadd.f32 %v2323, %v2348
        %v2358 = vadd.f32 %v2324, %v2349
        %v2359 = vadd.f32 %v2325, %v2350
        %v2360 = vadd.f32 %v2326, %v2351
        %v2361 = vadd.f32 %v2327, %v2352
        %v2362 = vadd.f32 %v2328, %v2353
        %v2363 = vadd.f32 %v2329, %v2354
        %v2364 = vadd.f32 %v2330, %v2355
        %vm2365 = vcmp.ge.s32.totalorder %v296, 4
        %v2366 = vsel %vm2365, 1, 0
        %v2367 = vlaneseq
        %v2368 = vshrl.u32 %v2367, 7
        %v2369 = vsub.s32 0, %v2368
        %v2370 = vrot.slane %v2366, %v2369
        %v2371 = vlaneseq
        %v2372 = vshrl.u32 %v2371, 7
        %v2373 = vsub.s32 1, %v2372
        %v2374 = vrot.slane %v2366, %v2373
        %v2375 = vlaneseq
        %v2376 = vshrl.u32 %v2375, 7
        %v2377 = vsub.s32 2, %v2376
        %v2378 = vrot.slane %v2366, %v2377
        %v2379 = vlaneseq
        %v2380 = vshrl.u32 %v2379, 7
        %v2381 = vsub.s32 3, %v2380
        %v2382 = vrot.slane %v2366, %v2381
        %v2383 = vlaneseq
        %v2384 = vshrl.u32 %v2383, 7
        %v2385 = vsub.s32 4, %v2384
        %v2386 = vrot.slane %v2366, %v2385
        %v2387 = vlaneseq
        %v2388 = vshrl.u32 %v2387, 7
        %v2389 = vsub.s32 5, %v2388
        %v2390 = vrot.slane %v2366, %v2389
        %v2391 = vlaneseq
        %v2392 = vshrl.u32 %v2391, 7
        %v2393 = vsub.s32 6, %v2392
        %v2394 = vrot.slane %v2366, %v2393
        %v2395 = vlaneseq
        %v2396 = vshrl.u32 %v2395, 7
        %v2397 = vsub.s32 7, %v2396
        %v2398 = vrot.slane %v2366, %v2397
        %vm2399 = vcmp.eq.s32.totalorder %v2370, 1
        %vm2400 = vcmp.eq.s32.totalorder %v2374, 1
        %vm2401 = vcmp.eq.s32.totalorder %v2378, 1
        %vm2402 = vcmp.eq.s32.totalorder %v2382, 1
        %vm2403 = vcmp.eq.s32.totalorder %v2386, 1
        %vm2404 = vcmp.eq.s32.totalorder %v2390, 1
        %vm2405 = vcmp.eq.s32.totalorder %v2394, 1
        %vm2406 = vcmp.eq.s32.totalorder %v2398, 1
        %2416 = vrot.lane.b32.xlu0 %v2281, 4
        %v2417 = vpop.permute.xlu0 %2416
        %2418 = vrot.lane.b32.xlu0 %v2282, 4
        %v2419 = vpop.permute.xlu0 %2418
        %2420 = vrot.lane.b32.xlu0 %v2283, 4
        %v2421 = vpop.permute.xlu0 %2420
        %2422 = vrot.lane.b32.xlu0 %v2284, 4
        %v2423 = vpop.permute.xlu0 %2422
        %2424 = vrot.lane.b32.xlu0 %v2285, 4
        %v2425 = vpop.permute.xlu0 %2424
        %2426 = vrot.lane.b32.xlu0 %v2286, 4
        %v2427 = vpop.permute.xlu0 %2426
        %2428 = vrot.lane.b32.xlu0 %v2287, 4
        %v2429 = vpop.permute.xlu0 %2428
        %2430 = vrot.lane.b32.xlu0 %v2288, 4
        %v2431 = vpop.permute.xlu0 %2430
        %2432 = vrot.lane.b32.xlu0 %v2289, 4
        %v2433 = vpop.permute.xlu0 %2432
        %vm2434 = vcmask 31744
        %v2435 = vsel %vm2434, %v2417, %v2419
        %v2436 = vsel %vm2434, %v2419, %v2421
        %v2437 = vsel %vm2434, %v2421, %v2423
        %v2438 = vsel %vm2434, %v2423, %v2425
        %v2439 = vsel %vm2434, %v2425, %v2427
        %v2440 = vsel %vm2434, %v2427, %v2429
        %v2441 = vsel %vm2434, %v2429, %v2431
        %v2442 = vsel %vm2434, %v2431, %v2433
        %v2451 = vsel %vm2399, %v2435, 0.0
        %v2452 = vsel %vm2400, %v2436, 0.0
        %v2453 = vsel %vm2401, %v2437, 0.0
        %v2454 = vsel %vm2402, %v2438, 0.0
        %v2455 = vsel %vm2403, %v2439, 0.0
        %v2456 = vsel %vm2404, %v2440, 0.0
        %v2457 = vsel %vm2405, %v2441, 0.0
        %v2458 = vsel %vm2406, %v2442, 0.0
        %v2459 = vadd.f32 %v2213, %v2451
        %v2460 = vadd.f32 %v2214, %v2452
        %v2461 = vadd.f32 %v2215, %v2453
        %v2462 = vadd.f32 %v2216, %v2454
        %v2463 = vadd.f32 %v2217, %v2455
        %v2464 = vadd.f32 %v2218, %v2456
        %v2465 = vadd.f32 %v2219, %v2457
        %v2466 = vadd.f32 %v2220, %v2458
        %vm2467 = vcmp.lt.s32.totalorder %v296, 28
        %v2468 = vsel %vm2467, 1, 0
        %v2469 = vlaneseq
        %v2470 = vshrl.u32 %v2469, 7
        %v2471 = vsub.s32 0, %v2470
        %v2472 = vrot.slane %v2468, %v2471
        %v2473 = vlaneseq
        %v2474 = vshrl.u32 %v2473, 7
        %v2475 = vsub.s32 1, %v2474
        %v2476 = vrot.slane %v2468, %v2475
        %v2477 = vlaneseq
        %v2478 = vshrl.u32 %v2477, 7
        %v2479 = vsub.s32 2, %v2478
        %v2480 = vrot.slane %v2468, %v2479
        %v2481 = vlaneseq
        %v2482 = vshrl.u32 %v2481, 7
        %v2483 = vsub.s32 3, %v2482
        %v2484 = vrot.slane %v2468, %v2483
        %v2485 = vlaneseq
        %v2486 = vshrl.u32 %v2485, 7
        %v2487 = vsub.s32 4, %v2486
        %v2488 = vrot.slane %v2468, %v2487
        %v2489 = vlaneseq
        %v2490 = vshrl.u32 %v2489, 7
        %v2491 = vsub.s32 5, %v2490
        %v2492 = vrot.slane %v2468, %v2491
        %v2493 = vlaneseq
        %v2494 = vshrl.u32 %v2493, 7
        %v2495 = vsub.s32 6, %v2494
        %v2496 = vrot.slane %v2468, %v2495
        %v2497 = vlaneseq
        %v2498 = vshrl.u32 %v2497, 7
        %v2499 = vsub.s32 7, %v2498
        %v2500 = vrot.slane %v2468, %v2499
        %vm2501 = vcmp.eq.s32.totalorder %v2472, 1
        %vm2502 = vcmp.eq.s32.totalorder %v2476, 1
        %vm2503 = vcmp.eq.s32.totalorder %v2480, 1
        %vm2504 = vcmp.eq.s32.totalorder %v2484, 1
        %vm2505 = vcmp.eq.s32.totalorder %v2488, 1
        %vm2506 = vcmp.eq.s32.totalorder %v2492, 1
        %vm2507 = vcmp.eq.s32.totalorder %v2496, 1
        %vm2508 = vcmp.eq.s32.totalorder %v2500, 1
        %2518 = vrot.lane.b32.xlu0 %v2356, 124
        %v2519 = vpop.permute.xlu0 %2518
        %2520 = vrot.lane.b32.xlu0 %v2357, 124
        %v2521 = vpop.permute.xlu0 %2520
        %2522 = vrot.lane.b32.xlu0 %v2358, 124
        %v2523 = vpop.permute.xlu0 %2522
        %2524 = vrot.lane.b32.xlu0 %v2359, 124
        %v2525 = vpop.permute.xlu0 %2524
        %2526 = vrot.lane.b32.xlu0 %v2360, 124
        %v2527 = vpop.permute.xlu0 %2526
        %2528 = vrot.lane.b32.xlu0 %v2361, 124
        %v2529 = vpop.permute.xlu0 %2528
        %2530 = vrot.lane.b32.xlu0 %v2362, 124
        %v2531 = vpop.permute.xlu0 %2530
        %2532 = vrot.lane.b32.xlu0 %v2363, 124
        %v2533 = vpop.permute.xlu0 %2532
        %2534 = vrot.lane.b32.xlu0 %v2364, 124
        %v2535 = vpop.permute.xlu0 %2534
        %vm2536 = vcmask 1014784
        %v2537 = vsel %vm2536, %v2519, %v2521
        %v2538 = vsel %vm2536, %v2521, %v2523
        %v2539 = vsel %vm2536, %v2523, %v2525
        %v2540 = vsel %vm2536, %v2525, %v2527
        %v2541 = vsel %vm2536, %v2527, %v2529
        %v2542 = vsel %vm2536, %v2529, %v2531
        %v2543 = vsel %vm2536, %v2531, %v2533
        %v2544 = vsel %vm2536, %v2533, %v2535
        %v2553 = vsel %vm2501, %v2537, 0.0
        %v2554 = vsel %vm2502, %v2538, 0.0
        %v2555 = vsel %vm2503, %v2539, 0.0
        %v2556 = vsel %vm2504, %v2540, 0.0
        %v2557 = vsel %vm2505, %v2541, 0.0
        %v2558 = vsel %vm2506, %v2542, 0.0
        %v2559 = vsel %vm2507, %v2543, 0.0
        %v2560 = vsel %vm2508, %v2544, 0.0
        %v2561 = vadd.f32 %v2459, %v2553
        %v2562 = vadd.f32 %v2460, %v2554
        %v2563 = vadd.f32 %v2461, %v2555
        %v2564 = vadd.f32 %v2462, %v2556
        %v2565 = vadd.f32 %v2463, %v2557
        %v2566 = vadd.f32 %v2464, %v2558
        %v2567 = vadd.f32 %v2465, %v2559
        %v2568 = vadd.f32 %v2466, %v2560
        %s2569 = scalar_lea.vmem %s4, 8
        %v2570 = vld [vmem:[%s2569] sm:$0xff]
        %2572 = vset.pattern.permute.xlu0 0
        %2573 = vperm.xlu0 %2572, %v2570
        %v2574 = vpop.permute.xlu0 %2573
        %v2576 = vmul.f32 %v2561, %v2574
        %v2577 = vmul.f32 %v2562, %v2574
        %v2578 = vmul.f32 %v2563, %v2574
        %v2579 = vmul.f32 %v2564, %v2574
        %v2580 = vmul.f32 %v2565, %v2574
        %v2581 = vmul.f32 %v2566, %v2574
        %v2582 = vmul.f32 %v2567, %v2574
        %v2583 = vmul.f32 %v2568, %v2574
        %s2584 = scalar_lea.vmem %s5, 8
        %v2585 = vld [vmem:[%s2584] sm:$0xff]
        %2587 = vset.pattern.permute.xlu0 0
        %2588 = vperm.xlu0 %2587, %v2585
        %v2589 = vpop.permute.xlu0 %2588
        %v2591 = vadd.f32 %v2576, %v2589
        %v2592 = vadd.f32 %v2577, %v2589
        %v2593 = vadd.f32 %v2578, %v2589
        %v2594 = vadd.f32 %v2579, %v2589
        %v2595 = vadd.f32 %v2580, %v2589
        %v2596 = vadd.f32 %v2581, %v2589
        %v2597 = vadd.f32 %v2582, %v2589
        %v2598 = vadd.f32 %v2583, %v2589
        %v2599 = vsub.f32 0.0, %v2591
        %v2600 = vsub.f32 0.0, %v2592
        %v2601 = vsub.f32 0.0, %v2593
        %v2602 = vsub.f32 0.0, %v2594
        %v2603 = vsub.f32 0.0, %v2595
        %v2604 = vsub.f32 0.0, %v2596
        %v2605 = vsub.f32 0.0, %v2597
        %v2606 = vsub.f32 0.0, %v2598
        %v2607 = vmul.f32 %v2599, 1.442695
        %v2608 = vpow.pop %v2607
        %v2609 = vmul.f32 %v2600, 1.442695
        %v2610 = vpow.pop %v2609
        %v2611 = vmul.f32 %v2601, 1.442695
        %v2612 = vpow.pop %v2611
        %v2613 = vmul.f32 %v2602, 1.442695
        %v2614 = vpow.pop %v2613
        %v2615 = vmul.f32 %v2603, 1.442695
        %v2616 = vpow.pop %v2615
        %v2617 = vmul.f32 %v2604, 1.442695
        %v2618 = vpow.pop %v2617
        %v2619 = vmul.f32 %v2605, 1.442695
        %v2620 = vpow.pop %v2619
        %v2621 = vmul.f32 %v2606, 1.442695
        %v2622 = vpow.pop %v2621
        %v2623 = vadd.f32 %v2608, 1.0
        %v2624 = vadd.f32 %v2610, 1.0
        %v2625 = vadd.f32 %v2612, 1.0
        %v2626 = vadd.f32 %v2614, 1.0
        %v2627 = vadd.f32 %v2616, 1.0
        %v2628 = vadd.f32 %v2618, 1.0
        %v2629 = vadd.f32 %v2620, 1.0
        %v2630 = vadd.f32 %v2622, 1.0
        %v2631 = vrcp.pop %v2623
        %v2632 = vrcp.pop %v2624
        %v2633 = vrcp.pop %v2625
        %v2634 = vrcp.pop %v2626
        %v2635 = vrcp.pop %v2627
        %v2636 = vrcp.pop %v2628
        %v2637 = vrcp.pop %v2629
        %v2638 = vrcp.pop %v2630
        %v2639 = vmul.f32 %v2591, %v2631
        %v2640 = vmul.f32 %v2592, %v2632
        %v2641 = vmul.f32 %v2593, %v2633
        %v2642 = vmul.f32 %v2594, %v2634
        %v2643 = vmul.f32 %v2595, %v2635
        %v2644 = vmul.f32 %v2596, %v2636
        %v2645 = vmul.f32 %v2597, %v2637
        %v2646 = vmul.f32 %v2598, %v2638
        %s2647 = scalar_lea.vmem %s6, 64
        %v2648 = vld [vmem:[%s2647] sm:$0xff]
        %v2649 = vld [vmem:[%s2647 + $0x8] sm:$0xff]
        %v2650 = vld [vmem:[%s2647 + $0x10] sm:$0xff]
        %v2651 = vld [vmem:[%s2647 + $0x18] sm:$0xff]
        %v2653 = vsel %vm1391, %v2648, 0
        %v2656 = vsel %vm1391, %v2649, 0
        %v2659 = vsel %vm1391, %v2650, 0
        %v2662 = vsel %vm1391, %v2651, 0
        %2664 = vmatprep.subr.mxu0 0.0
        %2665 = vmatpush1.msra.mxu0 0.0
        %2666 = vmatprep.subr.mxu0 0.0
        %2667 = vmatpush1.msra.mxu0 0.0
        %2668 = vmatprep.subr.mxu0 0.0
        %2669 = vmatpush1.msra.mxu0 0.0
        %2670 = vmatprep.subr.mxu0 0.0
        %2671 = vmatpush1.msra.mxu0 0.0
        %2672 = vmatprep.subr.mxu0 0.0
        %2673 = vmatpush1.msra.mxu0 0.0
        %2674 = vmatprep.subr.mxu0 0.0
        %2675 = vmatpush1.msra.mxu0 0.0
        %2676 = vmatprep.subr.mxu0 0.0
        %2677 = vmatpush1.msra.mxu0 0.0
        %2678 = vmatprep.subr.mxu0 0.0
        %2679 = vmatpush1.msra.mxu0 0.0
        %2680 = vmatprep.subr.mxu0 0.0
        %2681 = vmatpush1.msra.mxu0 0.0
        %2682 = vmatprep.subr.mxu0 0.0
        %2683 = vmatpush1.msra.mxu0 0.0
        %2684 = vmatprep.subr.mxu0 0.0
        %2685 = vmatpush1.msra.mxu0 0.0
        %2686 = vmatprep.subr.mxu0 0.0
        %2687 = vmatpush1.msra.mxu0 0.0
        %2688 = vmatprep.subr.mxu0 0.0
        %2689 = vmatpush1.msra.mxu0 0.0
        %2690 = vmatprep.subr.mxu0 0.0
        %2691 = vmatpush1.msra.mxu0 0.0
        %2692 = vmatprep.subr.mxu0 0.0
        %2693 = vmatpush1.msra.mxu0 0.0
        %2694 = vmatprep.subr.mxu0 %v2640
        %2695 = vmatpush1.msra.mxu0 %v2639
        %2696 = vmatprep.subr.mxu0 0.0
        %2697 = vmatpush2.msra.mxu0 0.0
        %2698 = vmatprep.subr.mxu0 0.0
        %2699 = vmatpush2.msra.mxu0 0.0
        %2700 = vmatprep.subr.mxu0 0.0
        %2701 = vmatpush2.msra.mxu0 0.0
        %2702 = vmatprep.subr.mxu0 0.0
        %2703 = vmatpush2.msra.mxu0 0.0
        %2704 = vmatprep.subr.mxu0 0.0
        %2705 = vmatpush2.msra.mxu0 0.0
        %2706 = vmatprep.subr.mxu0 0.0
        %2707 = vmatpush2.msra.mxu0 0.0
        %2708 = vmatprep.subr.mxu0 0.0
        %2709 = vmatpush2.msra.mxu0 0.0
        %2710 = vmatprep.subr.mxu0 0.0
        %2711 = vmatpush2.msra.mxu0 0.0
        %2712 = vmatprep.subr.mxu0 0.0
        %2713 = vmatpush2.msra.mxu0 0.0
        %2714 = vmatprep.subr.mxu0 0.0
        %2715 = vmatpush2.msra.mxu0 0.0
        %2716 = vmatprep.subr.mxu0 0.0
        %2717 = vmatpush2.msra.mxu0 0.0
        %2718 = vmatprep.subr.mxu0 0.0
        %2719 = vmatpush2.msra.mxu0 0.0
        %2720 = vmatprep.subr.mxu0 0.0
        %2721 = vmatpush2.msra.mxu0 0.0
        %2722 = vmatprep.subr.mxu0 0.0
        %2723 = vmatpush2.msra.mxu0 0.0
        %2724 = vmatprep.subr.mxu0 0.0
        %2725 = vmatpush2.msra.mxu0 0.0
        %2726 = vmatprep.subr.mxu0 0.0
        %2727 = vmatpush2.msra.mxu0 0.0
        %2728 = vmatprep.mubr.f32.mxu0 0.0
        %2729 = vmatmul.mubr.f32.gmra.mxu0 %v2653
        %v2730 = vpop.f32.mrf.mxu0
        %v2731 = vadd.f32 0.0, %v2730
        %v2732 = vpop.f32.mrf.mxu0
        %v2733 = vadd.f32 0.0, %v2732
        %2734 = vmatprep.mubr.f32.mxu0 0.0
        %2735 = vmatmul.mubr.f32.gmra.mxu0 %v2656
        %v2736 = vpop.f32.mrf.mxu0
        %v2737 = vadd.f32 0.0, %v2736
        %v2738 = vpop.f32.mrf.mxu0
        %v2739 = vadd.f32 0.0, %v2738
        %2740 = vmatprep.mubr.f32.mxu0 0.0
        %2741 = vmatmul.mubr.f32.gmra.mxu0 %v2659
        %v2742 = vpop.f32.mrf.mxu0
        %v2743 = vadd.f32 0.0, %v2742
        %v2744 = vpop.f32.mrf.mxu0
        %v2745 = vadd.f32 0.0, %v2744
        %2746 = vmatprep.mubr.f32.mxu0 0.0
        %2747 = vmatmul.mubr.f32.gmra.mxu0 %v2662
        %v2748 = vpop.f32.mrf.mxu0
        %v2749 = vadd.f32 0.0, %v2748
        %v2750 = vpop.f32.mrf.mxu0
        %v2751 = vadd.f32 0.0, %v2750
        %2752 = vdwg.mxu0
        %2753 = vmatprep.subr.mxu0 0.0
        %2754 = vmatpush1.msra.mxu0 0.0
        %2755 = vmatprep.subr.mxu0 0.0
        %2756 = vmatpush1.msra.mxu0 0.0
        %2757 = vmatprep.subr.mxu0 0.0
        %2758 = vmatpush1.msra.mxu0 0.0
        %2759 = vmatprep.subr.mxu0 0.0
        %2760 = vmatpush1.msra.mxu0 0.0
        %2761 = vmatprep.subr.mxu0 0.0
        %2762 = vmatpush1.msra.mxu0 0.0
        %2763 = vmatprep.subr.mxu0 0.0
        %2764 = vmatpush1.msra.mxu0 0.0
        %2765 = vmatprep.subr.mxu0 0.0
        %2766 = vmatpush1.msra.mxu0 0.0
        %2767 = vmatprep.subr.mxu0 0.0
        %2768 = vmatpush1.msra.mxu0 0.0
        %2769 = vmatprep.subr.mxu0 0.0
        %2770 = vmatpush1.msra.mxu0 0.0
        %2771 = vmatprep.subr.mxu0 0.0
        %2772 = vmatpush1.msra.mxu0 0.0
        %2773 = vmatprep.subr.mxu0 0.0
        %2774 = vmatpush1.msra.mxu0 0.0
        %2775 = vmatprep.subr.mxu0 0.0
        %2776 = vmatpush1.msra.mxu0 0.0
        %2777 = vmatprep.subr.mxu0 0.0
        %2778 = vmatpush1.msra.mxu0 0.0
        %2779 = vmatprep.subr.mxu0 0.0
        %2780 = vmatpush1.msra.mxu0 0.0
        %2781 = vmatprep.subr.mxu0 0.0
        %2782 = vmatpush1.msra.mxu0 0.0
        %2783 = vmatprep.subr.mxu0 %v2642
        %2784 = vmatpush1.msra.mxu0 %v2641
        %2785 = vmatprep.subr.mxu0 0.0
        %2786 = vmatpush2.msra.mxu0 0.0
        %2787 = vmatprep.subr.mxu0 0.0
        %2788 = vmatpush2.msra.mxu0 0.0
        %2789 = vmatprep.subr.mxu0 0.0
        %2790 = vmatpush2.msra.mxu0 0.0
        %2791 = vmatprep.subr.mxu0 0.0
        %2792 = vmatpush2.msra.mxu0 0.0
        %2793 = vmatprep.subr.mxu0 0.0
        %2794 = vmatpush2.msra.mxu0 0.0
        %2795 = vmatprep.subr.mxu0 0.0
        %2796 = vmatpush2.msra.mxu0 0.0
        %2797 = vmatprep.subr.mxu0 0.0
        %2798 = vmatpush2.msra.mxu0 0.0
        %2799 = vmatprep.subr.mxu0 0.0
        %2800 = vmatpush2.msra.mxu0 0.0
        %2801 = vmatprep.subr.mxu0 0.0
        %2802 = vmatpush2.msra.mxu0 0.0
        %2803 = vmatprep.subr.mxu0 0.0
        %2804 = vmatpush2.msra.mxu0 0.0
        %2805 = vmatprep.subr.mxu0 0.0
        %2806 = vmatpush2.msra.mxu0 0.0
        %2807 = vmatprep.subr.mxu0 0.0
        %2808 = vmatpush2.msra.mxu0 0.0
        %2809 = vmatprep.subr.mxu0 0.0
        %2810 = vmatpush2.msra.mxu0 0.0
        %2811 = vmatprep.subr.mxu0 0.0
        %2812 = vmatpush2.msra.mxu0 0.0
        %2813 = vmatprep.subr.mxu0 0.0
        %2814 = vmatpush2.msra.mxu0 0.0
        %2815 = vmatprep.subr.mxu0 0.0
        %2816 = vmatpush2.msra.mxu0 0.0
        %2817 = vmatprep.mubr.f32.mxu0 0.0
        %2818 = vmatmul.mubr.f32.gmra.mxu0 %v2653
        %v2819 = vpop.f32.mrf.mxu0
        %v2820 = vadd.f32 0.0, %v2819
        %v2821 = vpop.f32.mrf.mxu0
        %v2822 = vadd.f32 0.0, %v2821
        %2823 = vmatprep.mubr.f32.mxu0 0.0
        %2824 = vmatmul.mubr.f32.gmra.mxu0 %v2656
        %v2825 = vpop.f32.mrf.mxu0
        %v2826 = vadd.f32 0.0, %v2825
        %v2827 = vpop.f32.mrf.mxu0
        %v2828 = vadd.f32 0.0, %v2827
        %2829 = vmatprep.mubr.f32.mxu0 0.0
        %2830 = vmatmul.mubr.f32.gmra.mxu0 %v2659
        %v2831 = vpop.f32.mrf.mxu0
        %v2832 = vadd.f32 0.0, %v2831
        %v2833 = vpop.f32.mrf.mxu0
        %v2834 = vadd.f32 0.0, %v2833
        %2835 = vmatprep.mubr.f32.mxu0 0.0
        %2836 = vmatmul.mubr.f32.gmra.mxu0 %v2662
        %v2837 = vpop.f32.mrf.mxu0
        %v2838 = vadd.f32 0.0, %v2837
        %v2839 = vpop.f32.mrf.mxu0
        %v2840 = vadd.f32 0.0, %v2839
        %2841 = vdwg.mxu0
        %2842 = vmatprep.subr.mxu0 0.0
        %2843 = vmatpush1.msra.mxu0 0.0
        %2844 = vmatprep.subr.mxu0 0.0
        %2845 = vmatpush1.msra.mxu0 0.0
        %2846 = vmatprep.subr.mxu0 0.0
        %2847 = vmatpush1.msra.mxu0 0.0
        %2848 = vmatprep.subr.mxu0 0.0
        %2849 = vmatpush1.msra.mxu0 0.0
        %2850 = vmatprep.subr.mxu0 0.0
        %2851 = vmatpush1.msra.mxu0 0.0
        %2852 = vmatprep.subr.mxu0 0.0
        %2853 = vmatpush1.msra.mxu0 0.0
        %2854 = vmatprep.subr.mxu0 0.0
        %2855 = vmatpush1.msra.mxu0 0.0
        %2856 = vmatprep.subr.mxu0 0.0
        %2857 = vmatpush1.msra.mxu0 0.0
        %2858 = vmatprep.subr.mxu0 0.0
        %2859 = vmatpush1.msra.mxu0 0.0
        %2860 = vmatprep.subr.mxu0 0.0
        %2861 = vmatpush1.msra.mxu0 0.0
        %2862 = vmatprep.subr.mxu0 0.0
        %2863 = vmatpush1.msra.mxu0 0.0
        %2864 = vmatprep.subr.mxu0 0.0
        %2865 = vmatpush1.msra.mxu0 0.0
        %2866 = vmatprep.subr.mxu0 0.0
        %2867 = vmatpush1.msra.mxu0 0.0
        %2868 = vmatprep.subr.mxu0 0.0
        %2869 = vmatpush1.msra.mxu0 0.0
        %2870 = vmatprep.subr.mxu0 0.0
        %2871 = vmatpush1.msra.mxu0 0.0
        %2872 = vmatprep.subr.mxu0 %v2644
        %2873 = vmatpush1.msra.mxu0 %v2643
        %2874 = vmatprep.subr.mxu0 0.0
        %2875 = vmatpush2.msra.mxu0 0.0
        %2876 = vmatprep.subr.mxu0 0.0
        %2877 = vmatpush2.msra.mxu0 0.0
        %2878 = vmatprep.subr.mxu0 0.0
        %2879 = vmatpush2.msra.mxu0 0.0
        %2880 = vmatprep.subr.mxu0 0.0
        %2881 = vmatpush2.msra.mxu0 0.0
        %2882 = vmatprep.subr.mxu0 0.0
        %2883 = vmatpush2.msra.mxu0 0.0
        %2884 = vmatprep.subr.mxu0 0.0
        %2885 = vmatpush2.msra.mxu0 0.0
        %2886 = vmatprep.subr.mxu0 0.0
        %2887 = vmatpush2.msra.mxu0 0.0
        %2888 = vmatprep.subr.mxu0 0.0
        %2889 = vmatpush2.msra.mxu0 0.0
        %2890 = vmatprep.subr.mxu0 0.0
        %2891 = vmatpush2.msra.mxu0 0.0
        %2892 = vmatprep.subr.mxu0 0.0
        %2893 = vmatpush2.msra.mxu0 0.0
        %2894 = vmatprep.subr.mxu0 0.0
        %2895 = vmatpush2.msra.mxu0 0.0
        %2896 = vmatprep.subr.mxu0 0.0
        %2897 = vmatpush2.msra.mxu0 0.0
        %2898 = vmatprep.subr.mxu0 0.0
        %2899 = vmatpush2.msra.mxu0 0.0
        %2900 = vmatprep.subr.mxu0 0.0
        %2901 = vmatpush2.msra.mxu0 0.0
        %2902 = vmatprep.subr.mxu0 0.0
        %2903 = vmatpush2.msra.mxu0 0.0
        %2904 = vmatprep.subr.mxu0 0.0
        %2905 = vmatpush2.msra.mxu0 0.0
        %2906 = vmatprep.mubr.f32.mxu0 0.0
        %2907 = vmatmul.mubr.f32.gmra.mxu0 %v2653
        %v2908 = vpop.f32.mrf.mxu0
        %v2909 = vadd.f32 0.0, %v2908
        %v2910 = vpop.f32.mrf.mxu0
        %v2911 = vadd.f32 0.0, %v2910
        %2912 = vmatprep.mubr.f32.mxu0 0.0
        %2913 = vmatmul.mubr.f32.gmra.mxu0 %v2656
        %v2914 = vpop.f32.mrf.mxu0
        %v2915 = vadd.f32 0.0, %v2914
        %v2916 = vpop.f32.mrf.mxu0
        %v2917 = vadd.f32 0.0, %v2916
        %2918 = vmatprep.mubr.f32.mxu0 0.0
        %2919 = vmatmul.mubr.f32.gmra.mxu0 %v2659
        %v2920 = vpop.f32.mrf.mxu0
        %v2921 = vadd.f32 0.0, %v2920
        %v2922 = vpop.f32.mrf.mxu0
        %v2923 = vadd.f32 0.0, %v2922
        %2924 = vmatprep.mubr.f32.mxu0 0.0
        %2925 = vmatmul.mubr.f32.gmra.mxu0 %v2662
        %v2926 = vpop.f32.mrf.mxu0
        %v2927 = vadd.f32 0.0, %v2926
        %v2928 = vpop.f32.mrf.mxu0
        %v2929 = vadd.f32 0.0, %v2928
        %2930 = vdwg.mxu0
        %2931 = vmatprep.subr.mxu0 0.0
        %2932 = vmatpush1.msra.mxu0 0.0
        %2933 = vmatprep.subr.mxu0 0.0
        %2934 = vmatpush1.msra.mxu0 0.0
        %2935 = vmatprep.subr.mxu0 0.0
        %2936 = vmatpush1.msra.mxu0 0.0
        %2937 = vmatprep.subr.mxu0 0.0
        %2938 = vmatpush1.msra.mxu0 0.0
        %2939 = vmatprep.subr.mxu0 0.0
        %2940 = vmatpush1.msra.mxu0 0.0
        %2941 = vmatprep.subr.mxu0 0.0
        %2942 = vmatpush1.msra.mxu0 0.0
        %2943 = vmatprep.subr.mxu0 0.0
        %2944 = vmatpush1.msra.mxu0 0.0
        %2945 = vmatprep.subr.mxu0 0.0
        %2946 = vmatpush1.msra.mxu0 0.0
        %2947 = vmatprep.subr.mxu0 0.0
        %2948 = vmatpush1.msra.mxu0 0.0
        %2949 = vmatprep.subr.mxu0 0.0
        %2950 = vmatpush1.msra.mxu0 0.0
        %2951 = vmatprep.subr.mxu0 0.0
        %2952 = vmatpush1.msra.mxu0 0.0
        %2953 = vmatprep.subr.mxu0 0.0
        %2954 = vmatpush1.msra.mxu0 0.0
        %2955 = vmatprep.subr.mxu0 0.0
        %2956 = vmatpush1.msra.mxu0 0.0
        %2957 = vmatprep.subr.mxu0 0.0
        %2958 = vmatpush1.msra.mxu0 0.0
        %2959 = vmatprep.subr.mxu0 0.0
        %2960 = vmatpush1.msra.mxu0 0.0
        %2961 = vmatprep.subr.mxu0 %v2646
        %2962 = vmatpush1.msra.mxu0 %v2645
        %2963 = vmatprep.subr.mxu0 0.0
        %2964 = vmatpush2.msra.mxu0 0.0
        %2965 = vmatprep.subr.mxu0 0.0
        %2966 = vmatpush2.msra.mxu0 0.0
        %2967 = vmatprep.subr.mxu0 0.0
        %2968 = vmatpush2.msra.mxu0 0.0
        %2969 = vmatprep.subr.mxu0 0.0
        %2970 = vmatpush2.msra.mxu0 0.0
        %2971 = vmatprep.subr.mxu0 0.0
        %2972 = vmatpush2.msra.mxu0 0.0
        %2973 = vmatprep.subr.mxu0 0.0
        %2974 = vmatpush2.msra.mxu0 0.0
        %2975 = vmatprep.subr.mxu0 0.0
        %2976 = vmatpush2.msra.mxu0 0.0
        %2977 = vmatprep.subr.mxu0 0.0
        %2978 = vmatpush2.msra.mxu0 0.0
        %2979 = vmatprep.subr.mxu0 0.0
        %2980 = vmatpush2.msra.mxu0 0.0
        %2981 = vmatprep.subr.mxu0 0.0
        %2982 = vmatpush2.msra.mxu0 0.0
        %2983 = vmatprep.subr.mxu0 0.0
        %2984 = vmatpush2.msra.mxu0 0.0
        %2985 = vmatprep.subr.mxu0 0.0
        %2986 = vmatpush2.msra.mxu0 0.0
        %2987 = vmatprep.subr.mxu0 0.0
        %2988 = vmatpush2.msra.mxu0 0.0
        %2989 = vmatprep.subr.mxu0 0.0
        %2990 = vmatpush2.msra.mxu0 0.0
        %2991 = vmatprep.subr.mxu0 0.0
        %2992 = vmatpush2.msra.mxu0 0.0
        %2993 = vmatprep.subr.mxu0 0.0
        %2994 = vmatpush2.msra.mxu0 0.0
        %2995 = vmatprep.mubr.f32.mxu0 0.0
        %2996 = vmatmul.mubr.f32.gmra.mxu0 %v2653
        %v2997 = vpop.f32.mrf.mxu0
        %v2998 = vadd.f32 0.0, %v2997
        %v2999 = vpop.f32.mrf.mxu0
        %v3000 = vadd.f32 0.0, %v2999
        %3001 = vmatprep.mubr.f32.mxu0 0.0
        %3002 = vmatmul.mubr.f32.gmra.mxu0 %v2656
        %v3003 = vpop.f32.mrf.mxu0
        %v3004 = vadd.f32 0.0, %v3003
        %v3005 = vpop.f32.mrf.mxu0
        %v3006 = vadd.f32 0.0, %v3005
        %3007 = vmatprep.mubr.f32.mxu0 0.0
        %3008 = vmatmul.mubr.f32.gmra.mxu0 %v2659
        %v3009 = vpop.f32.mrf.mxu0
        %v3010 = vadd.f32 0.0, %v3009
        %v3011 = vpop.f32.mrf.mxu0
        %v3012 = vadd.f32 0.0, %v3011
        %3013 = vmatprep.mubr.f32.mxu0 0.0
        %3014 = vmatmul.mubr.f32.gmra.mxu0 %v2662
        %v3015 = vpop.f32.mrf.mxu0
        %v3016 = vadd.f32 0.0, %v3015
        %v3017 = vpop.f32.mrf.mxu0
        %v3018 = vadd.f32 0.0, %v3017
        %3019 = vdwg.mxu0
        %v3020 = vadd.f32 %v1839, %v2731
        %v3021 = vadd.f32 %v1841, %v2733
        %v3022 = vadd.f32 %v1928, %v2820
        %v3023 = vadd.f32 %v1930, %v2822
        %v3024 = vadd.f32 %v2017, %v2909
        %v3025 = vadd.f32 %v2019, %v2911
        %v3026 = vadd.f32 %v2106, %v2998
        %v3027 = vadd.f32 %v2108, %v3000
        %v3028 = vadd.f32 %v1845, %v2737
        %v3029 = vadd.f32 %v1847, %v2739
        %v3030 = vadd.f32 %v1934, %v2826
        %v3031 = vadd.f32 %v1936, %v2828
        %v3032 = vadd.f32 %v2023, %v2915
        %v3033 = vadd.f32 %v2025, %v2917
        %v3034 = vadd.f32 %v2112, %v3004
        %v3035 = vadd.f32 %v2114, %v3006
        %v3036 = vadd.f32 %v1851, %v2743
        %v3037 = vadd.f32 %v1853, %v2745
        %v3038 = vadd.f32 %v1940, %v2832
        %v3039 = vadd.f32 %v1942, %v2834
        %v3040 = vadd.f32 %v2029, %v2921
        %v3041 = vadd.f32 %v2031, %v2923
        %v3042 = vadd.f32 %v2118, %v3010
        %v3043 = vadd.f32 %v2120, %v3012
        %v3044 = vadd.f32 %v1857, %v2749
        %v3045 = vadd.f32 %v1859, %v2751
        %v3046 = vadd.f32 %v1946, %v2838
        %v3047 = vadd.f32 %v1948, %v2840
        %v3048 = vadd.f32 %v2035, %v2927
        %v3049 = vadd.f32 %v2037, %v2929
        %v3050 = vadd.f32 %v2124, %v3016
        %v3051 = vadd.f32 %v2126, %v3018
        %3052 = vst [vmem:[#allocation2 + $0x18] sm:$0xff] %v2639
        %3053 = vst [vmem:[#allocation2 + $0x20] sm:$0xff] %v2640
        %3054 = vst [vmem:[#allocation2 + $0x28] sm:$0xff] %v2641
        %3055 = vst [vmem:[#allocation2 + $0x30] sm:$0xff] %v2642
        %3056 = vst [vmem:[#allocation2 + $0x38] sm:$0xff] %v2643
        %3057 = vst [vmem:[#allocation2 + $0x40] sm:$0xff] %v2644
        %3058 = vst [vmem:[#allocation2 + $0x48] sm:$0xff] %v2645
        %3059 = vst [vmem:[#allocation2 + $0x50] sm:$0xff] %v2646
        %v3060 = vld [vmem:[#allocation2 + $0x8] sm:$0xff]
        %v3061 = vld [vmem:[#allocation2 + $0x10] sm:$0xff]
        %v3062 = vld [vmem:[#allocation2 + $0x18] sm:$0xff]
        %v3063 = vld [vmem:[#allocation2 + $0x20] sm:$0xff]
        %v3064 = vld [vmem:[#allocation2 + $0x28] sm:$0xff]
        %v3065 = vld [vmem:[#allocation2 + $0x30] sm:$0xff]
        %v3066 = vld [vmem:[#allocation2 + $0x38] sm:$0xff]
        %v3067 = vld [vmem:[#allocation2 + $0x40] sm:$0xff]
        %v3068 = vld [vmem:[#allocation2 + $0x48] sm:$0xff]
        %s3069 = scalar_lea.vmem %s3, 152
        %v3070 = vld [vmem:[%s3069] sm:$0xff]
        %3072 = vset.pattern.permute.xlu0 0
        %3073 = vperm.xlu0 %3072, %v3070
        %v3074 = vpop.permute.xlu0 %3073
        %v3076 = vmul.f32 %v3060, %v3074
        %v3077 = vmul.f32 %v3061, %v3074
        %v3078 = vmul.f32 %v3062, %v3074
        %v3079 = vmul.f32 %v3063, %v3074
        %v3080 = vmul.f32 %v3064, %v3074
        %v3081 = vmul.f32 %v3065, %v3074
        %v3082 = vmul.f32 %v3066, %v3074
        %v3083 = vmul.f32 %v3067, %v3074
        %v3084 = vmul.f32 %v3068, %v3074
        %v3085 = vld [vmem:[#allocation2 + $0x18] sm:$0xff]
        %v3086 = vld [vmem:[#allocation2 + $0x20] sm:$0xff]
        %v3087 = vld [vmem:[#allocation2 + $0x28] sm:$0xff]
        %v3088 = vld [vmem:[#allocation2 + $0x30] sm:$0xff]
        %v3089 = vld [vmem:[#allocation2 + $0x38] sm:$0xff]
        %v3090 = vld [vmem:[#allocation2 + $0x40] sm:$0xff]
        %v3091 = vld [vmem:[#allocation2 + $0x48] sm:$0xff]
        %v3092 = vld [vmem:[#allocation2 + $0x50] sm:$0xff]
        %s3093 = scalar_lea.vmem %s3, 176
        %v3094 = vld [vmem:[%s3093] sm:$0xff]
        %3096 = vset.pattern.permute.xlu0 0
        %3097 = vperm.xlu0 %3096, %v3094
        %v3098 = vpop.permute.xlu0 %3097
        %v3100 = vmul.f32 %v3085, %v3098
        %v3101 = vmul.f32 %v3086, %v3098
        %v3102 = vmul.f32 %v3087, %v3098
        %v3103 = vmul.f32 %v3088, %v3098
        %v3104 = vmul.f32 %v3089, %v3098
        %v3105 = vmul.f32 %v3090, %v3098
        %v3106 = vmul.f32 %v3091, %v3098
        %v3107 = vmul.f32 %v3092, %v3098
        %3116 = vrot.lane.b32.xlu0 %v3100, 64
        %v3117 = vpop.permute.xlu0 %3116
        %3118 = vrot.lane.b32.xlu0 %v3101, 64
        %v3119 = vpop.permute.xlu0 %3118
        %3120 = vrot.lane.b32.xlu0 %v3102, 64
        %v3121 = vpop.permute.xlu0 %3120
        %3122 = vrot.lane.b32.xlu0 %v3103, 64
        %v3123 = vpop.permute.xlu0 %3122
        %3124 = vrot.lane.b32.xlu0 %v3104, 64
        %v3125 = vpop.permute.xlu0 %3124
        %3126 = vrot.lane.b32.xlu0 %v3105, 64
        %v3127 = vpop.permute.xlu0 %3126
        %3128 = vrot.lane.b32.xlu0 %v3106, 64
        %v3129 = vpop.permute.xlu0 %3128
        %3130 = vrot.lane.b32.xlu0 %v3107, 64
        %v3131 = vpop.permute.xlu0 %3130
        %v3132 = vsel %vm694, %v3117, %v3119
        %v3133 = vsel %vm694, %v3119, %v3121
        %v3134 = vsel %vm694, %v3121, %v3123
        %v3135 = vsel %vm694, %v3123, %v3125
        %v3136 = vsel %vm694, %v3125, %v3127
        %v3137 = vsel %vm694, %v3127, %v3129
        %v3138 = vsel %vm694, %v3129, %v3131
        %v3148 = vadd.f32 %v3076, %v3117
        %v3149 = vadd.f32 %v3077, %v3132
        %v3150 = vadd.f32 %v3078, %v3133
        %v3151 = vadd.f32 %v3079, %v3134
        %v3152 = vadd.f32 %v3080, %v3135
        %v3153 = vadd.f32 %v3081, %v3136
        %v3154 = vadd.f32 %v3082, %v3137
        %v3155 = vadd.f32 %v3083, %v3138
        %v3156 = vadd.f32 %v3084, %v3131
        %v3157 = vld [vmem:[#allocation2 + $0x20] sm:$0xff]
        %v3158 = vld [vmem:[#allocation2 + $0x28] sm:$0xff]
        %v3159 = vld [vmem:[#allocation2 + $0x30] sm:$0xff]
        %v3160 = vld [vmem:[#allocation2 + $0x38] sm:$0xff]
        %v3161 = vld [vmem:[#allocation2 + $0x40] sm:$0xff]
        %v3162 = vld [vmem:[#allocation2 + $0x48] sm:$0xff]
        %v3163 = vld [vmem:[#allocation2 + $0x50] sm:$0xff]
        %v3164 = vld [vmem:[#allocation2 + $0x58] sm:$0xff]
        %v3165 = vld [vmem:[#allocation2 + $0x60] sm:$0xff]
        %s3166 = scalar_lea.vmem %s3, 200
        %v3167 = vld [vmem:[%s3166] sm:$0xff]
        %3169 = vset.pattern.permute.xlu0 0
        %3170 = vperm.xlu0 %3169, %v3167
        %v3171 = vpop.permute.xlu0 %3170
        %v3173 = vmul.f32 %v3157, %v3171
        %v3174 = vmul.f32 %v3158, %v3171
        %v3175 = vmul.f32 %v3159, %v3171
        %v3176 = vmul.f32 %v3160, %v3171
        %v3177 = vmul.f32 %v3161, %v3171
        %v3178 = vmul.f32 %v3162, %v3171
        %v3179 = vmul.f32 %v3163, %v3171
        %v3180 = vmul.f32 %v3164, %v3171
        %v3181 = vmul.f32 %v3165, %v3171
        %v3182 = vadd.f32 %v3148, %v3173
        %v3183 = vadd.f32 %v3149, %v3174
        %v3184 = vadd.f32 %v3150, %v3175
        %v3185 = vadd.f32 %v3151, %v3176
        %v3186 = vadd.f32 %v3152, %v3177
        %v3187 = vadd.f32 %v3153, %v3178
        %v3188 = vadd.f32 %v3154, %v3179
        %v3189 = vadd.f32 %v3155, %v3180
        %v3190 = vadd.f32 %v3156, %v3181
        %s3191 = scalar_lea.vmem %s3, 144
        %v3192 = vld [vmem:[%s3191] sm:$0xff]
        %3194 = vset.pattern.permute.xlu0 0
        %3195 = vperm.xlu0 %3194, %v3192
        %v3196 = vpop.permute.xlu0 %3195
        %v3198 = vmul.f32 %v3060, %v3196
        %v3199 = vmul.f32 %v3061, %v3196
        %v3200 = vmul.f32 %v3062, %v3196
        %v3201 = vmul.f32 %v3063, %v3196
        %v3202 = vmul.f32 %v3064, %v3196
        %v3203 = vmul.f32 %v3065, %v3196
        %v3204 = vmul.f32 %v3066, %v3196
        %v3205 = vmul.f32 %v3067, %v3196
        %v3206 = vmul.f32 %v3068, %v3196
        %v3207 = vld [vmem:[#allocation2 + $0x10] sm:$0xff]
        %s3208 = scalar_lea.vmem %s3, 168
        %v3209 = vld [vmem:[%s3208] sm:$0xff]
        %3211 = vset.pattern.permute.xlu0 0
        %3212 = vperm.xlu0 %3211, %v3209
        %v3213 = vpop.permute.xlu0 %3212
        %v3215 = vmul.f32 %v3207, %v3213
        %v3216 = vmul.f32 %v3085, %v3213
        %v3217 = vmul.f32 %v3086, %v3213
        %v3218 = vmul.f32 %v3087, %v3213
        %v3219 = vmul.f32 %v3088, %v3213
        %v3220 = vmul.f32 %v3089, %v3213
        %v3221 = vmul.f32 %v3090, %v3213
        %v3222 = vmul.f32 %v3091, %v3213
        %v3223 = vmul.f32 %v3092, %v3213
        %3233 = vrot.lane.b32.xlu0 %v3215, 64
        %v3234 = vpop.permute.xlu0 %3233
        %3235 = vrot.lane.b32.xlu0 %v3216, 64
        %v3236 = vpop.permute.xlu0 %3235
        %3237 = vrot.lane.b32.xlu0 %v3217, 64
        %v3238 = vpop.permute.xlu0 %3237
        %3239 = vrot.lane.b32.xlu0 %v3218, 64
        %v3240 = vpop.permute.xlu0 %3239
        %3241 = vrot.lane.b32.xlu0 %v3219, 64
        %v3242 = vpop.permute.xlu0 %3241
        %3243 = vrot.lane.b32.xlu0 %v3220, 64
        %v3244 = vpop.permute.xlu0 %3243
        %3245 = vrot.lane.b32.xlu0 %v3221, 64
        %v3246 = vpop.permute.xlu0 %3245
        %3247 = vrot.lane.b32.xlu0 %v3222, 64
        %v3248 = vpop.permute.xlu0 %3247
        %3249 = vrot.lane.b32.xlu0 %v3223, 64
        %v3250 = vpop.permute.xlu0 %3249
        %v3251 = vsel %vm694, %v3234, %v3236
        %v3252 = vsel %vm694, %v3236, %v3238
        %v3253 = vsel %vm694, %v3238, %v3240
        %v3254 = vsel %vm694, %v3240, %v3242
        %v3255 = vsel %vm694, %v3242, %v3244
        %v3256 = vsel %vm694, %v3244, %v3246
        %v3257 = vsel %vm694, %v3246, %v3248
        %v3258 = vsel %vm694, %v3248, %v3250
        %v3268 = vadd.f32 %v3198, %v3251
        %v3269 = vadd.f32 %v3199, %v3252
        %v3270 = vadd.f32 %v3200, %v3253
        %v3271 = vadd.f32 %v3201, %v3254
        %v3272 = vadd.f32 %v3202, %v3255
        %v3273 = vadd.f32 %v3203, %v3256
        %v3274 = vadd.f32 %v3204, %v3257
        %v3275 = vadd.f32 %v3205, %v3258
        %v3276 = vadd.f32 %v3206, %v3250
        %s3277 = scalar_lea.vmem %s3, 192
        %v3278 = vld [vmem:[%s3277] sm:$0xff]
        %3280 = vset.pattern.permute.xlu0 0
        %3281 = vperm.xlu0 %3280, %v3278
        %v3282 = vpop.permute.xlu0 %3281
        %v3284 = vmul.f32 %v3157, %v3282
        %v3285 = vmul.f32 %v3158, %v3282
        %v3286 = vmul.f32 %v3159, %v3282
        %v3287 = vmul.f32 %v3160, %v3282
        %v3288 = vmul.f32 %v3161, %v3282
        %v3289 = vmul.f32 %v3162, %v3282
        %v3290 = vmul.f32 %v3163, %v3282
        %v3291 = vmul.f32 %v3164, %v3282
        %v3292 = vmul.f32 %v3165, %v3282
        %v3293 = vadd.f32 %v3268, %v3284
        %v3294 = vadd.f32 %v3269, %v3285
        %v3295 = vadd.f32 %v3270, %v3286
        %v3296 = vadd.f32 %v3271, %v3287
        %v3297 = vadd.f32 %v3272, %v3288
        %v3298 = vadd.f32 %v3273, %v3289
        %v3299 = vadd.f32 %v3274, %v3290
        %v3300 = vadd.f32 %v3275, %v3291
        %v3301 = vadd.f32 %v3276, %v3292
        %s3302 = scalar_lea.vmem %s3, 160
        %v3303 = vld [vmem:[%s3302] sm:$0xff]
        %3305 = vset.pattern.permute.xlu0 0
        %3306 = vperm.xlu0 %3305, %v3303
        %v3307 = vpop.permute.xlu0 %3306
        %v3309 = vmul.f32 %v3060, %v3307
        %v3310 = vmul.f32 %v3061, %v3307
        %v3311 = vmul.f32 %v3062, %v3307
        %v3312 = vmul.f32 %v3063, %v3307
        %v3313 = vmul.f32 %v3064, %v3307
        %v3314 = vmul.f32 %v3065, %v3307
        %v3315 = vmul.f32 %v3066, %v3307
        %v3316 = vmul.f32 %v3067, %v3307
        %v3317 = vmul.f32 %v3068, %v3307
        %v3318 = vld [vmem:[#allocation2 + $0x18] sm:$0xff]
        %v3319 = vld [vmem:[#allocation2 + $0x20] sm:$0xff]
        %v3320 = vld [vmem:[#allocation2 + $0x28] sm:$0xff]
        %v3321 = vld [vmem:[#allocation2 + $0x30] sm:$0xff]
        %v3322 = vld [vmem:[#allocation2 + $0x38] sm:$0xff]
        %v3323 = vld [vmem:[#allocation2 + $0x40] sm:$0xff]
        %v3324 = vld [vmem:[#allocation2 + $0x48] sm:$0xff]
        %v3325 = vld [vmem:[#allocation2 + $0x50] sm:$0xff]
        %v3326 = vld [vmem:[#allocation2 + $0x58] sm:$0xff]
        %s3327 = scalar_lea.vmem %s3, 184
        %v3328 = vld [vmem:[%s3327] sm:$0xff]
        %3330 = vset.pattern.permute.xlu0 0
        %3331 = vperm.xlu0 %3330, %v3328
        %v3332 = vpop.permute.xlu0 %3331
        %v3334 = vmul.f32 %v3318, %v3332
        %v3335 = vmul.f32 %v3319, %v3332
        %v3336 = vmul.f32 %v3320, %v3332
        %v3337 = vmul.f32 %v3321, %v3332
        %v3338 = vmul.f32 %v3322, %v3332
        %v3339 = vmul.f32 %v3323, %v3332
        %v3340 = vmul.f32 %v3324, %v3332
        %v3341 = vmul.f32 %v3325, %v3332
        %v3342 = vmul.f32 %v3326, %v3332
        %3352 = vrot.lane.b32.xlu0 %v3334, 64
        %v3353 = vpop.permute.xlu0 %3352
        %3354 = vrot.lane.b32.xlu0 %v3335, 64
        %v3355 = vpop.permute.xlu0 %3354
        %3356 = vrot.lane.b32.xlu0 %v3336, 64
        %v3357 = vpop.permute.xlu0 %3356
        %3358 = vrot.lane.b32.xlu0 %v3337, 64
        %v3359 = vpop.permute.xlu0 %3358
        %3360 = vrot.lane.b32.xlu0 %v3338, 64
        %v3361 = vpop.permute.xlu0 %3360
        %3362 = vrot.lane.b32.xlu0 %v3339, 64
        %v3363 = vpop.permute.xlu0 %3362
        %3364 = vrot.lane.b32.xlu0 %v3340, 64
        %v3365 = vpop.permute.xlu0 %3364
        %3366 = vrot.lane.b32.xlu0 %v3341, 64
        %v3367 = vpop.permute.xlu0 %3366
        %3368 = vrot.lane.b32.xlu0 %v3342, 64
        %v3369 = vpop.permute.xlu0 %3368
        %v3370 = vsel %vm694, %v3353, %v3355
        %v3371 = vsel %vm694, %v3355, %v3357
        %v3372 = vsel %vm694, %v3357, %v3359
        %v3373 = vsel %vm694, %v3359, %v3361
        %v3374 = vsel %vm694, %v3361, %v3363
        %v3375 = vsel %vm694, %v3363, %v3365
        %v3376 = vsel %vm694, %v3365, %v3367
        %v3377 = vsel %vm694, %v3367, %v3369
        %v3387 = vadd.f32 %v3309, %v3353
        %v3388 = vadd.f32 %v3310, %v3370
        %v3389 = vadd.f32 %v3311, %v3371
        %v3390 = vadd.f32 %v3312, %v3372
        %v3391 = vadd.f32 %v3313, %v3373
        %v3392 = vadd.f32 %v3314, %v3374
        %v3393 = vadd.f32 %v3315, %v3375
        %v3394 = vadd.f32 %v3316, %v3376
        %v3395 = vadd.f32 %v3317, %v3377
        %s3396 = scalar_lea.vmem %s3, 208
        %v3397 = vld [vmem:[%s3396] sm:$0xff]
        %3399 = vset.pattern.permute.xlu0 0
        %3400 = vperm.xlu0 %3399, %v3397
        %v3401 = vpop.permute.xlu0 %3400
        %v3403 = vmul.f32 %v3157, %v3401
        %v3404 = vmul.f32 %v3158, %v3401
        %v3405 = vmul.f32 %v3159, %v3401
        %v3406 = vmul.f32 %v3160, %v3401
        %v3407 = vmul.f32 %v3161, %v3401
        %v3408 = vmul.f32 %v3162, %v3401
        %v3409 = vmul.f32 %v3163, %v3401
        %v3410 = vmul.f32 %v3164, %v3401
        %v3411 = vmul.f32 %v3165, %v3401
        %v3412 = vadd.f32 %v3387, %v3403
        %v3413 = vadd.f32 %v3388, %v3404
        %v3414 = vadd.f32 %v3389, %v3405
        %v3415 = vadd.f32 %v3390, %v3406
        %v3416 = vadd.f32 %v3391, %v3407
        %v3417 = vadd.f32 %v3392, %v3408
        %v3418 = vadd.f32 %v3393, %v3409
        %v3419 = vadd.f32 %v3394, %v3410
        %v3420 = vadd.f32 %v3395, %v3411
        %vm3421 = vcmp.ge.s32.totalorder %v296, 6
        %v3422 = vsel %vm3421, 1, 0
        %v3423 = vlaneseq
        %v3424 = vshrl.u32 %v3423, 7
        %v3425 = vsub.s32 0, %v3424
        %v3426 = vrot.slane %v3422, %v3425
        %v3427 = vlaneseq
        %v3428 = vshrl.u32 %v3427, 7
        %v3429 = vsub.s32 1, %v3428
        %v3430 = vrot.slane %v3422, %v3429
        %v3431 = vlaneseq
        %v3432 = vshrl.u32 %v3431, 7
        %v3433 = vsub.s32 2, %v3432
        %v3434 = vrot.slane %v3422, %v3433
        %v3435 = vlaneseq
        %v3436 = vshrl.u32 %v3435, 7
        %v3437 = vsub.s32 3, %v3436
        %v3438 = vrot.slane %v3422, %v3437
        %v3439 = vlaneseq
        %v3440 = vshrl.u32 %v3439, 7
        %v3441 = vsub.s32 4, %v3440
        %v3442 = vrot.slane %v3422, %v3441
        %v3443 = vlaneseq
        %v3444 = vshrl.u32 %v3443, 7
        %v3445 = vsub.s32 5, %v3444
        %v3446 = vrot.slane %v3422, %v3445
        %v3447 = vlaneseq
        %v3448 = vshrl.u32 %v3447, 7
        %v3449 = vsub.s32 6, %v3448
        %v3450 = vrot.slane %v3422, %v3449
        %v3451 = vlaneseq
        %v3452 = vshrl.u32 %v3451, 7
        %v3453 = vsub.s32 7, %v3452
        %v3454 = vrot.slane %v3422, %v3453
        %vm3455 = vcmp.eq.s32.totalorder %v3426, 1
        %vm3456 = vcmp.eq.s32.totalorder %v3430, 1
        %vm3457 = vcmp.eq.s32.totalorder %v3434, 1
        %vm3458 = vcmp.eq.s32.totalorder %v3438, 1
        %vm3459 = vcmp.eq.s32.totalorder %v3442, 1
        %vm3460 = vcmp.eq.s32.totalorder %v3446, 1
        %vm3461 = vcmp.eq.s32.totalorder %v3450, 1
        %vm3462 = vcmp.eq.s32.totalorder %v3454, 1
        %3472 = vrot.lane.b32.xlu0 %v3293, 70
        %v3473 = vpop.permute.xlu0 %3472
        %3474 = vrot.lane.b32.xlu0 %v3294, 70
        %v3475 = vpop.permute.xlu0 %3474
        %3476 = vrot.lane.b32.xlu0 %v3295, 70
        %v3477 = vpop.permute.xlu0 %3476
        %3478 = vrot.lane.b32.xlu0 %v3296, 70
        %v3479 = vpop.permute.xlu0 %3478
        %3480 = vrot.lane.b32.xlu0 %v3297, 70
        %v3481 = vpop.permute.xlu0 %3480
        %3482 = vrot.lane.b32.xlu0 %v3298, 70
        %v3483 = vpop.permute.xlu0 %3482
        %3484 = vrot.lane.b32.xlu0 %v3299, 70
        %v3485 = vpop.permute.xlu0 %3484
        %3486 = vrot.lane.b32.xlu0 %v3300, 70
        %v3487 = vpop.permute.xlu0 %3486
        %3488 = vrot.lane.b32.xlu0 %v3301, 70
        %v3489 = vpop.permute.xlu0 %3488
        %vm3490 = vcmask 572416
        %v3491 = vsel %vm3490, %v3473, %v3475
        %v3492 = vsel %vm3490, %v3475, %v3477
        %v3493 = vsel %vm3490, %v3477, %v3479
        %v3494 = vsel %vm3490, %v3479, %v3481
        %v3495 = vsel %vm3490, %v3481, %v3483
        %v3496 = vsel %vm3490, %v3483, %v3485
        %v3497 = vsel %vm3490, %v3485, %v3487
        %v3498 = vsel %vm3490, %v3487, %v3489
        %v3507 = vsel %vm3455, %v3491, 0.0
        %v3508 = vsel %vm3456, %v3492, 0.0
        %v3509 = vsel %vm3457, %v3493, 0.0
        %v3510 = vsel %vm3458, %v3494, 0.0
        %v3511 = vsel %vm3459, %v3495, 0.0
        %v3512 = vsel %vm3460, %v3496, 0.0
        %v3513 = vsel %vm3461, %v3497, 0.0
        %v3514 = vsel %vm3462, %v3498, 0.0
        %3523 = vrot.lane.b32.xlu0 %v3507, 64
        %v3524 = vpop.permute.xlu0 %3523
        %3525 = vrot.lane.b32.xlu0 %v3508, 64
        %v3526 = vpop.permute.xlu0 %3525
        %3527 = vrot.lane.b32.xlu0 %v3509, 64
        %v3528 = vpop.permute.xlu0 %3527
        %3529 = vrot.lane.b32.xlu0 %v3510, 64
        %v3530 = vpop.permute.xlu0 %3529
        %3531 = vrot.lane.b32.xlu0 %v3511, 64
        %v3532 = vpop.permute.xlu0 %3531
        %3533 = vrot.lane.b32.xlu0 %v3512, 64
        %v3534 = vpop.permute.xlu0 %3533
        %3535 = vrot.lane.b32.xlu0 %v3513, 64
        %v3536 = vpop.permute.xlu0 %3535
        %3537 = vrot.lane.b32.xlu0 %v3514, 64
        %v3538 = vpop.permute.xlu0 %3537
        %v3539 = vsel %vm694, %v3524, %v3526
        %v3540 = vsel %vm694, %v3526, %v3528
        %v3541 = vsel %vm694, %v3528, %v3530
        %v3542 = vsel %vm694, %v3530, %v3532
        %v3543 = vsel %vm694, %v3532, %v3534
        %v3544 = vsel %vm694, %v3534, %v3536
        %v3545 = vsel %vm694, %v3536, %v3538
        %v3555 = vadd.f32 %v3182, %v3524
        %v3556 = vadd.f32 %v3183, %v3539
        %v3557 = vadd.f32 %v3184, %v3540
        %v3558 = vadd.f32 %v3185, %v3541
        %v3559 = vadd.f32 %v3186, %v3542
        %v3560 = vadd.f32 %v3187, %v3543
        %v3561 = vadd.f32 %v3188, %v3544
        %v3562 = vadd.f32 %v3189, %v3545
        %v3563 = vadd.f32 %v3190, %v3538
        %vm3564 = vcmp.lt.s32.totalorder %v296, 26
        %v3565 = vsel %vm3564, 1, 0
        %v3566 = vlaneseq
        %v3567 = vshrl.u32 %v3566, 7
        %v3568 = vsub.s32 0, %v3567
        %v3569 = vrot.slane %v3565, %v3568
        %v3570 = vlaneseq
        %v3571 = vshrl.u32 %v3570, 7
        %v3572 = vsub.s32 1, %v3571
        %v3573 = vrot.slane %v3565, %v3572
        %v3574 = vlaneseq
        %v3575 = vshrl.u32 %v3574, 7
        %v3576 = vsub.s32 2, %v3575
        %v3577 = vrot.slane %v3565, %v3576
        %v3578 = vlaneseq
        %v3579 = vshrl.u32 %v3578, 7
        %v3580 = vsub.s32 3, %v3579
        %v3581 = vrot.slane %v3565, %v3580
        %v3582 = vlaneseq
        %v3583 = vshrl.u32 %v3582, 7
        %v3584 = vsub.s32 4, %v3583
        %v3585 = vrot.slane %v3565, %v3584
        %v3586 = vlaneseq
        %v3587 = vshrl.u32 %v3586, 7
        %v3588 = vsub.s32 5, %v3587
        %v3589 = vrot.slane %v3565, %v3588
        %v3590 = vlaneseq
        %v3591 = vshrl.u32 %v3590, 7
        %v3592 = vsub.s32 6, %v3591
        %v3593 = vrot.slane %v3565, %v3592
        %v3594 = vlaneseq
        %v3595 = vshrl.u32 %v3594, 7
        %v3596 = vsub.s32 7, %v3595
        %v3597 = vrot.slane %v3565, %v3596
        %vm3598 = vcmp.eq.s32.totalorder %v3569, 1
        %vm3599 = vcmp.eq.s32.totalorder %v3573, 1
        %vm3600 = vcmp.eq.s32.totalorder %v3577, 1
        %vm3601 = vcmp.eq.s32.totalorder %v3581, 1
        %vm3602 = vcmp.eq.s32.totalorder %v3585, 1
        %vm3603 = vcmp.eq.s32.totalorder %v3589, 1
        %vm3604 = vcmp.eq.s32.totalorder %v3593, 1
        %vm3605 = vcmp.eq.s32.totalorder %v3597, 1
        %3615 = vrot.lane.b32.xlu0 %v3412, 58
        %v3616 = vpop.permute.xlu0 %3615
        %3617 = vrot.lane.b32.xlu0 %v3413, 58
        %v3618 = vpop.permute.xlu0 %3617
        %3619 = vrot.lane.b32.xlu0 %v3414, 58
        %v3620 = vpop.permute.xlu0 %3619
        %3621 = vrot.lane.b32.xlu0 %v3415, 58
        %v3622 = vpop.permute.xlu0 %3621
        %3623 = vrot.lane.b32.xlu0 %v3416, 58
        %v3624 = vpop.permute.xlu0 %3623
        %3625 = vrot.lane.b32.xlu0 %v3417, 58
        %v3626 = vpop.permute.xlu0 %3625
        %3627 = vrot.lane.b32.xlu0 %v3418, 58
        %v3628 = vpop.permute.xlu0 %3627
        %3629 = vrot.lane.b32.xlu0 %v3419, 58
        %v3630 = vpop.permute.xlu0 %3629
        %3631 = vrot.lane.b32.xlu0 %v3420, 58
        %v3632 = vpop.permute.xlu0 %3631
        %vm3633 = vcmask 474112
        %v3634 = vsel %vm3633, %v3616, %v3618
        %v3635 = vsel %vm3633, %v3618, %v3620
        %v3636 = vsel %vm3633, %v3620, %v3622
        %v3637 = vsel %vm3633, %v3622, %v3624
        %v3638 = vsel %vm3633, %v3624, %v3626
        %v3639 = vsel %vm3633, %v3626, %v3628
        %v3640 = vsel %vm3633, %v3628, %v3630
        %v3641 = vsel %vm3633, %v3630, %v3632
        %v3650 = vsel %vm3598, %v3634, 0.0
        %v3651 = vsel %vm3599, %v3635, 0.0
        %v3652 = vsel %vm3600, %v3636, 0.0
        %v3653 = vsel %vm3601, %v3637, 0.0
        %v3654 = vsel %vm3602, %v3638, 0.0
        %v3655 = vsel %vm3603, %v3639, 0.0
        %v3656 = vsel %vm3604, %v3640, 0.0
        %v3657 = vsel %vm3605, %v3641, 0.0
        %3666 = vrot.lane.b32.xlu0 %v3650, 64
        %v3667 = vpop.permute.xlu0 %3666
        %3668 = vrot.lane.b32.xlu0 %v3651, 64
        %v3669 = vpop.permute.xlu0 %3668
        %3670 = vrot.lane.b32.xlu0 %v3652, 64
        %v3671 = vpop.permute.xlu0 %3670
        %3672 = vrot.lane.b32.xlu0 %v3653, 64
        %v3673 = vpop.permute.xlu0 %3672
        %3674 = vrot.lane.b32.xlu0 %v3654, 64
        %v3675 = vpop.permute.xlu0 %3674
        %3676 = vrot.lane.b32.xlu0 %v3655, 64
        %v3677 = vpop.permute.xlu0 %3676
        %3678 = vrot.lane.b32.xlu0 %v3656, 64
        %v3679 = vpop.permute.xlu0 %3678
        %3680 = vrot.lane.b32.xlu0 %v3657, 64
        %v3681 = vpop.permute.xlu0 %3680
        %v3682 = vsel %vm694, %v3667, %v3669
        %v3683 = vsel %vm694, %v3669, %v3671
        %v3684 = vsel %vm694, %v3671, %v3673
        %v3685 = vsel %vm694, %v3673, %v3675
        %v3686 = vsel %vm694, %v3675, %v3677
        %v3687 = vsel %vm694, %v3677, %v3679
        %v3688 = vsel %vm694, %v3679, %v3681
        %v3698 = vadd.f32 %v3555, %v3667
        %v3699 = vadd.f32 %v3556, %v3682
        %v3700 = vadd.f32 %v3557, %v3683
        %v3701 = vadd.f32 %v3558, %v3684
        %v3702 = vadd.f32 %v3559, %v3685
        %v3703 = vadd.f32 %v3560, %v3686
        %v3704 = vadd.f32 %v3561, %v3687
        %v3705 = vadd.f32 %v3562, %v3688
        %v3706 = vadd.f32 %v3563, %v3681
        %s3707 = scalar_lea.vmem %s4, 16
        %v3708 = vld [vmem:[%s3707] sm:$0xff]
        %3710 = vset.pattern.permute.xlu0 0
        %3711 = vperm.xlu0 %3710, %v3708
        %v3712 = vpop.permute.xlu0 %3711
        %v3714 = vmul.f32 %v3698, %v3712
        %v3715 = vmul.f32 %v3699, %v3712
        %v3716 = vmul.f32 %v3700, %v3712
        %v3717 = vmul.f32 %v3701, %v3712
        %v3718 = vmul.f32 %v3702, %v3712
        %v3719 = vmul.f32 %v3703, %v3712
        %v3720 = vmul.f32 %v3704, %v3712
        %v3721 = vmul.f32 %v3705, %v3712
        %v3722 = vmul.f32 %v3706, %v3712
        %s3723 = scalar_lea.vmem %s5, 16
        %v3724 = vld [vmem:[%s3723] sm:$0xff]
        %3726 = vset.pattern.permute.xlu0 0
        %3727 = vperm.xlu0 %3726, %v3724
        %v3728 = vpop.permute.xlu0 %3727
        %v3730 = vadd.f32 %v3714, %v3728
        %v3731 = vadd.f32 %v3715, %v3728
        %v3732 = vadd.f32 %v3716, %v3728
        %v3733 = vadd.f32 %v3717, %v3728
        %v3734 = vadd.f32 %v3718, %v3728
        %v3735 = vadd.f32 %v3719, %v3728
        %v3736 = vadd.f32 %v3720, %v3728
        %v3737 = vadd.f32 %v3721, %v3728
        %v3738 = vadd.f32 %v3722, %v3728
        %v3739 = vsub.f32 0.0, %v3730
        %v3740 = vsub.f32 0.0, %v3731
        %v3741 = vsub.f32 0.0, %v3732
        %v3742 = vsub.f32 0.0, %v3733
        %v3743 = vsub.f32 0.0, %v3734
        %v3744 = vsub.f32 0.0, %v3735
        %v3745 = vsub.f32 0.0, %v3736
        %v3746 = vsub.f32 0.0, %v3737
        %v3747 = vsub.f32 0.0, %v3738
        %v3748 = vmul.f32 %v3739, 1.442695
        %v3749 = vpow.pop %v3748
        %v3750 = vmul.f32 %v3740, 1.442695
        %v3751 = vpow.pop %v3750
        %v3752 = vmul.f32 %v3741, 1.442695
        %v3753 = vpow.pop %v3752
        %v3754 = vmul.f32 %v3742, 1.442695
        %v3755 = vpow.pop %v3754
        %v3756 = vmul.f32 %v3743, 1.442695
        %v3757 = vpow.pop %v3756
        %v3758 = vmul.f32 %v3744, 1.442695
        %v3759 = vpow.pop %v3758
        %v3760 = vmul.f32 %v3745, 1.442695
        %v3761 = vpow.pop %v3760
        %v3762 = vmul.f32 %v3746, 1.442695
        %v3763 = vpow.pop %v3762
        %v3764 = vmul.f32 %v3747, 1.442695
        %v3765 = vpow.pop %v3764
        %v3766 = vadd.f32 %v3749, 1.0
        %v3767 = vadd.f32 %v3751, 1.0
        %v3768 = vadd.f32 %v3753, 1.0
        %v3769 = vadd.f32 %v3755, 1.0
        %v3770 = vadd.f32 %v3757, 1.0
        %v3771 = vadd.f32 %v3759, 1.0
        %v3772 = vadd.f32 %v3761, 1.0
        %v3773 = vadd.f32 %v3763, 1.0
        %v3774 = vadd.f32 %v3765, 1.0
        %v3775 = vrcp.pop %v3766
        %v3776 = vrcp.pop %v3767
        %v3777 = vrcp.pop %v3768
        %v3778 = vrcp.pop %v3769
        %v3779 = vrcp.pop %v3770
        %v3780 = vrcp.pop %v3771
        %v3781 = vrcp.pop %v3772
        %v3782 = vrcp.pop %v3773
        %v3783 = vrcp.pop %v3774
        %v3784 = vmul.f32 %v3730, %v3775
        %v3785 = vmul.f32 %v3731, %v3776
        %v3786 = vmul.f32 %v3732, %v3777
        %v3787 = vmul.f32 %v3733, %v3778
        %v3788 = vmul.f32 %v3734, %v3779
        %v3789 = vmul.f32 %v3735, %v3780
        %v3790 = vmul.f32 %v3736, %v3781
        %v3791 = vmul.f32 %v3737, %v3782
        %v3792 = vmul.f32 %v3738, %v3783
        %s3793 = scalar_lea.vmem %s6, 96
        %v3794 = vld [vmem:[%s3793] sm:$0xff]
        %v3795 = vld [vmem:[%s3793 + $0x8] sm:$0xff]
        %v3796 = vld [vmem:[%s3793 + $0x10] sm:$0xff]
        %v3797 = vld [vmem:[%s3793 + $0x18] sm:$0xff]
        %3807 = vrot.lane.b32.xlu0 %v3784, 64
        %v3808 = vpop.permute.xlu0 %3807
        %3809 = vrot.lane.b32.xlu0 %v3785, 64
        %v3810 = vpop.permute.xlu0 %3809
        %3811 = vrot.lane.b32.xlu0 %v3786, 64
        %v3812 = vpop.permute.xlu0 %3811
        %3813 = vrot.lane.b32.xlu0 %v3787, 64
        %v3814 = vpop.permute.xlu0 %3813
        %3815 = vrot.lane.b32.xlu0 %v3788, 64
        %v3816 = vpop.permute.xlu0 %3815
        %3817 = vrot.lane.b32.xlu0 %v3789, 64
        %v3818 = vpop.permute.xlu0 %3817
        %3819 = vrot.lane.b32.xlu0 %v3790, 64
        %v3820 = vpop.permute.xlu0 %3819
        %3821 = vrot.lane.b32.xlu0 %v3791, 64
        %v3822 = vpop.permute.xlu0 %3821
        %3823 = vrot.lane.b32.xlu0 %v3792, 64
        %v3824 = vpop.permute.xlu0 %3823
        %v3825 = vsel %vm694, %v3808, %v3810
        %v3826 = vsel %vm694, %v3810, %v3812
        %v3827 = vsel %vm694, %v3812, %v3814
        %v3828 = vsel %vm694, %v3814, %v3816
        %v3829 = vsel %vm694, %v3816, %v3818
        %v3830 = vsel %vm694, %v3818, %v3820
        %v3831 = vsel %vm694, %v3820, %v3822
        %v3832 = vsel %vm694, %v3822, %v3824
        %v3842 = vsel %vm1391, %v3794, 0
        %v3845 = vsel %vm1391, %v3795, 0
        %v3848 = vsel %vm1391, %v3796, 0
        %v3851 = vsel %vm1391, %v3797, 0
        %3853 = vmatprep.subr.mxu0 0.0
        %3854 = vmatpush1.msra.mxu0 0.0
        %3855 = vmatprep.subr.mxu0 0.0
        %3856 = vmatpush1.msra.mxu0 0.0
        %3857 = vmatprep.subr.mxu0 0.0
        %3858 = vmatpush1.msra.mxu0 0.0
        %3859 = vmatprep.subr.mxu0 0.0
        %3860 = vmatpush1.msra.mxu0 0.0
        %3861 = vmatprep.subr.mxu0 0.0
        %3862 = vmatpush1.msra.mxu0 0.0
        %3863 = vmatprep.subr.mxu0 0.0
        %3864 = vmatpush1.msra.mxu0 0.0
        %3865 = vmatprep.subr.mxu0 0.0
        %3866 = vmatpush1.msra.mxu0 0.0
        %3867 = vmatprep.subr.mxu0 0.0
        %3868 = vmatpush1.msra.mxu0 0.0
        %3869 = vmatprep.subr.mxu0 0.0
        %3870 = vmatpush1.msra.mxu0 0.0
        %3871 = vmatprep.subr.mxu0 0.0
        %3872 = vmatpush1.msra.mxu0 0.0
        %3873 = vmatprep.subr.mxu0 0.0
        %3874 = vmatpush1.msra.mxu0 0.0
        %3875 = vmatprep.subr.mxu0 0.0
        %3876 = vmatpush1.msra.mxu0 0.0
        %3877 = vmatprep.subr.mxu0 0.0
        %3878 = vmatpush1.msra.mxu0 0.0
        %3879 = vmatprep.subr.mxu0 0.0
        %3880 = vmatpush1.msra.mxu0 0.0
        %3881 = vmatprep.subr.mxu0 0.0
        %3882 = vmatpush1.msra.mxu0 0.0
        %3883 = vmatprep.subr.mxu0 %v3826
        %3884 = vmatpush1.msra.mxu0 %v3825
        %3885 = vmatprep.subr.mxu0 0.0
        %3886 = vmatpush2.msra.mxu0 0.0
        %3887 = vmatprep.subr.mxu0 0.0
        %3888 = vmatpush2.msra.mxu0 0.0
        %3889 = vmatprep.subr.mxu0 0.0
        %3890 = vmatpush2.msra.mxu0 0.0
        %3891 = vmatprep.subr.mxu0 0.0
        %3892 = vmatpush2.msra.mxu0 0.0
        %3893 = vmatprep.subr.mxu0 0.0
        %3894 = vmatpush2.msra.mxu0 0.0
        %3895 = vmatprep.subr.mxu0 0.0
        %3896 = vmatpush2.msra.mxu0 0.0
        %3897 = vmatprep.subr.mxu0 0.0
        %3898 = vmatpush2.msra.mxu0 0.0
        %3899 = vmatprep.subr.mxu0 0.0
        %3900 = vmatpush2.msra.mxu0 0.0
        %3901 = vmatprep.subr.mxu0 0.0
        %3902 = vmatpush2.msra.mxu0 0.0
        %3903 = vmatprep.subr.mxu0 0.0
        %3904 = vmatpush2.msra.mxu0 0.0
        %3905 = vmatprep.subr.mxu0 0.0
        %3906 = vmatpush2.msra.mxu0 0.0
        %3907 = vmatprep.subr.mxu0 0.0
        %3908 = vmatpush2.msra.mxu0 0.0
        %3909 = vmatprep.subr.mxu0 0.0
        %3910 = vmatpush2.msra.mxu0 0.0
        %3911 = vmatprep.subr.mxu0 0.0
        %3912 = vmatpush2.msra.mxu0 0.0
        %3913 = vmatprep.subr.mxu0 0.0
        %3914 = vmatpush2.msra.mxu0 0.0
        %3915 = vmatprep.subr.mxu0 0.0
        %3916 = vmatpush2.msra.mxu0 0.0
        %3917 = vmatprep.mubr.f32.mxu0 0.0
        %3918 = vmatmul.mubr.f32.gmra.mxu0 %v3842
        %v3919 = vpop.f32.mrf.mxu0
        %v3920 = vadd.f32 0.0, %v3919
        %v3921 = vpop.f32.mrf.mxu0
        %v3922 = vadd.f32 0.0, %v3921
        %3923 = vmatprep.mubr.f32.mxu0 0.0
        %3924 = vmatmul.mubr.f32.gmra.mxu0 %v3845
        %v3925 = vpop.f32.mrf.mxu0
        %v3926 = vadd.f32 0.0, %v3925
        %v3927 = vpop.f32.mrf.mxu0
        %v3928 = vadd.f32 0.0, %v3927
        %3929 = vmatprep.mubr.f32.mxu0 0.0
        %3930 = vmatmul.mubr.f32.gmra.mxu0 %v3848
        %v3931 = vpop.f32.mrf.mxu0
        %v3932 = vadd.f32 0.0, %v3931
        %v3933 = vpop.f32.mrf.mxu0
        %v3934 = vadd.f32 0.0, %v3933
        %3935 = vmatprep.mubr.f32.mxu0 0.0
        %3936 = vmatmul.mubr.f32.gmra.mxu0 %v3851
        %v3937 = vpop.f32.mrf.mxu0
        %v3938 = vadd.f32 0.0, %v3937
        %v3939 = vpop.f32.mrf.mxu0
        %v3940 = vadd.f32 0.0, %v3939
        %3941 = vdwg.mxu0
        %3942 = vmatprep.subr.mxu0 0.0
        %3943 = vmatpush1.msra.mxu0 0.0
        %3944 = vmatprep.subr.mxu0 0.0
        %3945 = vmatpush1.msra.mxu0 0.0
        %3946 = vmatprep.subr.mxu0 0.0
        %3947 = vmatpush1.msra.mxu0 0.0
        %3948 = vmatprep.subr.mxu0 0.0
        %3949 = vmatpush1.msra.mxu0 0.0
        %3950 = vmatprep.subr.mxu0 0.0
        %3951 = vmatpush1.msra.mxu0 0.0
        %3952 = vmatprep.subr.mxu0 0.0
        %3953 = vmatpush1.msra.mxu0 0.0
        %3954 = vmatprep.subr.mxu0 0.0
        %3955 = vmatpush1.msra.mxu0 0.0
        %3956 = vmatprep.subr.mxu0 0.0
        %3957 = vmatpush1.msra.mxu0 0.0
        %3958 = vmatprep.subr.mxu0 0.0
        %3959 = vmatpush1.msra.mxu0 0.0
        %3960 = vmatprep.subr.mxu0 0.0
        %3961 = vmatpush1.msra.mxu0 0.0
        %3962 = vmatprep.subr.mxu0 0.0
        %3963 = vmatpush1.msra.mxu0 0.0
        %3964 = vmatprep.subr.mxu0 0.0
        %3965 = vmatpush1.msra.mxu0 0.0
        %3966 = vmatprep.subr.mxu0 0.0
        %3967 = vmatpush1.msra.mxu0 0.0
        %3968 = vmatprep.subr.mxu0 0.0
        %3969 = vmatpush1.msra.mxu0 0.0
        %3970 = vmatprep.subr.mxu0 0.0
        %3971 = vmatpush1.msra.mxu0 0.0
        %3972 = vmatprep.subr.mxu0 %v3828
        %3973 = vmatpush1.msra.mxu0 %v3827
        %3974 = vmatprep.subr.mxu0 0.0
        %3975 = vmatpush2.msra.mxu0 0.0
        %3976 = vmatprep.subr.mxu0 0.0
        %3977 = vmatpush2.msra.mxu0 0.0
        %3978 = vmatprep.subr.mxu0 0.0
        %3979 = vmatpush2.msra.mxu0 0.0
        %3980 = vmatprep.subr.mxu0 0.0
        %3981 = vmatpush2.msra.mxu0 0.0
        %3982 = vmatprep.subr.mxu0 0.0
        %3983 = vmatpush2.msra.mxu0 0.0
        %3984 = vmatprep.subr.mxu0 0.0
        %3985 = vmatpush2.msra.mxu0 0.0
        %3986 = vmatprep.subr.mxu0 0.0
        %3987 = vmatpush2.msra.mxu0 0.0
        %3988 = vmatprep.subr.mxu0 0.0
        %3989 = vmatpush2.msra.mxu0 0.0
        %3990 = vmatprep.subr.mxu0 0.0
        %3991 = vmatpush2.msra.mxu0 0.0
        %3992 = vmatprep.subr.mxu0 0.0
        %3993 = vmatpush2.msra.mxu0 0.0
        %3994 = vmatprep.subr.mxu0 0.0
        %3995 = vmatpush2.msra.mxu0 0.0
        %3996 = vmatprep.subr.mxu0 0.0
        %3997 = vmatpush2.msra.mxu0 0.0
        %3998 = vmatprep.subr.mxu0 0.0
        %3999 = vmatpush2.msra.mxu0 0.0
        %4000 = vmatprep.subr.mxu0 0.0
        %4001 = vmatpush2.msra.mxu0 0.0
        %4002 = vmatprep.subr.mxu0 0.0
        %4003 = vmatpush2.msra.mxu0 0.0
        %4004 = vmatprep.subr.mxu0 0.0
        %4005 = vmatpush2.msra.mxu0 0.0
        %4006 = vmatprep.mubr.f32.mxu0 0.0
        %4007 = vmatmul.mubr.f32.gmra.mxu0 %v3842
        %v4008 = vpop.f32.mrf.mxu0
        %v4009 = vadd.f32 0.0, %v4008
        %v4010 = vpop.f32.mrf.mxu0
        %v4011 = vadd.f32 0.0, %v4010
        %4012 = vmatprep.mubr.f32.mxu0 0.0
        %4013 = vmatmul.mubr.f32.gmra.mxu0 %v3845
        %v4014 = vpop.f32.mrf.mxu0
        %v4015 = vadd.f32 0.0, %v4014
        %v4016 = vpop.f32.mrf.mxu0
        %v4017 = vadd.f32 0.0, %v4016
        %4018 = vmatprep.mubr.f32.mxu0 0.0
        %4019 = vmatmul.mubr.f32.gmra.mxu0 %v3848
        %v4020 = vpop.f32.mrf.mxu0
        %v4021 = vadd.f32 0.0, %v4020
        %v4022 = vpop.f32.mrf.mxu0
        %v4023 = vadd.f32 0.0, %v4022
        %4024 = vmatprep.mubr.f32.mxu0 0.0
        %4025 = vmatmul.mubr.f32.gmra.mxu0 %v3851
        %v4026 = vpop.f32.mrf.mxu0
        %v4027 = vadd.f32 0.0, %v4026
        %v4028 = vpop.f32.mrf.mxu0
        %v4029 = vadd.f32 0.0, %v4028
        %4030 = vdwg.mxu0
        %4031 = vmatprep.subr.mxu0 0.0
        %4032 = vmatpush1.msra.mxu0 0.0
        %4033 = vmatprep.subr.mxu0 0.0
        %4034 = vmatpush1.msra.mxu0 0.0
        %4035 = vmatprep.subr.mxu0 0.0
        %4036 = vmatpush1.msra.mxu0 0.0
        %4037 = vmatprep.subr.mxu0 0.0
        %4038 = vmatpush1.msra.mxu0 0.0
        %4039 = vmatprep.subr.mxu0 0.0
        %4040 = vmatpush1.msra.mxu0 0.0
        %4041 = vmatprep.subr.mxu0 0.0
        %4042 = vmatpush1.msra.mxu0 0.0
        %4043 = vmatprep.subr.mxu0 0.0
        %4044 = vmatpush1.msra.mxu0 0.0
        %4045 = vmatprep.subr.mxu0 0.0
        %4046 = vmatpush1.msra.mxu0 0.0
        %4047 = vmatprep.subr.mxu0 0.0
        %4048 = vmatpush1.msra.mxu0 0.0
        %4049 = vmatprep.subr.mxu0 0.0
        %4050 = vmatpush1.msra.mxu0 0.0
        %4051 = vmatprep.subr.mxu0 0.0
        %4052 = vmatpush1.msra.mxu0 0.0
        %4053 = vmatprep.subr.mxu0 0.0
        %4054 = vmatpush1.msra.mxu0 0.0
        %4055 = vmatprep.subr.mxu0 0.0
        %4056 = vmatpush1.msra.mxu0 0.0
        %4057 = vmatprep.subr.mxu0 0.0
        %4058 = vmatpush1.msra.mxu0 0.0
        %4059 = vmatprep.subr.mxu0 0.0
        %4060 = vmatpush1.msra.mxu0 0.0
        %4061 = vmatprep.subr.mxu0 %v3830
        %4062 = vmatpush1.msra.mxu0 %v3829
        %4063 = vmatprep.subr.mxu0 0.0
        %4064 = vmatpush2.msra.mxu0 0.0
        %4065 = vmatprep.subr.mxu0 0.0
        %4066 = vmatpush2.msra.mxu0 0.0
        %4067 = vmatprep.subr.mxu0 0.0
        %4068 = vmatpush2.msra.mxu0 0.0
        %4069 = vmatprep.subr.mxu0 0.0
        %4070 = vmatpush2.msra.mxu0 0.0
        %4071 = vmatprep.subr.mxu0 0.0
        %4072 = vmatpush2.msra.mxu0 0.0
        %4073 = vmatprep.subr.mxu0 0.0
        %4074 = vmatpush2.msra.mxu0 0.0
        %4075 = vmatprep.subr.mxu0 0.0
        %4076 = vmatpush2.msra.mxu0 0.0
        %4077 = vmatprep.subr.mxu0 0.0
        %4078 = vmatpush2.msra.mxu0 0.0
        %4079 = vmatprep.subr.mxu0 0.0
        %4080 = vmatpush2.msra.mxu0 0.0
        %4081 = vmatprep.subr.mxu0 0.0
        %4082 = vmatpush2.msra.mxu0 0.0
        %4083 = vmatprep.subr.mxu0 0.0
        %4084 = vmatpush2.msra.mxu0 0.0
        %4085 = vmatprep.subr.mxu0 0.0
        %4086 = vmatpush2.msra.mxu0 0.0
        %4087 = vmatprep.subr.mxu0 0.0
        %4088 = vmatpush2.msra.mxu0 0.0
        %4089 = vmatprep.subr.mxu0 0.0
        %4090 = vmatpush2.msra.mxu0 0.0
        %4091 = vmatprep.subr.mxu0 0.0
        %4092 = vmatpush2.msra.mxu0 0.0
        %4093 = vmatprep.subr.mxu0 0.0
        %4094 = vmatpush2.msra.mxu0 0.0
        %4095 = vmatprep.mubr.f32.mxu0 0.0
        %4096 = vmatmul.mubr.f32.gmra.mxu0 %v3842
        %v4097 = vpop.f32.mrf.mxu0
        %v4098 = vadd.f32 0.0, %v4097
        %v4099 = vpop.f32.mrf.mxu0
        %v4100 = vadd.f32 0.0, %v4099
        %4101 = vmatprep.mubr.f32.mxu0 0.0
        %4102 = vmatmul.mubr.f32.gmra.mxu0 %v3845
        %v4103 = vpop.f32.mrf.mxu0
        %v4104 = vadd.f32 0.0, %v4103
        %v4105 = vpop.f32.mrf.mxu0
        %v4106 = vadd.f32 0.0, %v4105
        %4107 = vmatprep.mubr.f32.mxu0 0.0
        %4108 = vmatmul.mubr.f32.gmra.mxu0 %v3848
        %v4109 = vpop.f32.mrf.mxu0
        %v4110 = vadd.f32 0.0, %v4109
        %v4111 = vpop.f32.mrf.mxu0
        %v4112 = vadd.f32 0.0, %v4111
        %4113 = vmatprep.mubr.f32.mxu0 0.0
        %4114 = vmatmul.mubr.f32.gmra.mxu0 %v3851
        %v4115 = vpop.f32.mrf.mxu0
        %v4116 = vadd.f32 0.0, %v4115
        %v4117 = vpop.f32.mrf.mxu0
        %v4118 = vadd.f32 0.0, %v4117
        %4119 = vdwg.mxu0
        %4120 = vmatprep.subr.mxu0 0.0
        %4121 = vmatpush1.msra.mxu0 0.0
        %4122 = vmatprep.subr.mxu0 0.0
        %4123 = vmatpush1.msra.mxu0 0.0
        %4124 = vmatprep.subr.mxu0 0.0
        %4125 = vmatpush1.msra.mxu0 0.0
        %4126 = vmatprep.subr.mxu0 0.0
        %4127 = vmatpush1.msra.mxu0 0.0
        %4128 = vmatprep.subr.mxu0 0.0
        %4129 = vmatpush1.msra.mxu0 0.0
        %4130 = vmatprep.subr.mxu0 0.0
        %4131 = vmatpush1.msra.mxu0 0.0
        %4132 = vmatprep.subr.mxu0 0.0
        %4133 = vmatpush1.msra.mxu0 0.0
        %4134 = vmatprep.subr.mxu0 0.0
        %4135 = vmatpush1.msra.mxu0 0.0
        %4136 = vmatprep.subr.mxu0 0.0
        %4137 = vmatpush1.msra.mxu0 0.0
        %4138 = vmatprep.subr.mxu0 0.0
        %4139 = vmatpush1.msra.mxu0 0.0
        %4140 = vmatprep.subr.mxu0 0.0
        %4141 = vmatpush1.msra.mxu0 0.0
        %4142 = vmatprep.subr.mxu0 0.0
        %4143 = vmatpush1.msra.mxu0 0.0
        %4144 = vmatprep.subr.mxu0 0.0
        %4145 = vmatpush1.msra.mxu0 0.0
        %4146 = vmatprep.subr.mxu0 0.0
        %4147 = vmatpush1.msra.mxu0 0.0
        %4148 = vmatprep.subr.mxu0 0.0
        %4149 = vmatpush1.msra.mxu0 0.0
        %4150 = vmatprep.subr.mxu0 %v3832
        %4151 = vmatpush1.msra.mxu0 %v3831
        %4152 = vmatprep.subr.mxu0 0.0
        %4153 = vmatpush2.msra.mxu0 0.0
        %4154 = vmatprep.subr.mxu0 0.0
        %4155 = vmatpush2.msra.mxu0 0.0
        %4156 = vmatprep.subr.mxu0 0.0
        %4157 = vmatpush2.msra.mxu0 0.0
        %4158 = vmatprep.subr.mxu0 0.0
        %4159 = vmatpush2.msra.mxu0 0.0
        %4160 = vmatprep.subr.mxu0 0.0
        %4161 = vmatpush2.msra.mxu0 0.0
        %4162 = vmatprep.subr.mxu0 0.0
        %4163 = vmatpush2.msra.mxu0 0.0
        %4164 = vmatprep.subr.mxu0 0.0
        %4165 = vmatpush2.msra.mxu0 0.0
        %4166 = vmatprep.subr.mxu0 0.0
        %4167 = vmatpush2.msra.mxu0 0.0
        %4168 = vmatprep.subr.mxu0 0.0
        %4169 = vmatpush2.msra.mxu0 0.0
        %4170 = vmatprep.subr.mxu0 0.0
        %4171 = vmatpush2.msra.mxu0 0.0
        %4172 = vmatprep.subr.mxu0 0.0
        %4173 = vmatpush2.msra.mxu0 0.0
        %4174 = vmatprep.subr.mxu0 0.0
        %4175 = vmatpush2.msra.mxu0 0.0
        %4176 = vmatprep.subr.mxu0 0.0
        %4177 = vmatpush2.msra.mxu0 0.0
        %4178 = vmatprep.subr.mxu0 0.0
        %4179 = vmatpush2.msra.mxu0 0.0
        %4180 = vmatprep.subr.mxu0 0.0
        %4181 = vmatpush2.msra.mxu0 0.0
        %4182 = vmatprep.subr.mxu0 0.0
        %4183 = vmatpush2.msra.mxu0 0.0
        %4184 = vmatprep.mubr.f32.mxu0 0.0
        %4185 = vmatmul.mubr.f32.gmra.mxu0 %v3842
        %v4186 = vpop.f32.mrf.mxu0
        %v4187 = vadd.f32 0.0, %v4186
        %v4188 = vpop.f32.mrf.mxu0
        %v4189 = vadd.f32 0.0, %v4188
        %4190 = vmatprep.mubr.f32.mxu0 0.0
        %4191 = vmatmul.mubr.f32.gmra.mxu0 %v3845
        %v4192 = vpop.f32.mrf.mxu0
        %v4193 = vadd.f32 0.0, %v4192
        %v4194 = vpop.f32.mrf.mxu0
        %v4195 = vadd.f32 0.0, %v4194
        %4196 = vmatprep.mubr.f32.mxu0 0.0
        %4197 = vmatmul.mubr.f32.gmra.mxu0 %v3848
        %v4198 = vpop.f32.mrf.mxu0
        %v4199 = vadd.f32 0.0, %v4198
        %v4200 = vpop.f32.mrf.mxu0
        %v4201 = vadd.f32 0.0, %v4200
        %4202 = vmatprep.mubr.f32.mxu0 0.0
        %4203 = vmatmul.mubr.f32.gmra.mxu0 %v3851
        %v4204 = vpop.f32.mrf.mxu0
        %v4205 = vadd.f32 0.0, %v4204
        %v4206 = vpop.f32.mrf.mxu0
        %v4207 = vadd.f32 0.0, %v4206
        %4208 = vdwg.mxu0
        %v4209 = vadd.f32 %v3020, %v3920
        %v4210 = vadd.f32 %v3021, %v3922
        %v4211 = vadd.f32 %v3022, %v4009
        %v4212 = vadd.f32 %v3023, %v4011
        %v4213 = vadd.f32 %v3024, %v4098
        %v4214 = vadd.f32 %v3025, %v4100
        %v4215 = vadd.f32 %v3026, %v4187
        %v4216 = vadd.f32 %v3027, %v4189
        %v4217 = vadd.f32 %v3028, %v3926
        %v4218 = vadd.f32 %v3029, %v3928
        %v4219 = vadd.f32 %v3030, %v4015
        %v4220 = vadd.f32 %v3031, %v4017
        %v4221 = vadd.f32 %v3032, %v4104
        %v4222 = vadd.f32 %v3033, %v4106
        %v4223 = vadd.f32 %v3034, %v4193
        %v4224 = vadd.f32 %v3035, %v4195
        %v4225 = vadd.f32 %v3036, %v3932
        %v4226 = vadd.f32 %v3037, %v3934
        %v4227 = vadd.f32 %v3038, %v4021
        %v4228 = vadd.f32 %v3039, %v4023
        %v4229 = vadd.f32 %v3040, %v4110
        %v4230 = vadd.f32 %v3041, %v4112
        %v4231 = vadd.f32 %v3042, %v4199
        %v4232 = vadd.f32 %v3043, %v4201
        %v4233 = vadd.f32 %v3044, %v3938
        %v4234 = vadd.f32 %v3045, %v3940
        %v4235 = vadd.f32 %v3046, %v4027
        %v4236 = vadd.f32 %v3047, %v4029
        %v4237 = vadd.f32 %v3048, %v4116
        %v4238 = vadd.f32 %v3049, %v4118
        %v4239 = vadd.f32 %v3050, %v4205
        %v4240 = vadd.f32 %v3051, %v4207
        %4241 = vst [vmem:[#allocation2 + $0x18] sm:$0xff] %v3825
        %4242 = vst [vmem:[#allocation2 + $0x20] sm:$0xff] %v3826
        %4243 = vst [vmem:[#allocation2 + $0x28] sm:$0xff] %v3827
        %4244 = vst [vmem:[#allocation2 + $0x30] sm:$0xff] %v3828
        %4245 = vst [vmem:[#allocation2 + $0x38] sm:$0xff] %v3829
        %4246 = vst [vmem:[#allocation2 + $0x40] sm:$0xff] %v3830
        %4247 = vst [vmem:[#allocation2 + $0x48] sm:$0xff] %v3831
        %4248 = vst [vmem:[#allocation2 + $0x50] sm:$0xff] %v3832
        %v4249 = vld [vmem:[#allocation2 + $0x8] sm:$0xff]
        %v4250 = vld [vmem:[#allocation2 + $0x10] sm:$0xff]
        %v4251 = vld [vmem:[#allocation2 + $0x18] sm:$0xff]
        %v4252 = vld [vmem:[#allocation2 + $0x20] sm:$0xff]
        %v4253 = vld [vmem:[#allocation2 + $0x28] sm:$0xff]
        %v4254 = vld [vmem:[#allocation2 + $0x30] sm:$0xff]
        %v4255 = vld [vmem:[#allocation2 + $0x38] sm:$0xff]
        %v4256 = vld [vmem:[#allocation2 + $0x40] sm:$0xff]
        %s4257 = scalar_lea.vmem %s3, 224
        %v4258 = vld [vmem:[%s4257] sm:$0xff]
        %4260 = vset.pattern.permute.xlu0 0
        %4261 = vperm.xlu0 %4260, %v4258
        %v4262 = vpop.permute.xlu0 %4261
        %v4264 = vmul.f32 %v4249, %v4262
        %v4265 = vmul.f32 %v4250, %v4262
        %v4266 = vmul.f32 %v4251, %v4262
        %v4267 = vmul.f32 %v4252, %v4262
        %v4268 = vmul.f32 %v4253, %v4262
        %v4269 = vmul.f32 %v4254, %v4262
        %v4270 = vmul.f32 %v4255, %v4262
        %v4271 = vmul.f32 %v4256, %v4262
        %v4272 = vld [vmem:[#allocation2 + $0x18] sm:$0xff]
        %v4273 = vld [vmem:[#allocation2 + $0x20] sm:$0xff]
        %v4274 = vld [vmem:[#allocation2 + $0x28] sm:$0xff]
        %v4275 = vld [vmem:[#allocation2 + $0x30] sm:$0xff]
        %v4276 = vld [vmem:[#allocation2 + $0x38] sm:$0xff]
        %v4277 = vld [vmem:[#allocation2 + $0x40] sm:$0xff]
        %v4278 = vld [vmem:[#allocation2 + $0x48] sm:$0xff]
        %v4279 = vld [vmem:[#allocation2 + $0x50] sm:$0xff]
        %s4280 = scalar_lea.vmem %s3, 248
        %v4281 = vld [vmem:[%s4280] sm:$0xff]
        %4283 = vset.pattern.permute.xlu0 0
        %4284 = vperm.xlu0 %4283, %v4281
        %v4285 = vpop.permute.xlu0 %4284
        %v4287 = vmul.f32 %v4272, %v4285
        %v4288 = vmul.f32 %v4273, %v4285
        %v4289 = vmul.f32 %v4274, %v4285
        %v4290 = vmul.f32 %v4275, %v4285
        %v4291 = vmul.f32 %v4276, %v4285
        %v4292 = vmul.f32 %v4277, %v4285
        %v4293 = vmul.f32 %v4278, %v4285
        %v4294 = vmul.f32 %v4279, %v4285
        %v4295 = vadd.f32 %v4264, %v4287
        %v4296 = vadd.f32 %v4265, %v4288
        %v4297 = vadd.f32 %v4266, %v4289
        %v4298 = vadd.f32 %v4267, %v4290
        %v4299 = vadd.f32 %v4268, %v4291
        %v4300 = vadd.f32 %v4269, %v4292
        %v4301 = vadd.f32 %v4270, %v4293
        %v4302 = vadd.f32 %v4271, %v4294
        %v4303 = vld [vmem:[#allocation2 + $0x28] sm:$0xff]
        %v4304 = vld [vmem:[#allocation2 + $0x30] sm:$0xff]
        %v4305 = vld [vmem:[#allocation2 + $0x38] sm:$0xff]
        %v4306 = vld [vmem:[#allocation2 + $0x40] sm:$0xff]
        %v4307 = vld [vmem:[#allocation2 + $0x48] sm:$0xff]
        %v4308 = vld [vmem:[#allocation2 + $0x50] sm:$0xff]
        %v4309 = vld [vmem:[#allocation2 + $0x58] sm:$0xff]
        %v4310 = vld [vmem:[#allocation2 + $0x60] sm:$0xff]
        %s4311 = scalar_lea.vmem %s3, 272
        %v4312 = vld [vmem:[%s4311] sm:$0xff]
        %4314 = vset.pattern.permute.xlu0 0
        %4315 = vperm.xlu0 %4314, %v4312
        %v4316 = vpop.permute.xlu0 %4315
        %v4318 = vmul.f32 %v4303, %v4316
        %v4319 = vmul.f32 %v4304, %v4316
        %v4320 = vmul.f32 %v4305, %v4316
        %v4321 = vmul.f32 %v4306, %v4316
        %v4322 = vmul.f32 %v4307, %v4316
        %v4323 = vmul.f32 %v4308, %v4316
        %v4324 = vmul.f32 %v4309, %v4316
        %v4325 = vmul.f32 %v4310, %v4316
        %v4326 = vadd.f32 %v4295, %v4318
        %v4327 = vadd.f32 %v4296, %v4319
        %v4328 = vadd.f32 %v4297, %v4320
        %v4329 = vadd.f32 %v4298, %v4321
        %v4330 = vadd.f32 %v4299, %v4322
        %v4331 = vadd.f32 %v4300, %v4323
        %v4332 = vadd.f32 %v4301, %v4324
        %v4333 = vadd.f32 %v4302, %v4325
        %v4334 = vld [vmem:[#allocation2] sm:$0xff]
        %s4335 = scalar_lea.vmem %s3, 216
        %v4336 = vld [vmem:[%s4335] sm:$0xff]
        %4338 = vset.pattern.permute.xlu0 0
        %4339 = vperm.xlu0 %4338, %v4336
        %v4340 = vpop.permute.xlu0 %4339
        %v4342 = vmul.f32 %v4334, %v4340
        %v4343 = vmul.f32 %v4249, %v4340
        %v4344 = vmul.f32 %v4250, %v4340
        %v4345 = vmul.f32 %v4251, %v4340
        %v4346 = vmul.f32 %v4252, %v4340
        %v4347 = vmul.f32 %v4253, %v4340
        %v4348 = vmul.f32 %v4254, %v4340
        %v4349 = vmul.f32 %v4255, %v4340
        %v4350 = vmul.f32 %v4256, %v4340
        %v4351 = vld [vmem:[#allocation2 + $0x10] sm:$0xff]
        %s4352 = scalar_lea.vmem %s3, 240
        %v4353 = vld [vmem:[%s4352] sm:$0xff]
        %4355 = vset.pattern.permute.xlu0 0
        %4356 = vperm.xlu0 %4355, %v4353
        %v4357 = vpop.permute.xlu0 %4356
        %v4359 = vmul.f32 %v4351, %v4357
        %v4360 = vmul.f32 %v4272, %v4357
        %v4361 = vmul.f32 %v4273, %v4357
        %v4362 = vmul.f32 %v4274, %v4357
        %v4363 = vmul.f32 %v4275, %v4357
        %v4364 = vmul.f32 %v4276, %v4357
        %v4365 = vmul.f32 %v4277, %v4357
        %v4366 = vmul.f32 %v4278, %v4357
        %v4367 = vmul.f32 %v4279, %v4357
        %v4368 = vadd.f32 %v4342, %v4359
        %v4369 = vadd.f32 %v4343, %v4360
        %v4370 = vadd.f32 %v4344, %v4361
        %v4371 = vadd.f32 %v4345, %v4362
        %v4372 = vadd.f32 %v4346, %v4363
        %v4373 = vadd.f32 %v4347, %v4364
        %v4374 = vadd.f32 %v4348, %v4365
        %v4375 = vadd.f32 %v4349, %v4366
        %v4376 = vadd.f32 %v4350, %v4367
        %v4377 = vld [vmem:[#allocation2 + $0x20] sm:$0xff]
        %s4378 = scalar_lea.vmem %s3, 264
        %v4379 = vld [vmem:[%s4378] sm:$0xff]
        %4381 = vset.pattern.permute.xlu0 0
        %4382 = vperm.xlu0 %4381, %v4379
        %v4383 = vpop.permute.xlu0 %4382
        %v4385 = vmul.f32 %v4377, %v4383
        %v4386 = vmul.f32 %v4303, %v4383
        %v4387 = vmul.f32 %v4304, %v4383
        %v4388 = vmul.f32 %v4305, %v4383
        %v4389 = vmul.f32 %v4306, %v4383
        %v4390 = vmul.f32 %v4307, %v4383
        %v4391 = vmul.f32 %v4308, %v4383
        %v4392 = vmul.f32 %v4309, %v4383
        %v4393 = vmul.f32 %v4310, %v4383
        %v4394 = vadd.f32 %v4368, %v4385
        %v4395 = vadd.f32 %v4369, %v4386
        %v4396 = vadd.f32 %v4370, %v4387
        %v4397 = vadd.f32 %v4371, %v4388
        %v4398 = vadd.f32 %v4372, %v4389
        %v4399 = vadd.f32 %v4373, %v4390
        %v4400 = vadd.f32 %v4374, %v4391
        %v4401 = vadd.f32 %v4375, %v4392
        %v4402 = vadd.f32 %v4376, %v4393
        %v4403 = vld [vmem:[#allocation2 + $0x8] sm:$0xff]
        %v4404 = vld [vmem:[#allocation2 + $0x10] sm:$0xff]
        %v4405 = vld [vmem:[#allocation2 + $0x18] sm:$0xff]
        %v4406 = vld [vmem:[#allocation2 + $0x20] sm:$0xff]
        %v4407 = vld [vmem:[#allocation2 + $0x28] sm:$0xff]
        %v4408 = vld [vmem:[#allocation2 + $0x30] sm:$0xff]
        %v4409 = vld [vmem:[#allocation2 + $0x38] sm:$0xff]
        %v4410 = vld [vmem:[#allocation2 + $0x40] sm:$0xff]
        %v4411 = vld [vmem:[#allocation2 + $0x48] sm:$0xff]
        %s4412 = scalar_lea.vmem %s3, 232
        %v4413 = vld [vmem:[%s4412] sm:$0xff]
        %4415 = vset.pattern.permute.xlu0 0
        %4416 = vperm.xlu0 %4415, %v4413
        %v4417 = vpop.permute.xlu0 %4416
        %v4419 = vmul.f32 %v4403, %v4417
        %v4420 = vmul.f32 %v4404, %v4417
        %v4421 = vmul.f32 %v4405, %v4417
        %v4422 = vmul.f32 %v4406, %v4417
        %v4423 = vmul.f32 %v4407, %v4417
        %v4424 = vmul.f32 %v4408, %v4417
        %v4425 = vmul.f32 %v4409, %v4417
        %v4426 = vmul.f32 %v4410, %v4417
        %v4427 = vmul.f32 %v4411, %v4417
        %v4428 = vld [vmem:[#allocation2 + $0x18] sm:$0xff]
        %v4429 = vld [vmem:[#allocation2 + $0x20] sm:$0xff]
        %v4430 = vld [vmem:[#allocation2 + $0x28] sm:$0xff]
        %v4431 = vld [vmem:[#allocation2 + $0x30] sm:$0xff]
        %v4432 = vld [vmem:[#allocation2 + $0x38] sm:$0xff]
        %v4433 = vld [vmem:[#allocation2 + $0x40] sm:$0xff]
        %v4434 = vld [vmem:[#allocation2 + $0x48] sm:$0xff]
        %v4435 = vld [vmem:[#allocation2 + $0x50] sm:$0xff]
        %v4436 = vld [vmem:[#allocation2 + $0x58] sm:$0xff]
        %s4437 = scalar_lea.vmem %s3, 256
        %v4438 = vld [vmem:[%s4437] sm:$0xff]
        %4440 = vset.pattern.permute.xlu0 0
        %4441 = vperm.xlu0 %4440, %v4438
        %v4442 = vpop.permute.xlu0 %4441
        %v4444 = vmul.f32 %v4428, %v4442
        %v4445 = vmul.f32 %v4429, %v4442
        %v4446 = vmul.f32 %v4430, %v4442
        %v4447 = vmul.f32 %v4431, %v4442
        %v4448 = vmul.f32 %v4432, %v4442
        %v4449 = vmul.f32 %v4433, %v4442
        %v4450 = vmul.f32 %v4434, %v4442
        %v4451 = vmul.f32 %v4435, %v4442
        %v4452 = vmul.f32 %v4436, %v4442
        %v4453 = vadd.f32 %v4419, %v4444
        %v4454 = vadd.f32 %v4420, %v4445
        %v4455 = vadd.f32 %v4421, %v4446
        %v4456 = vadd.f32 %v4422, %v4447
        %v4457 = vadd.f32 %v4423, %v4448
        %v4458 = vadd.f32 %v4424, %v4449
        %v4459 = vadd.f32 %v4425, %v4450
        %v4460 = vadd.f32 %v4426, %v4451
        %v4461 = vadd.f32 %v4427, %v4452
        %v4462 = vld [vmem:[#allocation2 + $0x28] sm:$0xff]
        %v4463 = vld [vmem:[#allocation2 + $0x30] sm:$0xff]
        %v4464 = vld [vmem:[#allocation2 + $0x38] sm:$0xff]
        %v4465 = vld [vmem:[#allocation2 + $0x40] sm:$0xff]
        %v4466 = vld [vmem:[#allocation2 + $0x48] sm:$0xff]
        %v4467 = vld [vmem:[#allocation2 + $0x50] sm:$0xff]
        %v4468 = vld [vmem:[#allocation2 + $0x58] sm:$0xff]
        %v4469 = vld [vmem:[#allocation2 + $0x60] sm:$0xff]
        %v4470 = vld [vmem:[#allocation2 + $0x68] sm:$0xff]
        %s4471 = scalar_lea.vmem %s3, 280
        %v4472 = vld [vmem:[%s4471] sm:$0xff]
        %4474 = vset.pattern.permute.xlu0 0
        %4475 = vperm.xlu0 %4474, %v4472
        %v4476 = vpop.permute.xlu0 %4475
        %v4478 = vmul.f32 %v4462, %v4476
        %v4479 = vmul.f32 %v4463, %v4476
        %v4480 = vmul.f32 %v4464, %v4476
        %v4481 = vmul.f32 %v4465, %v4476
        %v4482 = vmul.f32 %v4466, %v4476
        %v4483 = vmul.f32 %v4467, %v4476
        %v4484 = vmul.f32 %v4468, %v4476
        %v4485 = vmul.f32 %v4469, %v4476
        %v4486 = vmul.f32 %v4470, %v4476
        %v4487 = vadd.f32 %v4453, %v4478
        %v4488 = vadd.f32 %v4454, %v4479
        %v4489 = vadd.f32 %v4455, %v4480
        %v4490 = vadd.f32 %v4456, %v4481
        %v4491 = vadd.f32 %v4457, %v4482
        %v4492 = vadd.f32 %v4458, %v4483
        %v4493 = vadd.f32 %v4459, %v4484
        %v4494 = vadd.f32 %v4460, %v4485
        %v4495 = vadd.f32 %v4461, %v4486
        %vm4496 = vcmp.ge.s32.totalorder %v296, 8
        %v4497 = vsel %vm4496, 1, 0
        %v4498 = vlaneseq
        %v4499 = vshrl.u32 %v4498, 7
        %v4500 = vsub.s32 0, %v4499
        %v4501 = vrot.slane %v4497, %v4500
        %v4502 = vlaneseq
        %v4503 = vshrl.u32 %v4502, 7
        %v4504 = vsub.s32 1, %v4503
        %v4505 = vrot.slane %v4497, %v4504
        %v4506 = vlaneseq
        %v4507 = vshrl.u32 %v4506, 7
        %v4508 = vsub.s32 2, %v4507
        %v4509 = vrot.slane %v4497, %v4508
        %v4510 = vlaneseq
        %v4511 = vshrl.u32 %v4510, 7
        %v4512 = vsub.s32 3, %v4511
        %v4513 = vrot.slane %v4497, %v4512
        %v4514 = vlaneseq
        %v4515 = vshrl.u32 %v4514, 7
        %v4516 = vsub.s32 4, %v4515
        %v4517 = vrot.slane %v4497, %v4516
        %v4518 = vlaneseq
        %v4519 = vshrl.u32 %v4518, 7
        %v4520 = vsub.s32 5, %v4519
        %v4521 = vrot.slane %v4497, %v4520
        %v4522 = vlaneseq
        %v4523 = vshrl.u32 %v4522, 7
        %v4524 = vsub.s32 6, %v4523
        %v4525 = vrot.slane %v4497, %v4524
        %v4526 = vlaneseq
        %v4527 = vshrl.u32 %v4526, 7
        %v4528 = vsub.s32 7, %v4527
        %v4529 = vrot.slane %v4497, %v4528
        %vm4530 = vcmp.eq.s32.totalorder %v4501, 1
        %vm4531 = vcmp.eq.s32.totalorder %v4505, 1
        %vm4532 = vcmp.eq.s32.totalorder %v4509, 1
        %vm4533 = vcmp.eq.s32.totalorder %v4513, 1
        %vm4534 = vcmp.eq.s32.totalorder %v4517, 1
        %vm4535 = vcmp.eq.s32.totalorder %v4521, 1
        %vm4536 = vcmp.eq.s32.totalorder %v4525, 1
        %vm4537 = vcmp.eq.s32.totalorder %v4529, 1
        %4547 = vrot.lane.b32.xlu0 %v4394, 8
        %v4548 = vpop.permute.xlu0 %4547
        %4549 = vrot.lane.b32.xlu0 %v4395, 8
        %v4550 = vpop.permute.xlu0 %4549
        %4551 = vrot.lane.b32.xlu0 %v4396, 8
        %v4552 = vpop.permute.xlu0 %4551
        %4553 = vrot.lane.b32.xlu0 %v4397, 8
        %v4554 = vpop.permute.xlu0 %4553
        %4555 = vrot.lane.b32.xlu0 %v4398, 8
        %v4556 = vpop.permute.xlu0 %4555
        %4557 = vrot.lane.b32.xlu0 %v4399, 8
        %v4558 = vpop.permute.xlu0 %4557
        %4559 = vrot.lane.b32.xlu0 %v4400, 8
        %v4560 = vpop.permute.xlu0 %4559
        %4561 = vrot.lane.b32.xlu0 %v4401, 8
        %v4562 = vpop.permute.xlu0 %4561
        %4563 = vrot.lane.b32.xlu0 %v4402, 8
        %v4564 = vpop.permute.xlu0 %4563
        %v4565 = vsel %vm1391, %v4548, %v4550
        %v4566 = vsel %vm1391, %v4550, %v4552
        %v4567 = vsel %vm1391, %v4552, %v4554
        %v4568 = vsel %vm1391, %v4554, %v4556
        %v4569 = vsel %vm1391, %v4556, %v4558
        %v4570 = vsel %vm1391, %v4558, %v4560
        %v4571 = vsel %vm1391, %v4560, %v4562
        %v4572 = vsel %vm1391, %v4562, %v4564
        %v4581 = vsel %vm4530, %v4565, 0.0
        %v4582 = vsel %vm4531, %v4566, 0.0
        %v4583 = vsel %vm4532, %v4567, 0.0
        %v4584 = vsel %vm4533, %v4568, 0.0
        %v4585 = vsel %vm4534, %v4569, 0.0
        %v4586 = vsel %vm4535, %v4570, 0.0
        %v4587 = vsel %vm4536, %v4571, 0.0
        %v4588 = vsel %vm4537, %v4572, 0.0
        %v4589 = vadd.f32 %v4326, %v4581
        %v4590 = vadd.f32 %v4327, %v4582
        %v4591 = vadd.f32 %v4328, %v4583
        %v4592 = vadd.f32 %v4329, %v4584
        %v4593 = vadd.f32 %v4330, %v4585
        %v4594 = vadd.f32 %v4331, %v4586
        %v4595 = vadd.f32 %v4332, %v4587
        %v4596 = vadd.f32 %v4333, %v4588
        %vm4597 = vcmp.lt.s32.totalorder %v296, 24
        %v4598 = vsel %vm4597, 1, 0
        %v4599 = vlaneseq
        %v4600 = vshrl.u32 %v4599, 7
        %v4601 = vsub.s32 0, %v4600
        %v4602 = vrot.slane %v4598, %v4601
        %v4603 = vlaneseq
        %v4604 = vshrl.u32 %v4603, 7
        %v4605 = vsub.s32 1, %v4604
        %v4606 = vrot.slane %v4598, %v4605
        %v4607 = vlaneseq
        %v4608 = vshrl.u32 %v4607, 7
        %v4609 = vsub.s32 2, %v4608
        %v4610 = vrot.slane %v4598, %v4609
        %v4611 = vlaneseq
        %v4612 = vshrl.u32 %v4611, 7
        %v4613 = vsub.s32 3, %v4612
        %v4614 = vrot.slane %v4598, %v4613
        %v4615 = vlaneseq
        %v4616 = vshrl.u32 %v4615, 7
        %v4617 = vsub.s32 4, %v4616
        %v4618 = vrot.slane %v4598, %v4617
        %v4619 = vlaneseq
        %v4620 = vshrl.u32 %v4619, 7
        %v4621 = vsub.s32 5, %v4620
        %v4622 = vrot.slane %v4598, %v4621
        %v4623 = vlaneseq
        %v4624 = vshrl.u32 %v4623, 7
        %v4625 = vsub.s32 6, %v4624
        %v4626 = vrot.slane %v4598, %v4625
        %v4627 = vlaneseq
        %v4628 = vshrl.u32 %v4627, 7
        %v4629 = vsub.s32 7, %v4628
        %v4630 = vrot.slane %v4598, %v4629
        %vm4631 = vcmp.eq.s32.totalorder %v4602, 1
        %vm4632 = vcmp.eq.s32.totalorder %v4606, 1
        %vm4633 = vcmp.eq.s32.totalorder %v4610, 1
        %vm4634 = vcmp.eq.s32.totalorder %v4614, 1
        %vm4635 = vcmp.eq.s32.totalorder %v4618, 1
        %vm4636 = vcmp.eq.s32.totalorder %v4622, 1
        %vm4637 = vcmp.eq.s32.totalorder %v4626, 1
        %vm4638 = vcmp.eq.s32.totalorder %v4630, 1
        %4648 = vrot.lane.b32.xlu0 %v4487, 120
        %v4649 = vpop.permute.xlu0 %4648
        %4650 = vrot.lane.b32.xlu0 %v4488, 120
        %v4651 = vpop.permute.xlu0 %4650
        %4652 = vrot.lane.b32.xlu0 %v4489, 120
        %v4653 = vpop.permute.xlu0 %4652
        %4654 = vrot.lane.b32.xlu0 %v4490, 120
        %v4655 = vpop.permute.xlu0 %4654
        %4656 = vrot.lane.b32.xlu0 %v4491, 120
        %v4657 = vpop.permute.xlu0 %4656
        %4658 = vrot.lane.b32.xlu0 %v4492, 120
        %v4659 = vpop.permute.xlu0 %4658
        %4660 = vrot.lane.b32.xlu0 %v4493, 120
        %v4661 = vpop.permute.xlu0 %4660
        %4662 = vrot.lane.b32.xlu0 %v4494, 120
        %v4663 = vpop.permute.xlu0 %4662
        %4664 = vrot.lane.b32.xlu0 %v4495, 120
        %v4665 = vpop.permute.xlu0 %4664
        %vm4666 = vcmask 982016
        %v4667 = vsel %vm4666, %v4649, %v4651
        %v4668 = vsel %vm4666, %v4651, %v4653
        %v4669 = vsel %vm4666, %v4653, %v4655
        %v4670 = vsel %vm4666, %v4655, %v4657
        %v4671 = vsel %vm4666, %v4657, %v4659
        %v4672 = vsel %vm4666, %v4659, %v4661
        %v4673 = vsel %vm4666, %v4661, %v4663
        %v4674 = vsel %vm4666, %v4663, %v4665
        %v4683 = vsel %vm4631, %v4667, 0.0
        %v4684 = vsel %vm4632, %v4668, 0.0
        %v4685 = vsel %vm4633, %v4669, 0.0
        %v4686 = vsel %vm4634, %v4670, 0.0
        %v4687 = vsel %vm4635, %v4671, 0.0
        %v4688 = vsel %vm4636, %v4672, 0.0
        %v4689 = vsel %vm4637, %v4673, 0.0
        %v4690 = vsel %vm4638, %v4674, 0.0
        %v4691 = vadd.f32 %v4589, %v4683
        %v4692 = vadd.f32 %v4590, %v4684
        %v4693 = vadd.f32 %v4591, %v4685
        %v4694 = vadd.f32 %v4592, %v4686
        %v4695 = vadd.f32 %v4593, %v4687
        %v4696 = vadd.f32 %v4594, %v4688
        %v4697 = vadd.f32 %v4595, %v4689
        %v4698 = vadd.f32 %v4596, %v4690
        %s4699 = scalar_lea.vmem %s4, 24
        %v4700 = vld [vmem:[%s4699] sm:$0xff]
        %4702 = vset.pattern.permute.xlu0 0
        %4703 = vperm.xlu0 %4702, %v4700
        %v4704 = vpop.permute.xlu0 %4703
        %v4706 = vmul.f32 %v4691, %v4704
        %v4707 = vmul.f32 %v4692, %v4704
        %v4708 = vmul.f32 %v4693, %v4704
        %v4709 = vmul.f32 %v4694, %v4704
        %v4710 = vmul.f32 %v4695, %v4704
        %v4711 = vmul.f32 %v4696, %v4704
        %v4712 = vmul.f32 %v4697, %v4704
        %v4713 = vmul.f32 %v4698, %v4704
        %s4714 = scalar_lea.vmem %s5, 24
        %v4715 = vld [vmem:[%s4714] sm:$0xff]
        %4717 = vset.pattern.permute.xlu0 0
        %4718 = vperm.xlu0 %4717, %v4715
        %v4719 = vpop.permute.xlu0 %4718
        %v4721 = vadd.f32 %v4706, %v4719
        %v4722 = vadd.f32 %v4707, %v4719
        %v4723 = vadd.f32 %v4708, %v4719
        %v4724 = vadd.f32 %v4709, %v4719
        %v4725 = vadd.f32 %v4710, %v4719
        %v4726 = vadd.f32 %v4711, %v4719
        %v4727 = vadd.f32 %v4712, %v4719
        %v4728 = vadd.f32 %v4713, %v4719
        %v4729 = vsub.f32 0.0, %v4721
        %v4730 = vsub.f32 0.0, %v4722
        %v4731 = vsub.f32 0.0, %v4723
        %v4732 = vsub.f32 0.0, %v4724
        %v4733 = vsub.f32 0.0, %v4725
        %v4734 = vsub.f32 0.0, %v4726
        %v4735 = vsub.f32 0.0, %v4727
        %v4736 = vsub.f32 0.0, %v4728
        %v4737 = vmul.f32 %v4729, 1.442695
        %v4738 = vpow.pop %v4737
        %v4739 = vmul.f32 %v4730, 1.442695
        %v4740 = vpow.pop %v4739
        %v4741 = vmul.f32 %v4731, 1.442695
        %v4742 = vpow.pop %v4741
        %v4743 = vmul.f32 %v4732, 1.442695
        %v4744 = vpow.pop %v4743
        %v4745 = vmul.f32 %v4733, 1.442695
        %v4746 = vpow.pop %v4745
        %v4747 = vmul.f32 %v4734, 1.442695
        %v4748 = vpow.pop %v4747
        %v4749 = vmul.f32 %v4735, 1.442695
        %v4750 = vpow.pop %v4749
        %v4751 = vmul.f32 %v4736, 1.442695
        %v4752 = vpow.pop %v4751
        %v4753 = vadd.f32 %v4738, 1.0
        %v4754 = vadd.f32 %v4740, 1.0
        %v4755 = vadd.f32 %v4742, 1.0
        %v4756 = vadd.f32 %v4744, 1.0
        %v4757 = vadd.f32 %v4746, 1.0
        %v4758 = vadd.f32 %v4748, 1.0
        %v4759 = vadd.f32 %v4750, 1.0
        %v4760 = vadd.f32 %v4752, 1.0
        %v4761 = vrcp.pop %v4753
        %v4762 = vrcp.pop %v4754
        %v4763 = vrcp.pop %v4755
        %v4764 = vrcp.pop %v4756
        %v4765 = vrcp.pop %v4757
        %v4766 = vrcp.pop %v4758
        %v4767 = vrcp.pop %v4759
        %v4768 = vrcp.pop %v4760
        %v4769 = vmul.f32 %v4721, %v4761
        %v4770 = vmul.f32 %v4722, %v4762
        %v4771 = vmul.f32 %v4723, %v4763
        %v4772 = vmul.f32 %v4724, %v4764
        %v4773 = vmul.f32 %v4725, %v4765
        %v4774 = vmul.f32 %v4726, %v4766
        %v4775 = vmul.f32 %v4727, %v4767
        %v4776 = vmul.f32 %v4728, %v4768
        %s4777 = scalar_lea.vmem %s6, 128
        %v4778 = vld [vmem:[%s4777] sm:$0xff]
        %v4779 = vld [vmem:[%s4777 + $0x8] sm:$0xff]
        %v4780 = vld [vmem:[%s4777 + $0x10] sm:$0xff]
        %v4781 = vld [vmem:[%s4777 + $0x18] sm:$0xff]
        %v4783 = vsel %vm1391, %v4778, 0
        %v4786 = vsel %vm1391, %v4779, 0
        %v4789 = vsel %vm1391, %v4780, 0
        %v4792 = vsel %vm1391, %v4781, 0
        %4794 = vmatprep.subr.mxu0 0.0
        %4795 = vmatpush1.msra.mxu0 0.0
        %4796 = vmatprep.subr.mxu0 0.0
        %4797 = vmatpush1.msra.mxu0 0.0
        %4798 = vmatprep.subr.mxu0 0.0
        %4799 = vmatpush1.msra.mxu0 0.0
        %4800 = vmatprep.subr.mxu0 0.0
        %4801 = vmatpush1.msra.mxu0 0.0
        %4802 = vmatprep.subr.mxu0 0.0
        %4803 = vmatpush1.msra.mxu0 0.0
        %4804 = vmatprep.subr.mxu0 0.0
        %4805 = vmatpush1.msra.mxu0 0.0
        %4806 = vmatprep.subr.mxu0 0.0
        %4807 = vmatpush1.msra.mxu0 0.0
        %4808 = vmatprep.subr.mxu0 0.0
        %4809 = vmatpush1.msra.mxu0 0.0
        %4810 = vmatprep.subr.mxu0 0.0
        %4811 = vmatpush1.msra.mxu0 0.0
        %4812 = vmatprep.subr.mxu0 0.0
        %4813 = vmatpush1.msra.mxu0 0.0
        %4814 = vmatprep.subr.mxu0 0.0
        %4815 = vmatpush1.msra.mxu0 0.0
        %4816 = vmatprep.subr.mxu0 0.0
        %4817 = vmatpush1.msra.mxu0 0.0
        %4818 = vmatprep.subr.mxu0 0.0
        %4819 = vmatpush1.msra.mxu0 0.0
        %4820 = vmatprep.subr.mxu0 0.0
        %4821 = vmatpush1.msra.mxu0 0.0
        %4822 = vmatprep.subr.mxu0 0.0
        %4823 = vmatpush1.msra.mxu0 0.0
        %4824 = vmatprep.subr.mxu0 %v4770
        %4825 = vmatpush1.msra.mxu0 %v4769
        %4826 = vmatprep.subr.mxu0 0.0
        %4827 = vmatpush2.msra.mxu0 0.0
        %4828 = vmatprep.subr.mxu0 0.0
        %4829 = vmatpush2.msra.mxu0 0.0
        %4830 = vmatprep.subr.mxu0 0.0
        %4831 = vmatpush2.msra.mxu0 0.0
        %4832 = vmatprep.subr.mxu0 0.0
        %4833 = vmatpush2.msra.mxu0 0.0
        %4834 = vmatprep.subr.mxu0 0.0
        %4835 = vmatpush2.msra.mxu0 0.0
        %4836 = vmatprep.subr.mxu0 0.0
        %4837 = vmatpush2.msra.mxu0 0.0
        %4838 = vmatprep.subr.mxu0 0.0
        %4839 = vmatpush2.msra.mxu0 0.0
        %4840 = vmatprep.subr.mxu0 0.0
        %4841 = vmatpush2.msra.mxu0 0.0
        %4842 = vmatprep.subr.mxu0 0.0
        %4843 = vmatpush2.msra.mxu0 0.0
        %4844 = vmatprep.subr.mxu0 0.0
        %4845 = vmatpush2.msra.mxu0 0.0
        %4846 = vmatprep.subr.mxu0 0.0
        %4847 = vmatpush2.msra.mxu0 0.0
        %4848 = vmatprep.subr.mxu0 0.0
        %4849 = vmatpush2.msra.mxu0 0.0
        %4850 = vmatprep.subr.mxu0 0.0
        %4851 = vmatpush2.msra.mxu0 0.0
        %4852 = vmatprep.subr.mxu0 0.0
        %4853 = vmatpush2.msra.mxu0 0.0
        %4854 = vmatprep.subr.mxu0 0.0
        %4855 = vmatpush2.msra.mxu0 0.0
        %4856 = vmatprep.subr.mxu0 0.0
        %4857 = vmatpush2.msra.mxu0 0.0
        %4858 = vmatprep.mubr.f32.mxu0 0.0
        %4859 = vmatmul.mubr.f32.gmra.mxu0 %v4783
        %v4860 = vpop.f32.mrf.mxu0
        %v4861 = vadd.f32 0.0, %v4860
        %v4862 = vpop.f32.mrf.mxu0
        %v4863 = vadd.f32 0.0, %v4862
        %4864 = vmatprep.mubr.f32.mxu0 0.0
        %4865 = vmatmul.mubr.f32.gmra.mxu0 %v4786
        %v4866 = vpop.f32.mrf.mxu0
        %v4867 = vadd.f32 0.0, %v4866
        %v4868 = vpop.f32.mrf.mxu0
        %v4869 = vadd.f32 0.0, %v4868
        %4870 = vmatprep.mubr.f32.mxu0 0.0
        %4871 = vmatmul.mubr.f32.gmra.mxu0 %v4789
        %v4872 = vpop.f32.mrf.mxu0
        %v4873 = vadd.f32 0.0, %v4872
        %v4874 = vpop.f32.mrf.mxu0
        %v4875 = vadd.f32 0.0, %v4874
        %4876 = vmatprep.mubr.f32.mxu0 0.0
        %4877 = vmatmul.mubr.f32.gmra.mxu0 %v4792
        %v4878 = vpop.f32.mrf.mxu0
        %v4879 = vadd.f32 0.0, %v4878
        %v4880 = vpop.f32.mrf.mxu0
        %v4881 = vadd.f32 0.0, %v4880
        %4882 = vdwg.mxu0
        %4883 = vmatprep.subr.mxu0 0.0
        %4884 = vmatpush1.msra.mxu0 0.0
        %4885 = vmatprep.subr.mxu0 0.0
        %4886 = vmatpush1.msra.mxu0 0.0
        %4887 = vmatprep.subr.mxu0 0.0
        %4888 = vmatpush1.msra.mxu0 0.0
        %4889 = vmatprep.subr.mxu0 0.0
        %4890 = vmatpush1.msra.mxu0 0.0
        %4891 = vmatprep.subr.mxu0 0.0
        %4892 = vmatpush1.msra.mxu0 0.0
        %4893 = vmatprep.subr.mxu0 0.0
        %4894 = vmatpush1.msra.mxu0 0.0
        %4895 = vmatprep.subr.mxu0 0.0
        %4896 = vmatpush1.msra.mxu0 0.0
        %4897 = vmatprep.subr.mxu0 0.0
        %4898 = vmatpush1.msra.mxu0 0.0
        %4899 = vmatprep.subr.mxu0 0.0
        %4900 = vmatpush1.msra.mxu0 0.0
        %4901 = vmatprep.subr.mxu0 0.0
        %4902 = vmatpush1.msra.mxu0 0.0
        %4903 = vmatprep.subr.mxu0 0.0
        %4904 = vmatpush1.msra.mxu0 0.0
        %4905 = vmatprep.subr.mxu0 0.0
        %4906 = vmatpush1.msra.mxu0 0.0
        %4907 = vmatprep.subr.mxu0 0.0
        %4908 = vmatpush1.msra.mxu0 0.0
        %4909 = vmatprep.subr.mxu0 0.0
        %4910 = vmatpush1.msra.mxu0 0.0
        %4911 = vmatprep.subr.mxu0 0.0
        %4912 = vmatpush1.msra.mxu0 0.0
        %4913 = vmatprep.subr.mxu0 %v4772
        %4914 = vmatpush1.msra.mxu0 %v4771
        %4915 = vmatprep.subr.mxu0 0.0
        %4916 = vmatpush2.msra.mxu0 0.0
        %4917 = vmatprep.subr.mxu0 0.0
        %4918 = vmatpush2.msra.mxu0 0.0
        %4919 = vmatprep.subr.mxu0 0.0
        %4920 = vmatpush2.msra.mxu0 0.0
        %4921 = vmatprep.subr.mxu0 0.0
        %4922 = vmatpush2.msra.mxu0 0.0
        %4923 = vmatprep.subr.mxu0 0.0
        %4924 = vmatpush2.msra.mxu0 0.0
        %4925 = vmatprep.subr.mxu0 0.0
        %4926 = vmatpush2.msra.mxu0 0.0
        %4927 = vmatprep.subr.mxu0 0.0
        %4928 = vmatpush2.msra.mxu0 0.0
        %4929 = vmatprep.subr.mxu0 0.0
        %4930 = vmatpush2.msra.mxu0 0.0
        %4931 = vmatprep.subr.mxu0 0.0
        %4932 = vmatpush2.msra.mxu0 0.0
        %4933 = vmatprep.subr.mxu0 0.0
        %4934 = vmatpush2.msra.mxu0 0.0
        %4935 = vmatprep.subr.mxu0 0.0
        %4936 = vmatpush2.msra.mxu0 0.0
        %4937 = vmatprep.subr.mxu0 0.0
        %4938 = vmatpush2.msra.mxu0 0.0
        %4939 = vmatprep.subr.mxu0 0.0
        %4940 = vmatpush2.msra.mxu0 0.0
        %4941 = vmatprep.subr.mxu0 0.0
        %4942 = vmatpush2.msra.mxu0 0.0
        %4943 = vmatprep.subr.mxu0 0.0
        %4944 = vmatpush2.msra.mxu0 0.0
        %4945 = vmatprep.subr.mxu0 0.0
        %4946 = vmatpush2.msra.mxu0 0.0
        %4947 = vmatprep.mubr.f32.mxu0 0.0
        %4948 = vmatmul.mubr.f32.gmra.mxu0 %v4783
        %v4949 = vpop.f32.mrf.mxu0
        %v4950 = vadd.f32 0.0, %v4949
        %v4951 = vpop.f32.mrf.mxu0
        %v4952 = vadd.f32 0.0, %v4951
        %4953 = vmatprep.mubr.f32.mxu0 0.0
        %4954 = vmatmul.mubr.f32.gmra.mxu0 %v4786
        %v4955 = vpop.f32.mrf.mxu0
        %v4956 = vadd.f32 0.0, %v4955
        %v4957 = vpop.f32.mrf.mxu0
        %v4958 = vadd.f32 0.0, %v4957
        %4959 = vmatprep.mubr.f32.mxu0 0.0
        %4960 = vmatmul.mubr.f32.gmra.mxu0 %v4789
        %v4961 = vpop.f32.mrf.mxu0
        %v4962 = vadd.f32 0.0, %v4961
        %v4963 = vpop.f32.mrf.mxu0
        %v4964 = vadd.f32 0.0, %v4963
        %4965 = vmatprep.mubr.f32.mxu0 0.0
        %4966 = vmatmul.mubr.f32.gmra.mxu0 %v4792
        %v4967 = vpop.f32.mrf.mxu0
        %v4968 = vadd.f32 0.0, %v4967
        %v4969 = vpop.f32.mrf.mxu0
        %v4970 = vadd.f32 0.0, %v4969
        %4971 = vdwg.mxu0
        %4972 = vmatprep.subr.mxu0 0.0
        %4973 = vmatpush1.msra.mxu0 0.0
        %4974 = vmatprep.subr.mxu0 0.0
        %4975 = vmatpush1.msra.mxu0 0.0
        %4976 = vmatprep.subr.mxu0 0.0
        %4977 = vmatpush1.msra.mxu0 0.0
        %4978 = vmatprep.subr.mxu0 0.0
        %4979 = vmatpush1.msra.mxu0 0.0
        %4980 = vmatprep.subr.mxu0 0.0
        %4981 = vmatpush1.msra.mxu0 0.0
        %4982 = vmatprep.subr.mxu0 0.0
        %4983 = vmatpush1.msra.mxu0 0.0
        %4984 = vmatprep.subr.mxu0 0.0
        %4985 = vmatpush1.msra.mxu0 0.0
        %4986 = vmatprep.subr.mxu0 0.0
        %4987 = vmatpush1.msra.mxu0 0.0
        %4988 = vmatprep.subr.mxu0 0.0
        %4989 = vmatpush1.msra.mxu0 0.0
        %4990 = vmatprep.subr.mxu0 0.0
        %4991 = vmatpush1.msra.mxu0 0.0
        %4992 = vmatprep.subr.mxu0 0.0
        %4993 = vmatpush1.msra.mxu0 0.0
        %4994 = vmatprep.subr.mxu0 0.0
        %4995 = vmatpush1.msra.mxu0 0.0
        %4996 = vmatprep.subr.mxu0 0.0
        %4997 = vmatpush1.msra.mxu0 0.0
        %4998 = vmatprep.subr.mxu0 0.0
        %4999 = vmatpush1.msra.mxu0 0.0
        %5000 = vmatprep.subr.mxu0 0.0
        %5001 = vmatpush1.msra.mxu0 0.0
        %5002 = vmatprep.subr.mxu0 %v4774
        %5003 = vmatpush1.msra.mxu0 %v4773
        %5004 = vmatprep.subr.mxu0 0.0
        %5005 = vmatpush2.msra.mxu0 0.0
        %5006 = vmatprep.subr.mxu0 0.0
        %5007 = vmatpush2.msra.mxu0 0.0
        %5008 = vmatprep.subr.mxu0 0.0
        %5009 = vmatpush2.msra.mxu0 0.0
        %5010 = vmatprep.subr.mxu0 0.0
        %5011 = vmatpush2.msra.mxu0 0.0
        %5012 = vmatprep.subr.mxu0 0.0
        %5013 = vmatpush2.msra.mxu0 0.0
        %5014 = vmatprep.subr.mxu0 0.0
        %5015 = vmatpush2.msra.mxu0 0.0
        %5016 = vmatprep.subr.mxu0 0.0
        %5017 = vmatpush2.msra.mxu0 0.0
        %5018 = vmatprep.subr.mxu0 0.0
        %5019 = vmatpush2.msra.mxu0 0.0
        %5020 = vmatprep.subr.mxu0 0.0
        %5021 = vmatpush2.msra.mxu0 0.0
        %5022 = vmatprep.subr.mxu0 0.0
        %5023 = vmatpush2.msra.mxu0 0.0
        %5024 = vmatprep.subr.mxu0 0.0
        %5025 = vmatpush2.msra.mxu0 0.0
        %5026 = vmatprep.subr.mxu0 0.0
        %5027 = vmatpush2.msra.mxu0 0.0
        %5028 = vmatprep.subr.mxu0 0.0
        %5029 = vmatpush2.msra.mxu0 0.0
        %5030 = vmatprep.subr.mxu0 0.0
        %5031 = vmatpush2.msra.mxu0 0.0
        %5032 = vmatprep.subr.mxu0 0.0
        %5033 = vmatpush2.msra.mxu0 0.0
        %5034 = vmatprep.subr.mxu0 0.0
        %5035 = vmatpush2.msra.mxu0 0.0
        %5036 = vmatprep.mubr.f32.mxu0 0.0
        %5037 = vmatmul.mubr.f32.gmra.mxu0 %v4783
        %v5038 = vpop.f32.mrf.mxu0
        %v5039 = vadd.f32 0.0, %v5038
        %v5040 = vpop.f32.mrf.mxu0
        %v5041 = vadd.f32 0.0, %v5040
        %5042 = vmatprep.mubr.f32.mxu0 0.0
        %5043 = vmatmul.mubr.f32.gmra.mxu0 %v4786
        %v5044 = vpop.f32.mrf.mxu0
        %v5045 = vadd.f32 0.0, %v5044
        %v5046 = vpop.f32.mrf.mxu0
        %v5047 = vadd.f32 0.0, %v5046
        %5048 = vmatprep.mubr.f32.mxu0 0.0
        %5049 = vmatmul.mubr.f32.gmra.mxu0 %v4789
        %v5050 = vpop.f32.mrf.mxu0
        %v5051 = vadd.f32 0.0, %v5050
        %v5052 = vpop.f32.mrf.mxu0
        %v5053 = vadd.f32 0.0, %v5052
        %5054 = vmatprep.mubr.f32.mxu0 0.0
        %5055 = vmatmul.mubr.f32.gmra.mxu0 %v4792
        %v5056 = vpop.f32.mrf.mxu0
        %v5057 = vadd.f32 0.0, %v5056
        %v5058 = vpop.f32.mrf.mxu0
        %v5059 = vadd.f32 0.0, %v5058
        %5060 = vdwg.mxu0
        %5061 = vmatprep.subr.mxu0 0.0
        %5062 = vmatpush1.msra.mxu0 0.0
        %5063 = vmatprep.subr.mxu0 0.0
        %5064 = vmatpush1.msra.mxu0 0.0
        %5065 = vmatprep.subr.mxu0 0.0
        %5066 = vmatpush1.msra.mxu0 0.0
        %5067 = vmatprep.subr.mxu0 0.0
        %5068 = vmatpush1.msra.mxu0 0.0
        %5069 = vmatprep.subr.mxu0 0.0
        %5070 = vmatpush1.msra.mxu0 0.0
        %5071 = vmatprep.subr.mxu0 0.0
        %5072 = vmatpush1.msra.mxu0 0.0
        %5073 = vmatprep.subr.mxu0 0.0
        %5074 = vmatpush1.msra.mxu0 0.0
        %5075 = vmatprep.subr.mxu0 0.0
        %5076 = vmatpush1.msra.mxu0 0.0
        %5077 = vmatprep.subr.mxu0 0.0
        %5078 = vmatpush1.msra.mxu0 0.0
        %5079 = vmatprep.subr.mxu0 0.0
        %5080 = vmatpush1.msra.mxu0 0.0
        %5081 = vmatprep.subr.mxu0 0.0
        %5082 = vmatpush1.msra.mxu0 0.0
        %5083 = vmatprep.subr.mxu0 0.0
        %5084 = vmatpush1.msra.mxu0 0.0
        %5085 = vmatprep.subr.mxu0 0.0
        %5086 = vmatpush1.msra.mxu0 0.0
        %5087 = vmatprep.subr.mxu0 0.0
        %5088 = vmatpush1.msra.mxu0 0.0
        %5089 = vmatprep.subr.mxu0 0.0
        %5090 = vmatpush1.msra.mxu0 0.0
        %5091 = vmatprep.subr.mxu0 %v4776
        %5092 = vmatpush1.msra.mxu0 %v4775
        %5093 = vmatprep.subr.mxu0 0.0
        %5094 = vmatpush2.msra.mxu0 0.0
        %5095 = vmatprep.subr.mxu0 0.0
        %5096 = vmatpush2.msra.mxu0 0.0
        %5097 = vmatprep.subr.mxu0 0.0
        %5098 = vmatpush2.msra.mxu0 0.0
        %5099 = vmatprep.subr.mxu0 0.0
        %5100 = vmatpush2.msra.mxu0 0.0
        %5101 = vmatprep.subr.mxu0 0.0
        %5102 = vmatpush2.msra.mxu0 0.0
        %5103 = vmatprep.subr.mxu0 0.0
        %5104 = vmatpush2.msra.mxu0 0.0
        %5105 = vmatprep.subr.mxu0 0.0
        %5106 = vmatpush2.msra.mxu0 0.0
        %5107 = vmatprep.subr.mxu0 0.0
        %5108 = vmatpush2.msra.mxu0 0.0
        %5109 = vmatprep.subr.mxu0 0.0
        %5110 = vmatpush2.msra.mxu0 0.0
        %5111 = vmatprep.subr.mxu0 0.0
        %5112 = vmatpush2.msra.mxu0 0.0
        %5113 = vmatprep.subr.mxu0 0.0
        %5114 = vmatpush2.msra.mxu0 0.0
        %5115 = vmatprep.subr.mxu0 0.0
        %5116 = vmatpush2.msra.mxu0 0.0
        %5117 = vmatprep.subr.mxu0 0.0
        %5118 = vmatpush2.msra.mxu0 0.0
        %5119 = vmatprep.subr.mxu0 0.0
        %5120 = vmatpush2.msra.mxu0 0.0
        %5121 = vmatprep.subr.mxu0 0.0
        %5122 = vmatpush2.msra.mxu0 0.0
        %5123 = vmatprep.subr.mxu0 0.0
        %5124 = vmatpush2.msra.mxu0 0.0
        %5125 = vmatprep.mubr.f32.mxu0 0.0
        %5126 = vmatmul.mubr.f32.gmra.mxu0 %v4783
        %v5127 = vpop.f32.mrf.mxu0
        %v5128 = vadd.f32 0.0, %v5127
        %v5129 = vpop.f32.mrf.mxu0
        %v5130 = vadd.f32 0.0, %v5129
        %5131 = vmatprep.mubr.f32.mxu0 0.0
        %5132 = vmatmul.mubr.f32.gmra.mxu0 %v4786
        %v5133 = vpop.f32.mrf.mxu0
        %v5134 = vadd.f32 0.0, %v5133
        %v5135 = vpop.f32.mrf.mxu0
        %v5136 = vadd.f32 0.0, %v5135
        %5137 = vmatprep.mubr.f32.mxu0 0.0
        %5138 = vmatmul.mubr.f32.gmra.mxu0 %v4789
        %v5139 = vpop.f32.mrf.mxu0
        %v5140 = vadd.f32 0.0, %v5139
        %v5141 = vpop.f32.mrf.mxu0
        %v5142 = vadd.f32 0.0, %v5141
        %5143 = vmatprep.mubr.f32.mxu0 0.0
        %5144 = vmatmul.mubr.f32.gmra.mxu0 %v4792
        %v5145 = vpop.f32.mrf.mxu0
        %v5146 = vadd.f32 0.0, %v5145
        %v5147 = vpop.f32.mrf.mxu0
        %v5148 = vadd.f32 0.0, %v5147
        %5149 = vdwg.mxu0
        %v5150 = vadd.f32 %v4209, %v4861
        %v5151 = vadd.f32 %v4210, %v4863
        %v5152 = vadd.f32 %v4211, %v4950
        %v5153 = vadd.f32 %v4212, %v4952
        %v5154 = vadd.f32 %v4213, %v5039
        %v5155 = vadd.f32 %v4214, %v5041
        %v5156 = vadd.f32 %v4215, %v5128
        %v5157 = vadd.f32 %v4216, %v5130
        %v5158 = vadd.f32 %v4217, %v4867
        %v5159 = vadd.f32 %v4218, %v4869
        %v5160 = vadd.f32 %v4219, %v4956
        %v5161 = vadd.f32 %v4220, %v4958
        %v5162 = vadd.f32 %v4221, %v5045
        %v5163 = vadd.f32 %v4222, %v5047
        %v5164 = vadd.f32 %v4223, %v5134
        %v5165 = vadd.f32 %v4224, %v5136
        %v5166 = vadd.f32 %v4225, %v4873
        %v5167 = vadd.f32 %v4226, %v4875
        %v5168 = vadd.f32 %v4227, %v4962
        %v5169 = vadd.f32 %v4228, %v4964
        %v5170 = vadd.f32 %v4229, %v5051
        %v5171 = vadd.f32 %v4230, %v5053
        %v5172 = vadd.f32 %v4231, %v5140
        %v5173 = vadd.f32 %v4232, %v5142
        %v5174 = vadd.f32 %v4233, %v4879
        %v5175 = vadd.f32 %v4234, %v4881
        %v5176 = vadd.f32 %v4235, %v4968
        %v5177 = vadd.f32 %v4236, %v4970
        %v5178 = vadd.f32 %v4237, %v5057
        %v5179 = vadd.f32 %v4238, %v5059
        %v5180 = vadd.f32 %v4239, %v5146
        %v5181 = vadd.f32 %v4240, %v5148
        %5182 = vst [vmem:[%s284] sm:$0xff] %v5150
        %5183 = vst [vmem:[%s284 + $0x8] sm:$0xff] %v5151
        %5184 = vst [vmem:[%s284 + $0x10] sm:$0xff] %v5152
        %5185 = vst [vmem:[%s284 + $0x18] sm:$0xff] %v5153
        %5186 = vst [vmem:[%s284 + $0x20] sm:$0xff] %v5154
        %5187 = vst [vmem:[%s284 + $0x28] sm:$0xff] %v5155
        %5188 = vst [vmem:[%s284 + $0x30] sm:$0xff] %v5156
        %5189 = vst [vmem:[%s284 + $0x38] sm:$0xff] %v5157
        %5190 = vst [vmem:[%s284 + $0x40] sm:$0xff] %v5158
        %5191 = vst [vmem:[%s284 + $0x48] sm:$0xff] %v5159
        %5192 = vst [vmem:[%s284 + $0x50] sm:$0xff] %v5160
        %5193 = vst [vmem:[%s284 + $0x58] sm:$0xff] %v5161
        %5194 = vst [vmem:[%s284 + $0x60] sm:$0xff] %v5162
        %5195 = vst [vmem:[%s284 + $0x68] sm:$0xff] %v5163
        %5196 = vst [vmem:[%s284 + $0x70] sm:$0xff] %v5164
        %5197 = vst [vmem:[%s284 + $0x78] sm:$0xff] %v5165
        %5198 = vst [vmem:[%s284 + $0x80] sm:$0xff] %v5166
        %5199 = vst [vmem:[%s284 + $0x88] sm:$0xff] %v5167
        %5200 = vst [vmem:[%s284 + $0x90] sm:$0xff] %v5168
        %5201 = vst [vmem:[%s284 + $0x98] sm:$0xff] %v5169
        %5202 = vst [vmem:[%s284 + $0xa0] sm:$0xff] %v5170
        %5203 = vst [vmem:[%s284 + $0xa8] sm:$0xff] %v5171
        %5204 = vst [vmem:[%s284 + $0xb0] sm:$0xff] %v5172
        %5205 = vst [vmem:[%s284 + $0xb8] sm:$0xff] %v5173
        %5206 = vst [vmem:[%s284 + $0xc0] sm:$0xff] %v5174
        %5207 = vst [vmem:[%s284 + $0xc8] sm:$0xff] %v5175
        %5208 = vst [vmem:[%s284 + $0xd0] sm:$0xff] %v5176
        %5209 = vst [vmem:[%s284 + $0xd8] sm:$0xff] %v5177
        %5210 = vst [vmem:[%s284 + $0xe0] sm:$0xff] %v5178
        %5211 = vst [vmem:[%s284 + $0xe8] sm:$0xff] %v5179
        %5212 = vst [vmem:[%s284 + $0xf0] sm:$0xff] %v5180
        %5213 = vst [vmem:[%s284 + $0xf8] sm:$0xff] %v5181
        %s5214 = sand.u32 %s182, 1
        %s5215 = scalar_lea.sflag [#allocation5], %s5214
        %s5216 = sand.u32 %s182, 1
        %s5217 = smul.addr %s5216, 256
        %s5218 = scalar_lea.vmem [#allocation6], %s5217
        // Predicated region
        $region53: #{tpu_custom_call.1} parent=47 // pred_check
          %p5219 = pneg %p192
        $region54: #{tpu_custom_call.1} parent=47 // pred_check_branch
          %5221 = sbr.rel (%p5219) target = $region56
        $region55: #{tpu_custom_call.1} parent=47 // pred_region
          %s5223 = ssub.s32 4096, 4096
          %5224 = vsyncadd %s5215, %s5223
          %s5225 = smul.addr %s22, 32
          %s5226 = smul.addr %s5225, 128
          %s5227 = scalar_lea.hbm %s7, %s5226
          %s5228 = sshll.u32 %s5218, 4
          %s5229 = int_to_ptr.vmem [resolvable:$true] %s5228
          %5234 = dma.vmem_to_hbm [thread:$0]  %s5229, 4096, %s5227, %s5215, 1024, 1024, 64
        $region56: #{tpu_custom_call.1} parent=47 // pred_fallthru
          _
      $region48: #{tpu_custom_call.1} parent=5 // pred_fallthru
        _
      %p5235 = scmp.le.s32.totalorder 2, %s17
      // Predicated region
      $region57: #{tpu_custom_call.1} parent=5 // pred_check
        %p5236 = pneg %p5235
      $region58: #{tpu_custom_call.1} parent=5 // pred_check_branch
        %5238 = sbr.rel (%p5236) target = $region60
      $region59: #{tpu_custom_call.1} parent=5 // pred_region
        %s5239 = ssub.s32 %s17, 2
        // Predicated region
        $region61: #{tpu_custom_call.1} parent=59 // pred_check
          %p5240 = pneg %p198
        $region62: #{tpu_custom_call.1} parent=59 // pred_check_branch
          %5242 = sbr.rel (%p5240) target = $region64
        $region63: #{tpu_custom_call.1} parent=59 // pred_region
          %s5243 = sand.u32 %s183, 1
          %s5244 = scalar_lea.sflag [#allocation5], %s5243
          %s5245 = sand.u32 %s183, 1
          %s5246 = smul.addr %s5245, 256
          %s5247 = scalar_lea.vmem [#allocation6], %s5246
          %5248 = dma.done %s5244, 4096
        $region64: #{tpu_custom_call.1} parent=59 // pred_fallthru
          _
      $region60: #{tpu_custom_call.1} parent=5 // pred_fallthru
        _
    $region6: #{tpu_custom_call.1} parent=1 // loop_footer
      %s21 = sadd.s32 1, %s17
    $region7: #{tpu_custom_call.1} parent=1 // loop_footer_branch
      %16 = sbr.rel target = $region3
    $region8: #{tpu_custom_call.1} parent=1 // loop_exit
      _
    %5249 = vsyncpa [#allocation4], 1
    %s5250 = scalar_lea.sflag [#allocation4], 1
    %5251 = vsyncpa %s5250, 1
    %5252 = vsyncpa [#allocation5], 1
    %s5253 = scalar_lea.sflag [#allocation5], 1
    %5254 = vsyncpa %s5253, 1

</llo_original>
